<compile_context>
chip_gen: v7x
topology: tpu7x:2x2x1
jax: 0.10.0
libtpu: 0.0.40
codegen_flags: <defaults>
</compile_context>

<pallas_src>
import numpy as np
import jax
import jax.numpy as jnp
from jax.experimental import pallas as pl
from jax.experimental.pallas import tpu as pltpu


# ------------------------------ fused kernel --------------------------------

def _mnist_fused_kernel(x_ref, w1_ref, b1_ref, s1_ref, w2_ref, b2_ref, p2_ref,
                        wf1_ref, bf1_ref, wf2_ref, bf2_ref,
                        logits_ref, hidden_ref):
    f32 = jnp.float32
    xrow = x_ref[0]                                           # (1, 900) padded flat 28x28 image

    # ---- conv1 (1->10, 5x5) + bias + ReLU : one MXU matmul over the 25 taps ----
    taps = [xrow[:, 28 * ki + kj: 28 * ki + kj + 784]
            for ki in range(5) for kj in range(5)]            # 25 x (1, 784)
    patches1 = jnp.concatenate(taps, axis=0)                  # (25, 784), col r = 28*h + w
    a1 = jnp.dot(w1_ref[...], patches1, preferred_element_type=f32)
    a1 = jnp.maximum(a1 + b1_ref[...], 0.0)                   # (10, 784); valid cols: h,w < 24

    # ---- pool1 2x2/2 (fused): pairwise max along w then h + 0/1 selection matmul ----
    m1 = jnp.maximum(a1[:, 0:783], a1[:, 1:784])              # max over w pairs
    m1 = jnp.maximum(m1[:, 0:755], m1[:, 28:783])             # max over h pairs
    pooled1 = jnp.dot(m1[:, 0:640], s1_ref[...],
                      preferred_element_type=f32)             # (10, 144), col = 12*i + j
    pooled1 = jnp.concatenate(
        [pooled1, jnp.zeros((10, 52), f32)], axis=1)          # (10, 196): pad for tap shifts

    # ---- conv2 (10->20, 5x5) + bias + ReLU : 25 shifted sub-matmuls ----
    a2 = jnp.zeros((20, 144), f32)
    for k in range(25):
        ki, kj = divmod(k, 5)
        sh = 12 * ki + kj
        a2 = a2 + jnp.dot(w2_ref[k], pooled1[:, sh:sh + 144],
                          preferred_element_type=f32)
    a2 = jnp.maximum(a2 + b2_ref[...], 0.0)                   # (20, 144); valid cols: h,w < 8

    # ---- pool2 2x2/2 ----
    m2 = jnp.maximum(a2[:, 0:143], a2[:, 1:144])
    m2 = jnp.maximum(m2[:, 0:131], m2[:, 12:143])             # (20, 131)
    pooled2 = jnp.dot(m2[:, 0:80], p2_ref[...],
                      preferred_element_type=f32)             # (20, 16), col = 4*i + j

    # ---- flatten in PyTorch .view() order (channel-major) ----
    flat = jnp.concatenate([pooled2[c:c + 1, :] for c in range(20)], axis=1)  # (1, 320)

    # ---- fc1 + ReLU, fc2 + ReLU (module spec ReLUs the logits too) ----
    hidden = jnp.maximum(
        jnp.dot(flat, wf1_ref[...], preferred_element_type=f32) + bf1_ref[...], 0.0)
    logits = jnp.maximum(
        jnp.dot(hidden, wf2_ref[...], preferred_element_type=f32) + bf2_ref[...], 0.0)

    hidden_ref[0] = hidden                                    # (1, 50)
    logits_ref[0] = logits                                    # (1, 10)


# ------------------------- host-side one-time prep --------------------------

def _pool_selectors():
    # pool1: keep flat column 56*i + 2*j of the 28-wide conv1 grid -> column 12*i + j
    s1 = np.zeros((640, 144), np.float32)
    for i in range(12):
        for j in range(12):
            s1[56 * i + 2 * j, 12 * i + j] = 1.0
    # pool2: keep flat column 24*i + 2*j of the 12-wide conv2 grid -> column 4*i + j
    p2 = np.zeros((80, 16), np.float32)
    for i in range(4):
        for j in range(4):
            p2[24 * i + 2 * j, 4 * i + j] = 1.0
    return jnp.asarray(s1), jnp.asarray(p2)


def prepare_params(params):
    """One-time repack of PyTorch-layout params into matmul-ready operands
    (done outside the jitted forward, per the performance review)."""
    s1, p2 = _pool_selectors()
    return {
        "w1m": params["conv1_w"].reshape(10, 25),                               # (Cout, tap)
        "b1": params["conv1_b"].reshape(10, 1),
        "s1": s1,                                                               # (640, 144)
        "w2r": jnp.transpose(params["conv2_w"], (2, 3, 0, 1)).reshape(25, 20, 10),  # (tap, Cout, Cin)
        "b2": params["conv2_b"].reshape(20, 1),
        "p2": p2,                                                               # (80, 16)
        "wf1": params["fc1_w"].T,                                               # (320, 50)
        "bf1": params["fc1_b"].reshape(1, 50),
        "wf2": params["fc2_w"].T,                                               # (50, 10)
        "bf2": params["fc2_b"].reshape(1, 10),
    }


# ----------------------------- forward wrapper -------------------------------

def mnist_convnet_forward(prep, x):
    """x: (N, 1, 28, 28) float32 NCHW.  Returns (logits (N,10), hidden (N,50))."""
    n = x.shape[0]
    # Flatten + right-pad the image so every conv1 tap is a plain contiguous slice.
    xpad = jnp.pad(x.reshape(n, 1, 28 * 28), ((0, 0), (0, 0), (0, 116)))  # (N, 1, 900)

    def full(a):
        return pl.BlockSpec(a.shape, lambda b, _nd=a.ndim: (0,) * _nd)

    logits, hidden = pl.pallas_call(
        _mnist_fused_kernel,
        grid=(n,),
        in_specs=[
            pl.BlockSpec((1, 1, 900), lambda b: (b, 0, 0)),
            full(prep["w1m"]), full(prep["b1"]), full(prep["s1"]),
            full(prep["w2r"]), full(prep["b2"]), full(prep["p2"]),
            full(prep["wf1"]), full(prep["bf1"]),
            full(prep["wf2"]), full(prep["bf2"]),
        ],
        out_specs=[
            pl.BlockSpec((1, 1, 10), lambda b: (b, 0, 0)),
            pl.BlockSpec((1, 1, 50), lambda b: (b, 0, 0)),
        ],
        out_shape=[
            jax.ShapeDtypeStruct((n, 1, 10), jnp.float32),
            jax.ShapeDtypeStruct((n, 1, 50), jnp.float32),
        ],
        compiler_params=pltpu.CompilerParams(
            dimension_semantics=("parallel",),        # shard batch over v7x's 2 TCs
            vmem_limit_bytes=32 * 1024 * 1024,        # explicit, safe on v5e/v6e/v7x
        ),
    )(xpad, prep["w1m"], prep["b1"], prep["s1"], prep["w2r"], prep["b2"],
      prep["p2"], prep["wf1"], prep["bf1"], prep["wf2"], prep["bf2"])
    return logits.reshape(n, 10), hidden.reshape(n, 50)


# --------------------------- params & pure-JAX reference ---------------------

def init_params(key):
    """Deterministic init mirroring PyTorch's default U(-1/sqrt(fan_in), ...)."""
    def uniform(k, shape, fan_in):
        bound = 1.0 / (fan_in ** 0.5)
        return jax.random.uniform(k, shape, jnp.float32, -bound, bound)

    ks = jax.random.split(key, 8)
    return {
        "conv1_w": uniform(ks[0], (10, 1, 5, 5), 1 * 5 * 5),
        "conv1_b": uniform(ks[1], (10,), 1 * 5 * 5),
        "conv2_w": uniform(ks[2], (20, 10, 5, 5), 10 * 5 * 5),
        "conv2_b": uniform(ks[3], (20,), 10 * 5 * 5),
        "fc1_w":   uniform(ks[4], (50, 320), 320),
        "fc1_b":   uniform(ks[5], (50,), 320),
        "fc2_w":   uniform(ks[6], (10, 50), 50),
        "fc2_b":   uniform(ks[7], (10,), 50),
    }


def reference_forward(params, x):
    dn = ("NCHW", "OIHW", "NCHW")

    def conv(x, w, b):
        y = jax.lax.conv_general_dilated(x, w, (1, 1), "VALID",
                                         dimension_numbers=dn)
        return jax.nn.relu(y + b.reshape(1, -1, 1, 1))

    def pool(x):
        return jax.lax.reduce_window(x, -jnp.inf, jax.lax.max,
                                     (1, 1, 2, 2), (1, 1, 2, 2), "VALID")

    x = pool(conv(x, params["conv1_w"], params["conv1_b"]))
    x = pool(conv(x, params["conv2_w"], params["conv2_b"]))
    x = x.reshape(x.shape[0], -1)
    y = jax.nn.relu(x @ params["fc1_w"].T + params["fc1_b"])
    x = jax.nn.relu(y @ params["fc2_w"].T + params["fc2_b"])
    return x, y


if __name__ == "__main__":
    key = jax.random.PRNGKey(0)
    pkey, xkey = jax.random.split(key)
    params = init_params(pkey)
    prep = prepare_params(params)              # one-time matmul-ready repack (outside jit)

    # 28x28x1 input is required by the module (fc1 expects 320 = 20*4*4)
    x = jax.random.normal(xkey, (2, 1, 28, 28), dtype=jnp.float32)

    fwd = jax.jit(mnist_convnet_forward)
    logits, hidden = fwd(prep, x)
    jax.block_until_ready((logits, hidden))

    ref_logits, ref_hidden = reference_forward(params, x)
    assert logits.shape == (2, 10) and hidden.shape == (2, 50)
    assert jnp.allclose(logits, ref_logits, atol=2e-4, rtol=2e-4), \
        float(jnp.max(jnp.abs(logits - ref_logits)))
    assert jnp.allclose(hidden, ref_hidden, atol=2e-4, rtol=2e-4), \
        float(jnp.max(jnp.abs(hidden - ref_hidden)))

    print("KERNEL_OK")
</pallas_src>

<mosaic_0001>
module attributes {stable_mosaic.version = 11 : i64} {
  func.func @_mnist_fused_kernel(%arg0: i32, %arg1: memref<1x1x900xf32, #tpu.memory_space<vmem>>, %arg2: memref<10x25xf32, #tpu.memory_space<vmem>>, %arg3: memref<10x1xf32, #tpu.memory_space<vmem>>, %arg4: memref<640x144xf32, #tpu.memory_space<vmem>>, %arg5: memref<25x20x10xf32, #tpu.memory_space<vmem>>, %arg6: memref<20x1xf32, #tpu.memory_space<vmem>>, %arg7: memref<80x16xf32, #tpu.memory_space<vmem>>, %arg8: memref<320x50xf32, #tpu.memory_space<vmem>>, %arg9: memref<1x50xf32, #tpu.memory_space<vmem>>, %arg10: memref<50x10xf32, #tpu.memory_space<vmem>>, %arg11: memref<1x10xf32, #tpu.memory_space<vmem>>, %arg12: memref<1x1x10xf32, #tpu.memory_space<vmem>>, %arg13: memref<1x1x50xf32, #tpu.memory_space<vmem>>) attributes {dimension_semantics = [#tpu.dimension_semantics<parallel>], iteration_bounds = array<i64: 2>, scalar_prefetch = 0 : i64, scratch_operands = 0 : i64, tpu.core_type = #tpu.core_type<tc>, window_params = [{transform_indices = @transform_0, window_bounds = array<i64: 1, 1, 900>}, {pipeline_mode = #tpu.pipeline_mode<synchronous>, transform_indices = @transform_1, window_bounds = array<i64: 10, 25>}, {pipeline_mode = #tpu.pipeline_mode<synchronous>, transform_indices = @transform_2, window_bounds = array<i64: 10, 1>}, {pipeline_mode = #tpu.pipeline_mode<synchronous>, transform_indices = @transform_3, window_bounds = array<i64: 640, 144>}, {pipeline_mode = #tpu.pipeline_mode<synchronous>, transform_indices = @transform_4, window_bounds = array<i64: 25, 20, 10>}, {pipeline_mode = #tpu.pipeline_mode<synchronous>, transform_indices = @transform_5, window_bounds = array<i64: 20, 1>}, {pipeline_mode = #tpu.pipeline_mode<synchronous>, transform_indices = @transform_6, window_bounds = array<i64: 80, 16>}, {pipeline_mode = #tpu.pipeline_mode<synchronous>, transform_indices = @transform_7, window_bounds = array<i64: 320, 50>}, {pipeline_mode = #tpu.pipeline_mode<synchronous>, transform_indices = @transform_8, window_bounds = array<i64: 1, 50>}, {pipeline_mode = #tpu.pipeline_mode<synchronous>, transform_indices = @transform_9, window_bounds = array<i64: 50, 10>}, {pipeline_mode = #tpu.pipeline_mode<synchronous>, transform_indices = @transform_10, window_bounds = array<i64: 1, 10>}, {transform_indices = @transform_11, window_bounds = array<i64: 1, 1, 10>}, {transform_indices = @transform_12, window_bounds = array<i64: 1, 1, 50>}]} {
    %c0 = arith.constant 0 : index
    %c0_0 = arith.constant 0 : index
    %c0_1 = arith.constant 0 : index
    %0 = vector.load %arg1[%c0, %c0_0, %c0_1] : memref<1x1x900xf32, #tpu.memory_space<vmem>>, vector<1x1x900xf32>
    %1 = vector.shape_cast %0 : vector<1x1x900xf32> to vector<1x900xf32>
    %2 = vector.extract_strided_slice %1 {offsets = [0, 0], sizes = [1, 784], strides = [1, 1]} : vector<1x900xf32> to vector<1x784xf32>
    %3 = vector.extract_strided_slice %1 {offsets = [0, 1], sizes = [1, 784], strides = [1, 1]} : vector<1x900xf32> to vector<1x784xf32>
    %4 = vector.extract_strided_slice %1 {offsets = [0, 2], sizes = [1, 784], strides = [1, 1]} : vector<1x900xf32> to vector<1x784xf32>
    %5 = vector.extract_strided_slice %1 {offsets = [0, 3], sizes = [1, 784], strides = [1, 1]} : vector<1x900xf32> to vector<1x784xf32>
    %6 = vector.extract_strided_slice %1 {offsets = [0, 4], sizes = [1, 784], strides = [1, 1]} : vector<1x900xf32> to vector<1x784xf32>
    %7 = vector.extract_strided_slice %1 {offsets = [0, 28], sizes = [1, 784], strides = [1, 1]} : vector<1x900xf32> to vector<1x784xf32>
    %8 = vector.extract_strided_slice %1 {offsets = [0, 29], sizes = [1, 784], strides = [1, 1]} : vector<1x900xf32> to vector<1x784xf32>
    %9 = vector.extract_strided_slice %1 {offsets = [0, 30], sizes = [1, 784], strides = [1, 1]} : vector<1x900xf32> to vector<1x784xf32>
    %10 = vector.extract_strided_slice %1 {offsets = [0, 31], sizes = [1, 784], strides = [1, 1]} : vector<1x900xf32> to vector<1x784xf32>
    %11 = vector.extract_strided_slice %1 {offsets = [0, 32], sizes = [1, 784], strides = [1, 1]} : vector<1x900xf32> to vector<1x784xf32>
    %12 = vector.extract_strided_slice %1 {offsets = [0, 56], sizes = [1, 784], strides = [1, 1]} : vector<1x900xf32> to vector<1x784xf32>
    %13 = vector.extract_strided_slice %1 {offsets = [0, 57], sizes = [1, 784], strides = [1, 1]} : vector<1x900xf32> to vector<1x784xf32>
    %14 = vector.extract_strided_slice %1 {offsets = [0, 58], sizes = [1, 784], strides = [1, 1]} : vector<1x900xf32> to vector<1x784xf32>
    %15 = vector.extract_strided_slice %1 {offsets = [0, 59], sizes = [1, 784], strides = [1, 1]} : vector<1x900xf32> to vector<1x784xf32>
    %16 = vector.extract_strided_slice %1 {offsets = [0, 60], sizes = [1, 784], strides = [1, 1]} : vector<1x900xf32> to vector<1x784xf32>
    %17 = vector.extract_strided_slice %1 {offsets = [0, 84], sizes = [1, 784], strides = [1, 1]} : vector<1x900xf32> to vector<1x784xf32>
    %18 = vector.extract_strided_slice %1 {offsets = [0, 85], sizes = [1, 784], strides = [1, 1]} : vector<1x900xf32> to vector<1x784xf32>
    %19 = vector.extract_strided_slice %1 {offsets = [0, 86], sizes = [1, 784], strides = [1, 1]} : vector<1x900xf32> to vector<1x784xf32>
    %20 = vector.extract_strided_slice %1 {offsets = [0, 87], sizes = [1, 784], strides = [1, 1]} : vector<1x900xf32> to vector<1x784xf32>
    %21 = vector.extract_strided_slice %1 {offsets = [0, 88], sizes = [1, 784], strides = [1, 1]} : vector<1x900xf32> to vector<1x784xf32>
    %22 = vector.extract_strided_slice %1 {offsets = [0, 112], sizes = [1, 784], strides = [1, 1]} : vector<1x900xf32> to vector<1x784xf32>
    %23 = vector.extract_strided_slice %1 {offsets = [0, 113], sizes = [1, 784], strides = [1, 1]} : vector<1x900xf32> to vector<1x784xf32>
    %24 = vector.extract_strided_slice %1 {offsets = [0, 114], sizes = [1, 784], strides = [1, 1]} : vector<1x900xf32> to vector<1x784xf32>
    %25 = vector.extract_strided_slice %1 {offsets = [0, 115], sizes = [1, 784], strides = [1, 1]} : vector<1x900xf32> to vector<1x784xf32>
    %26 = vector.extract_strided_slice %1 {offsets = [0, 116], sizes = [1, 784], strides = [1, 1]} : vector<1x900xf32> to vector<1x784xf32>
    %27 = tpu.concatenate %2, %3, %4, %5, %6, %7, %8, %9, %10, %11, %12, %13, %14, %15, %16, %17 in 0 : vector<1x784xf32>, vector<1x784xf32>, vector<1x784xf32>, vector<1x784xf32>, vector<1x784xf32>, vector<1x784xf32>, vector<1x784xf32>, vector<1x784xf32>, vector<1x784xf32>, vector<1x784xf32>, vector<1x784xf32>, vector<1x784xf32>, vector<1x784xf32>, vector<1x784xf32>, vector<1x784xf32>, vector<1x784xf32> -> vector<16x784xf32>
    %28 = tpu.concatenate %18, %19, %20, %21, %22, %23, %24, %25, %26 in 0 : vector<1x784xf32>, vector<1x784xf32>, vector<1x784xf32>, vector<1x784xf32>, vector<1x784xf32>, vector<1x784xf32>, vector<1x784xf32>, vector<1x784xf32>, vector<1x784xf32> -> vector<9x784xf32>
    %29 = tpu.concatenate %27, %28 in 0 : vector<16x784xf32>, vector<9x784xf32> -> vector<25x784xf32>
    %c0_2 = arith.constant 0 : index
    %c0_3 = arith.constant 0 : index
    %30 = vector.load %arg2[%c0_2, %c0_3] : memref<10x25xf32, #tpu.memory_space<vmem>>, vector<10x25xf32>
    %cst = arith.constant dense<0.000000e+00> : vector<10x784xf32>
    %31 = tpu.matmul %30, %29, %cst {dimension_numbers = #tpu.dot_dimension_numbers<[1], [0], [0], [1], [0, 0, 1, 1], [], []>} : vector<10x25xf32>, vector<25x784xf32>, vector<10x784xf32> -> vector<10x784xf32>
    %c0_4 = arith.constant 0 : index
    %c0_5 = arith.constant 0 : index
    %32 = vector.load %arg3[%c0_4, %c0_5] : memref<10x1xf32, #tpu.memory_space<vmem>>, vector<10x1xf32>
    %33 = vector.broadcast %32 : vector<10x1xf32> to vector<10x784xf32>
    %34 = arith.addf %31, %33 : vector<10x784xf32>
    %cst_6 = arith.constant 0.000000e+00 : f32
    %35 = vector.broadcast %cst_6 : f32 to vector<10x784xf32>
    %36 = arith.maximumf %34, %35 : vector<10x784xf32>
    %37 = vector.extract_strided_slice %36 {offsets = [0, 0], sizes = [10, 783], strides = [1, 1]} : vector<10x784xf32> to vector<10x783xf32>
    %38 = vector.extract_strided_slice %36 {offsets = [0, 1], sizes = [10, 783], strides = [1, 1]} : vector<10x784xf32> to vector<10x783xf32>
    %39 = arith.maximumf %37, %38 : vector<10x783xf32>
    %40 = vector.extract_strided_slice %39 {offsets = [0, 0], sizes = [10, 755], strides = [1, 1]} : vector<10x783xf32> to vector<10x755xf32>
    %41 = vector.extract_strided_slice %39 {offsets = [0, 28], sizes = [10, 755], strides = [1, 1]} : vector<10x783xf32> to vector<10x755xf32>
    %42 = arith.maximumf %40, %41 : vector<10x755xf32>
    %43 = vector.extract_strided_slice %42 {offsets = [0, 0], sizes = [10, 640], strides = [1, 1]} : vector<10x755xf32> to vector<10x640xf32>
    %c0_7 = arith.constant 0 : index
    %c0_8 = arith.constant 0 : index
    %44 = vector.load %arg4[%c0_7, %c0_8] : memref<640x144xf32, #tpu.memory_space<vmem>>, vector<640x144xf32>
    %cst_9 = arith.constant dense<0.000000e+00> : vector<10x144xf32>
    %45 = tpu.matmul %43, %44, %cst_9 {dimension_numbers = #tpu.dot_dimension_numbers<[1], [0], [0], [1], [0, 0, 1, 1], [], []>} : vector<10x640xf32>, vector<640x144xf32>, vector<10x144xf32> -> vector<10x144xf32>
    %cst_10 = arith.constant 0.000000e+00 : f32
    %46 = vector.broadcast %cst_10 : f32 to vector<10x52xf32>
    %47 = tpu.concatenate %45, %46 in 1 : vector<10x144xf32>, vector<10x52xf32> -> vector<10x196xf32>
    %cst_11 = arith.constant 0.000000e+00 : f32
    %48 = vector.broadcast %cst_11 : f32 to vector<20x144xf32>
    %c0_12 = arith.constant 0 : index
    %c0_13 = arith.constant 0 : index
    %c0_14 = arith.constant 0 : index
    %49 = vector.load %arg5[%c0_12, %c0_13, %c0_14] : memref<25x20x10xf32, #tpu.memory_space<vmem>>, vector<1x20x10xf32>
    %50 = vector.shape_cast %49 : vector<1x20x10xf32> to vector<20x10xf32>
    %51 = vector.extract_strided_slice %47 {offsets = [0, 0], sizes = [10, 144], strides = [1, 1]} : vector<10x196xf32> to vector<10x144xf32>
    %cst_15 = arith.constant dense<0.000000e+00> : vector<20x144xf32>
    %52 = tpu.matmul %50, %51, %cst_15 {dimension_numbers = #tpu.dot_dimension_numbers<[1], [0], [0], [1], [0, 0, 1, 1], [], []>} : vector<20x10xf32>, vector<10x144xf32>, vector<20x144xf32> -> vector<20x144xf32>
    %53 = arith.addf %48, %52 : vector<20x144xf32>
    %c1 = arith.constant 1 : index
    %c0_16 = arith.constant 0 : index
    %c0_17 = arith.constant 0 : index
    %54 = vector.load %arg5[%c1, %c0_16, %c0_17] : memref<25x20x10xf32, #tpu.memory_space<vmem>>, vector<1x20x10xf32>
    %55 = vector.shape_cast %54 : vector<1x20x10xf32> to vector<20x10xf32>
    %56 = vector.extract_strided_slice %47 {offsets = [0, 1], sizes = [10, 144], strides = [1, 1]} : vector<10x196xf32> to vector<10x144xf32>
    %cst_18 = arith.constant dense<0.000000e+00> : vector<20x144xf32>
    %57 = tpu.matmul %55, %56, %cst_18 {dimension_numbers = #tpu.dot_dimension_numbers<[1], [0], [0], [1], [0, 0, 1, 1], [], []>} : vector<20x10xf32>, vector<10x144xf32>, vector<20x144xf32> -> vector<20x144xf32>
    %58 = arith.addf %53, %57 : vector<20x144xf32>
    %c2 = arith.constant 2 : index
    %c0_19 = arith.constant 0 : index
    %c0_20 = arith.constant 0 : index
    %59 = vector.load %arg5[%c2, %c0_19, %c0_20] : memref<25x20x10xf32, #tpu.memory_space<vmem>>, vector<1x20x10xf32>
    %60 = vector.shape_cast %59 : vector<1x20x10xf32> to vector<20x10xf32>
    %61 = vector.extract_strided_slice %47 {offsets = [0, 2], sizes = [10, 144], strides = [1, 1]} : vector<10x196xf32> to vector<10x144xf32>
    %cst_21 = arith.constant dense<0.000000e+00> : vector<20x144xf32>
    %62 = tpu.matmul %60, %61, %cst_21 {dimension_numbers = #tpu.dot_dimension_numbers<[1], [0], [0], [1], [0, 0, 1, 1], [], []>} : vector<20x10xf32>, vector<10x144xf32>, vector<20x144xf32> -> vector<20x144xf32>
    %63 = arith.addf %58, %62 : vector<20x144xf32>
    %c3 = arith.constant 3 : index
    %c0_22 = arith.constant 0 : index
    %c0_23 = arith.constant 0 : index
    %64 = vector.load %arg5[%c3, %c0_22, %c0_23] : memref<25x20x10xf32, #tpu.memory_space<vmem>>, vector<1x20x10xf32>
    %65 = vector.shape_cast %64 : vector<1x20x10xf32> to vector<20x10xf32>
    %66 = vector.extract_strided_slice %47 {offsets = [0, 3], sizes = [10, 144], strides = [1, 1]} : vector<10x196xf32> to vector<10x144xf32>
    %cst_24 = arith.constant dense<0.000000e+00> : vector<20x144xf32>
    %67 = tpu.matmul %65, %66, %cst_24 {dimension_numbers = #tpu.dot_dimension_numbers<[1], [0], [0], [1], [0, 0, 1, 1], [], []>} : vector<20x10xf32>, vector<10x144xf32>, vector<20x144xf32> -> vector<20x144xf32>
    %68 = arith.addf %63, %67 : vector<20x144xf32>
    %c4 = arith.constant 4 : index
    %c0_25 = arith.constant 0 : index
    %c0_26 = arith.constant 0 : index
    %69 = vector.load %arg5[%c4, %c0_25, %c0_26] : memref<25x20x10xf32, #tpu.memory_space<vmem>>, vector<1x20x10xf32>
    %70 = vector.shape_cast %69 : vector<1x20x10xf32> to vector<20x10xf32>
    %71 = vector.extract_strided_slice %47 {offsets = [0, 4], sizes = [10, 144], strides = [1, 1]} : vector<10x196xf32> to vector<10x144xf32>
    %cst_27 = arith.constant dense<0.000000e+00> : vector<20x144xf32>
    %72 = tpu.matmul %70, %71, %cst_27 {dimension_numbers = #tpu.dot_dimension_numbers<[1], [0], [0], [1], [0, 0, 1, 1], [], []>} : vector<20x10xf32>, vector<10x144xf32>, vector<20x144xf32> -> vector<20x144xf32>
    %73 = arith.addf %68, %72 : vector<20x144xf32>
    %c5 = arith.constant 5 : index
    %c0_28 = arith.constant 0 : index
    %c0_29 = arith.constant 0 : index
    %74 = vector.load %arg5[%c5, %c0_28, %c0_29] : memref<25x20x10xf32, #tpu.memory_space<vmem>>, vector<1x20x10xf32>
    %75 = vector.shape_cast %74 : vector<1x20x10xf32> to vector<20x10xf32>
    %76 = vector.extract_strided_slice %47 {offsets = [0, 12], sizes = [10, 144], strides = [1, 1]} : vector<10x196xf32> to vector<10x144xf32>
    %cst_30 = arith.constant dense<0.000000e+00> : vector<20x144xf32>
    %77 = tpu.matmul %75, %76, %cst_30 {dimension_numbers = #tpu.dot_dimension_numbers<[1], [0], [0], [1], [0, 0, 1, 1], [], []>} : vector<20x10xf32>, vector<10x144xf32>, vector<20x144xf32> -> vector<20x144xf32>
    %78 = arith.addf %73, %77 : vector<20x144xf32>
    %c6 = arith.constant 6 : index
    %c0_31 = arith.constant 0 : index
    %c0_32 = arith.constant 0 : index
    %79 = vector.load %arg5[%c6, %c0_31, %c0_32] : memref<25x20x10xf32, #tpu.memory_space<vmem>>, vector<1x20x10xf32>
    %80 = vector.shape_cast %79 : vector<1x20x10xf32> to vector<20x10xf32>
    %81 = vector.extract_strided_slice %47 {offsets = [0, 13], sizes = [10, 144], strides = [1, 1]} : vector<10x196xf32> to vector<10x144xf32>
    %cst_33 = arith.constant dense<0.000000e+00> : vector<20x144xf32>
    %82 = tpu.matmul %80, %81, %cst_33 {dimension_numbers = #tpu.dot_dimension_numbers<[1], [0], [0], [1], [0, 0, 1, 1], [], []>} : vector<20x10xf32>, vector<10x144xf32>, vector<20x144xf32> -> vector<20x144xf32>
    %83 = arith.addf %78, %82 : vector<20x144xf32>
    %c7 = arith.constant 7 : index
    %c0_34 = arith.constant 0 : index
    %c0_35 = arith.constant 0 : index
    %84 = vector.load %arg5[%c7, %c0_34, %c0_35] : memref<25x20x10xf32, #tpu.memory_space<vmem>>, vector<1x20x10xf32>
    %85 = vector.shape_cast %84 : vector<1x20x10xf32> to vector<20x10xf32>
    %86 = vector.extract_strided_slice %47 {offsets = [0, 14], sizes = [10, 144], strides = [1, 1]} : vector<10x196xf32> to vector<10x144xf32>
    %cst_36 = arith.constant dense<0.000000e+00> : vector<20x144xf32>
    %87 = tpu.matmul %85, %86, %cst_36 {dimension_numbers = #tpu.dot_dimension_numbers<[1], [0], [0], [1], [0, 0, 1, 1], [], []>} : vector<20x10xf32>, vector<10x144xf32>, vector<20x144xf32> -> vector<20x144xf32>
    %88 = arith.addf %83, %87 : vector<20x144xf32>
    %c8 = arith.constant 8 : index
    %c0_37 = arith.constant 0 : index
    %c0_38 = arith.constant 0 : index
    %89 = vector.load %arg5[%c8, %c0_37, %c0_38] : memref<25x20x10xf32, #tpu.memory_space<vmem>>, vector<1x20x10xf32>
    %90 = vector.shape_cast %89 : vector<1x20x10xf32> to vector<20x10xf32>
    %91 = vector.extract_strided_slice %47 {offsets = [0, 15], sizes = [10, 144], strides = [1, 1]} : vector<10x196xf32> to vector<10x144xf32>
    %cst_39 = arith.constant dense<0.000000e+00> : vector<20x144xf32>
    %92 = tpu.matmul %90, %91, %cst_39 {dimension_numbers = #tpu.dot_dimension_numbers<[1], [0], [0], [1], [0, 0, 1, 1], [], []>} : vector<20x10xf32>, vector<10x144xf32>, vector<20x144xf32> -> vector<20x144xf32>
    %93 = arith.addf %88, %92 : vector<20x144xf32>
    %c9 = arith.constant 9 : index
    %c0_40 = arith.constant 0 : index
    %c0_41 = arith.constant 0 : index
    %94 = vector.load %arg5[%c9, %c0_40, %c0_41] : memref<25x20x10xf32, #tpu.memory_space<vmem>>, vector<1x20x10xf32>
    %95 = vector.shape_cast %94 : vector<1x20x10xf32> to vector<20x10xf32>
    %96 = vector.extract_strided_slice %47 {offsets = [0, 16], sizes = [10, 144], strides = [1, 1]} : vector<10x196xf32> to vector<10x144xf32>
    %cst_42 = arith.constant dense<0.000000e+00> : vector<20x144xf32>
    %97 = tpu.matmul %95, %96, %cst_42 {dimension_numbers = #tpu.dot_dimension_numbers<[1], [0], [0], [1], [0, 0, 1, 1], [], []>} : vector<20x10xf32>, vector<10x144xf32>, vector<20x144xf32> -> vector<20x144xf32>
    %98 = arith.addf %93, %97 : vector<20x144xf32>
    %c10 = arith.constant 10 : index
    %c0_43 = arith.constant 0 : index
    %c0_44 = arith.constant 0 : index
    %99 = vector.load %arg5[%c10, %c0_43, %c0_44] : memref<25x20x10xf32, #tpu.memory_space<vmem>>, vector<1x20x10xf32>
    %100 = vector.shape_cast %99 : vector<1x20x10xf32> to vector<20x10xf32>
    %101 = vector.extract_strided_slice %47 {offsets = [0, 24], sizes = [10, 144], strides = [1, 1]} : vector<10x196xf32> to vector<10x144xf32>
    %cst_45 = arith.constant dense<0.000000e+00> : vector<20x144xf32>
    %102 = tpu.matmul %100, %101, %cst_45 {dimension_numbers = #tpu.dot_dimension_numbers<[1], [0], [0], [1], [0, 0, 1, 1], [], []>} : vector<20x10xf32>, vector<10x144xf32>, vector<20x144xf32> -> vector<20x144xf32>
    %103 = arith.addf %98, %102 : vector<20x144xf32>
    %c11 = arith.constant 11 : index
    %c0_46 = arith.constant 0 : index
    %c0_47 = arith.constant 0 : index
    %104 = vector.load %arg5[%c11, %c0_46, %c0_47] : memref<25x20x10xf32, #tpu.memory_space<vmem>>, vector<1x20x10xf32>
    %105 = vector.shape_cast %104 : vector<1x20x10xf32> to vector<20x10xf32>
    %106 = vector.extract_strided_slice %47 {offsets = [0, 25], sizes = [10, 144], strides = [1, 1]} : vector<10x196xf32> to vector<10x144xf32>
    %cst_48 = arith.constant dense<0.000000e+00> : vector<20x144xf32>
    %107 = tpu.matmul %105, %106, %cst_48 {dimension_numbers = #tpu.dot_dimension_numbers<[1], [0], [0], [1], [0, 0, 1, 1], [], []>} : vector<20x10xf32>, vector<10x144xf32>, vector<20x144xf32> -> vector<20x144xf32>
    %108 = arith.addf %103, %107 : vector<20x144xf32>
    %c12 = arith.constant 12 : index
    %c0_49 = arith.constant 0 : index
    %c0_50 = arith.constant 0 : index
    %109 = vector.load %arg5[%c12, %c0_49, %c0_50] : memref<25x20x10xf32, #tpu.memory_space<vmem>>, vector<1x20x10xf32>
    %110 = vector.shape_cast %109 : vector<1x20x10xf32> to vector<20x10xf32>
    %111 = vector.extract_strided_slice %47 {offsets = [0, 26], sizes = [10, 144], strides = [1, 1]} : vector<10x196xf32> to vector<10x144xf32>
    %cst_51 = arith.constant dense<0.000000e+00> : vector<20x144xf32>
    %112 = tpu.matmul %110, %111, %cst_51 {dimension_numbers = #tpu.dot_dimension_numbers<[1], [0], [0], [1], [0, 0, 1, 1], [], []>} : vector<20x10xf32>, vector<10x144xf32>, vector<20x144xf32> -> vector<20x144xf32>
    %113 = arith.addf %108, %112 : vector<20x144xf32>
    %c13 = arith.constant 13 : index
    %c0_52 = arith.constant 0 : index
    %c0_53 = arith.constant 0 : index
    %114 = vector.load %arg5[%c13, %c0_52, %c0_53] : memref<25x20x10xf32, #tpu.memory_space<vmem>>, vector<1x20x10xf32>
    %115 = vector.shape_cast %114 : vector<1x20x10xf32> to vector<20x10xf32>
    %116 = vector.extract_strided_slice %47 {offsets = [0, 27], sizes = [10, 144], strides = [1, 1]} : vector<10x196xf32> to vector<10x144xf32>
    %cst_54 = arith.constant dense<0.000000e+00> : vector<20x144xf32>
    %117 = tpu.matmul %115, %116, %cst_54 {dimension_numbers = #tpu.dot_dimension_numbers<[1], [0], [0], [1], [0, 0, 1, 1], [], []>} : vector<20x10xf32>, vector<10x144xf32>, vector<20x144xf32> -> vector<20x144xf32>
    %118 = arith.addf %113, %117 : vector<20x144xf32>
    %c14 = arith.constant 14 : index
    %c0_55 = arith.constant 0 : index
    %c0_56 = arith.constant 0 : index
    %119 = vector.load %arg5[%c14, %c0_55, %c0_56] : memref<25x20x10xf32, #tpu.memory_space<vmem>>, vector<1x20x10xf32>
    %120 = vector.shape_cast %119 : vector<1x20x10xf32> to vector<20x10xf32>
    %121 = vector.extract_strided_slice %47 {offsets = [0, 28], sizes = [10, 144], strides = [1, 1]} : vector<10x196xf32> to vector<10x144xf32>
    %cst_57 = arith.constant dense<0.000000e+00> : vector<20x144xf32>
    %122 = tpu.matmul %120, %121, %cst_57 {dimension_numbers = #tpu.dot_dimension_numbers<[1], [0], [0], [1], [0, 0, 1, 1], [], []>} : vector<20x10xf32>, vector<10x144xf32>, vector<20x144xf32> -> vector<20x144xf32>
    %123 = arith.addf %118, %122 : vector<20x144xf32>
    %c15 = arith.constant 15 : index
    %c0_58 = arith.constant 0 : index
    %c0_59 = arith.constant 0 : index
    %124 = vector.load %arg5[%c15, %c0_58, %c0_59] : memref<25x20x10xf32, #tpu.memory_space<vmem>>, vector<1x20x10xf32>
    %125 = vector.shape_cast %124 : vector<1x20x10xf32> to vector<20x10xf32>
    %126 = vector.extract_strided_slice %47 {offsets = [0, 36], sizes = [10, 144], strides = [1, 1]} : vector<10x196xf32> to vector<10x144xf32>
    %cst_60 = arith.constant dense<0.000000e+00> : vector<20x144xf32>
    %127 = tpu.matmul %125, %126, %cst_60 {dimension_numbers = #tpu.dot_dimension_numbers<[1], [0], [0], [1], [0, 0, 1, 1], [], []>} : vector<20x10xf32>, vector<10x144xf32>, vector<20x144xf32> -> vector<20x144xf32>
    %128 = arith.addf %123, %127 : vector<20x144xf32>
    %c16 = arith.constant 16 : index
    %c0_61 = arith.constant 0 : index
    %c0_62 = arith.constant 0 : index
    %129 = vector.load %arg5[%c16, %c0_61, %c0_62] : memref<25x20x10xf32, #tpu.memory_space<vmem>>, vector<1x20x10xf32>
    %130 = vector.shape_cast %129 : vector<1x20x10xf32> to vector<20x10xf32>
    %131 = vector.extract_strided_slice %47 {offsets = [0, 37], sizes = [10, 144], strides = [1, 1]} : vector<10x196xf32> to vector<10x144xf32>
    %cst_63 = arith.constant dense<0.000000e+00> : vector<20x144xf32>
    %132 = tpu.matmul %130, %131, %cst_63 {dimension_numbers = #tpu.dot_dimension_numbers<[1], [0], [0], [1], [0, 0, 1, 1], [], []>} : vector<20x10xf32>, vector<10x144xf32>, vector<20x144xf32> -> vector<20x144xf32>
    %133 = arith.addf %128, %132 : vector<20x144xf32>
    %c17 = arith.constant 17 : index
    %c0_64 = arith.constant 0 : index
    %c0_65 = arith.constant 0 : index
    %134 = vector.load %arg5[%c17, %c0_64, %c0_65] : memref<25x20x10xf32, #tpu.memory_space<vmem>>, vector<1x20x10xf32>
    %135 = vector.shape_cast %134 : vector<1x20x10xf32> to vector<20x10xf32>
    %136 = vector.extract_strided_slice %47 {offsets = [0, 38], sizes = [10, 144], strides = [1, 1]} : vector<10x196xf32> to vector<10x144xf32>
    %cst_66 = arith.constant dense<0.000000e+00> : vector<20x144xf32>
    %137 = tpu.matmul %135, %136, %cst_66 {dimension_numbers = #tpu.dot_dimension_numbers<[1], [0], [0], [1], [0, 0, 1, 1], [], []>} : vector<20x10xf32>, vector<10x144xf32>, vector<20x144xf32> -> vector<20x144xf32>
    %138 = arith.addf %133, %137 : vector<20x144xf32>
    %c18 = arith.constant 18 : index
    %c0_67 = arith.constant 0 : index
    %c0_68 = arith.constant 0 : index
    %139 = vector.load %arg5[%c18, %c0_67, %c0_68] : memref<25x20x10xf32, #tpu.memory_space<vmem>>, vector<1x20x10xf32>
    %140 = vector.shape_cast %139 : vector<1x20x10xf32> to vector<20x10xf32>
    %141 = vector.extract_strided_slice %47 {offsets = [0, 39], sizes = [10, 144], strides = [1, 1]} : vector<10x196xf32> to vector<10x144xf32>
    %cst_69 = arith.constant dense<0.000000e+00> : vector<20x144xf32>
    %142 = tpu.matmul %140, %141, %cst_69 {dimension_numbers = #tpu.dot_dimension_numbers<[1], [0], [0], [1], [0, 0, 1, 1], [], []>} : vector<20x10xf32>, vector<10x144xf32>, vector<20x144xf32> -> vector<20x144xf32>
    %143 = arith.addf %138, %142 : vector<20x144xf32>
    %c19 = arith.constant 19 : index
    %c0_70 = arith.constant 0 : index
    %c0_71 = arith.constant 0 : index
    %144 = vector.load %arg5[%c19, %c0_70, %c0_71] : memref<25x20x10xf32, #tpu.memory_space<vmem>>, vector<1x20x10xf32>
    %145 = vector.shape_cast %144 : vector<1x20x10xf32> to vector<20x10xf32>
    %146 = vector.extract_strided_slice %47 {offsets = [0, 40], sizes = [10, 144], strides = [1, 1]} : vector<10x196xf32> to vector<10x144xf32>
    %cst_72 = arith.constant dense<0.000000e+00> : vector<20x144xf32>
    %147 = tpu.matmul %145, %146, %cst_72 {dimension_numbers = #tpu.dot_dimension_numbers<[1], [0], [0], [1], [0, 0, 1, 1], [], []>} : vector<20x10xf32>, vector<10x144xf32>, vector<20x144xf32> -> vector<20x144xf32>
    %148 = arith.addf %143, %147 : vector<20x144xf32>
    %c20 = arith.constant 20 : index
    %c0_73 = arith.constant 0 : index
    %c0_74 = arith.constant 0 : index
    %149 = vector.load %arg5[%c20, %c0_73, %c0_74] : memref<25x20x10xf32, #tpu.memory_space<vmem>>, vector<1x20x10xf32>
    %150 = vector.shape_cast %149 : vector<1x20x10xf32> to vector<20x10xf32>
    %151 = vector.extract_strided_slice %47 {offsets = [0, 48], sizes = [10, 144], strides = [1, 1]} : vector<10x196xf32> to vector<10x144xf32>
    %cst_75 = arith.constant dense<0.000000e+00> : vector<20x144xf32>
    %152 = tpu.matmul %150, %151, %cst_75 {dimension_numbers = #tpu.dot_dimension_numbers<[1], [0], [0], [1], [0, 0, 1, 1], [], []>} : vector<20x10xf32>, vector<10x144xf32>, vector<20x144xf32> -> vector<20x144xf32>
    %153 = arith.addf %148, %152 : vector<20x144xf32>
    %c21 = arith.constant 21 : index
    %c0_76 = arith.constant 0 : index
    %c0_77 = arith.constant 0 : index
    %154 = vector.load %arg5[%c21, %c0_76, %c0_77] : memref<25x20x10xf32, #tpu.memory_space<vmem>>, vector<1x20x10xf32>
    %155 = vector.shape_cast %154 : vector<1x20x10xf32> to vector<20x10xf32>
    %156 = vector.extract_strided_slice %47 {offsets = [0, 49], sizes = [10, 144], strides = [1, 1]} : vector<10x196xf32> to vector<10x144xf32>
    %cst_78 = arith.constant dense<0.000000e+00> : vector<20x144xf32>
    %157 = tpu.matmul %155, %156, %cst_78 {dimension_numbers = #tpu.dot_dimension_numbers<[1], [0], [0], [1], [0, 0, 1, 1], [], []>} : vector<20x10xf32>, vector<10x144xf32>, vector<20x144xf32> -> vector<20x144xf32>
    %158 = arith.addf %153, %157 : vector<20x144xf32>
    %c22 = arith.constant 22 : index
    %c0_79 = arith.constant 0 : index
    %c0_80 = arith.constant 0 : index
    %159 = vector.load %arg5[%c22, %c0_79, %c0_80] : memref<25x20x10xf32, #tpu.memory_space<vmem>>, vector<1x20x10xf32>
    %160 = vector.shape_cast %159 : vector<1x20x10xf32> to vector<20x10xf32>
    %161 = vector.extract_strided_slice %47 {offsets = [0, 50], sizes = [10, 144], strides = [1, 1]} : vector<10x196xf32> to vector<10x144xf32>
    %cst_81 = arith.constant dense<0.000000e+00> : vector<20x144xf32>
    %162 = tpu.matmul %160, %161, %cst_81 {dimension_numbers = #tpu.dot_dimension_numbers<[1], [0], [0], [1], [0, 0, 1, 1], [], []>} : vector<20x10xf32>, vector<10x144xf32>, vector<20x144xf32> -> vector<20x144xf32>
    %163 = arith.addf %158, %162 : vector<20x144xf32>
    %c23 = arith.constant 23 : index
    %c0_82 = arith.constant 0 : index
    %c0_83 = arith.constant 0 : index
    %164 = vector.load %arg5[%c23, %c0_82, %c0_83] : memref<25x20x10xf32, #tpu.memory_space<vmem>>, vector<1x20x10xf32>
    %165 = vector.shape_cast %164 : vector<1x20x10xf32> to vector<20x10xf32>
    %166 = vector.extract_strided_slice %47 {offsets = [0, 51], sizes = [10, 144], strides = [1, 1]} : vector<10x196xf32> to vector<10x144xf32>
    %cst_84 = arith.constant dense<0.000000e+00> : vector<20x144xf32>
    %167 = tpu.matmul %165, %166, %cst_84 {dimension_numbers = #tpu.dot_dimension_numbers<[1], [0], [0], [1], [0, 0, 1, 1], [], []>} : vector<20x10xf32>, vector<10x144xf32>, vector<20x144xf32> -> vector<20x144xf32>
    %168 = arith.addf %163, %167 : vector<20x144xf32>
    %c24 = arith.constant 24 : index
    %c0_85 = arith.constant 0 : index
    %c0_86 = arith.constant 0 : index
    %169 = vector.load %arg5[%c24, %c0_85, %c0_86] : memref<25x20x10xf32, #tpu.memory_space<vmem>>, vector<1x20x10xf32>
    %170 = vector.shape_cast %169 : vector<1x20x10xf32> to vector<20x10xf32>
    %171 = vector.extract_strided_slice %47 {offsets = [0, 52], sizes = [10, 144], strides = [1, 1]} : vector<10x196xf32> to vector<10x144xf32>
    %cst_87 = arith.constant dense<0.000000e+00> : vector<20x144xf32>
    %172 = tpu.matmul %170, %171, %cst_87 {dimension_numbers = #tpu.dot_dimension_numbers<[1], [0], [0], [1], [0, 0, 1, 1], [], []>} : vector<20x10xf32>, vector<10x144xf32>, vector<20x144xf32> -> vector<20x144xf32>
    %173 = arith.addf %168, %172 : vector<20x144xf32>
    %c0_88 = arith.constant 0 : index
    %c0_89 = arith.constant 0 : index
    %174 = vector.load %arg6[%c0_88, %c0_89] : memref<20x1xf32, #tpu.memory_space<vmem>>, vector<20x1xf32>
    %175 = vector.broadcast %174 : vector<20x1xf32> to vector<20x144xf32>
    %176 = arith.addf %173, %175 : vector<20x144xf32>
    %cst_90 = arith.constant 0.000000e+00 : f32
    %177 = vector.broadcast %cst_90 : f32 to vector<20x144xf32>
    %178 = arith.maximumf %176, %177 : vector<20x144xf32>
    %179 = vector.extract_strided_slice %178 {offsets = [0, 0], sizes = [20, 143], strides = [1, 1]} : vector<20x144xf32> to vector<20x143xf32>
    %180 = vector.extract_strided_slice %178 {offsets = [0, 1], sizes = [20, 143], strides = [1, 1]} : vector<20x144xf32> to vector<20x143xf32>
    %181 = arith.maximumf %179, %180 : vector<20x143xf32>
    %182 = vector.extract_strided_slice %181 {offsets = [0, 0], sizes = [20, 131], strides = [1, 1]} : vector<20x143xf32> to vector<20x131xf32>
    %183 = vector.extract_strided_slice %181 {offsets = [0, 12], sizes = [20, 131], strides = [1, 1]} : vector<20x143xf32> to vector<20x131xf32>
    %184 = arith.maximumf %182, %183 : vector<20x131xf32>
    %185 = vector.extract_strided_slice %184 {offsets = [0, 0], sizes = [20, 80], strides = [1, 1]} : vector<20x131xf32> to vector<20x80xf32>
    %c0_91 = arith.constant 0 : index
    %c0_92 = arith.constant 0 : index
    %186 = vector.load %arg7[%c0_91, %c0_92] : memref<80x16xf32, #tpu.memory_space<vmem>>, vector<80x16xf32>
    %cst_93 = arith.constant dense<0.000000e+00> : vector<20x16xf32>
    %187 = tpu.matmul %185, %186, %cst_93 {dimension_numbers = #tpu.dot_dimension_numbers<[1], [0], [0], [1], [0, 0, 1, 1], [], []>} : vector<20x80xf32>, vector<80x16xf32>, vector<20x16xf32> -> vector<20x16xf32>
    %188 = vector.extract_strided_slice %187 {offsets = [0, 0], sizes = [1, 16], strides = [1, 1]} : vector<20x16xf32> to vector<1x16xf32>
    %189 = vector.extract_strided_slice %187 {offsets = [1, 0], sizes = [1, 16], strides = [1, 1]} : vector<20x16xf32> to vector<1x16xf32>
    %190 = vector.extract_strided_slice %187 {offsets = [2, 0], sizes = [1, 16], strides = [1, 1]} : vector<20x16xf32> to vector<1x16xf32>
    %191 = vector.extract_strided_slice %187 {offsets = [3, 0], sizes = [1, 16], strides = [1, 1]} : vector<20x16xf32> to vector<1x16xf32>
    %192 = vector.extract_strided_slice %187 {offsets = [4, 0], sizes = [1, 16], strides = [1, 1]} : vector<20x16xf32> to vector<1x16xf32>
    %193 = vector.extract_strided_slice %187 {offsets = [5, 0], sizes = [1, 16], strides = [1, 1]} : vector<20x16xf32> to vector<1x16xf32>
    %194 = vector.extract_strided_slice %187 {offsets = [6, 0], sizes = [1, 16], strides = [1, 1]} : vector<20x16xf32> to vector<1x16xf32>
    %195 = vector.extract_strided_slice %187 {offsets = [7, 0], sizes = [1, 16], strides = [1, 1]} : vector<20x16xf32> to vector<1x16xf32>
    %196 = vector.extract_strided_slice %187 {offsets = [8, 0], sizes = [1, 16], strides = [1, 1]} : vector<20x16xf32> to vector<1x16xf32>
    %197 = vector.extract_strided_slice %187 {offsets = [9, 0], sizes = [1, 16], strides = [1, 1]} : vector<20x16xf32> to vector<1x16xf32>
    %198 = vector.extract_strided_slice %187 {offsets = [10, 0], sizes = [1, 16], strides = [1, 1]} : vector<20x16xf32> to vector<1x16xf32>
    %199 = vector.extract_strided_slice %187 {offsets = [11, 0], sizes = [1, 16], strides = [1, 1]} : vector<20x16xf32> to vector<1x16xf32>
    %200 = vector.extract_strided_slice %187 {offsets = [12, 0], sizes = [1, 16], strides = [1, 1]} : vector<20x16xf32> to vector<1x16xf32>
    %201 = vector.extract_strided_slice %187 {offsets = [13, 0], sizes = [1, 16], strides = [1, 1]} : vector<20x16xf32> to vector<1x16xf32>
    %202 = vector.extract_strided_slice %187 {offsets = [14, 0], sizes = [1, 16], strides = [1, 1]} : vector<20x16xf32> to vector<1x16xf32>
    %203 = vector.extract_strided_slice %187 {offsets = [15, 0], sizes = [1, 16], strides = [1, 1]} : vector<20x16xf32> to vector<1x16xf32>
    %204 = vector.extract_strided_slice %187 {offsets = [16, 0], sizes = [1, 16], strides = [1, 1]} : vector<20x16xf32> to vector<1x16xf32>
    %205 = vector.extract_strided_slice %187 {offsets = [17, 0], sizes = [1, 16], strides = [1, 1]} : vector<20x16xf32> to vector<1x16xf32>
    %206 = vector.extract_strided_slice %187 {offsets = [18, 0], sizes = [1, 16], strides = [1, 1]} : vector<20x16xf32> to vector<1x16xf32>
    %207 = vector.extract_strided_slice %187 {offsets = [19, 0], sizes = [1, 16], strides = [1, 1]} : vector<20x16xf32> to vector<1x16xf32>
    %208 = tpu.concatenate %188, %189, %190, %191, %192, %193, %194, %195, %196, %197, %198, %199, %200, %201, %202, %203 in 1 : vector<1x16xf32>, vector<1x16xf32>, vector<1x16xf32>, vector<1x16xf32>, vector<1x16xf32>, vector<1x16xf32>, vector<1x16xf32>, vector<1x16xf32>, vector<1x16xf32>, vector<1x16xf32>, vector<1x16xf32>, vector<1x16xf32>, vector<1x16xf32>, vector<1x16xf32>, vector<1x16xf32>, vector<1x16xf32> -> vector<1x256xf32>
    %209 = tpu.concatenate %204, %205, %206, %207 in 1 : vector<1x16xf32>, vector<1x16xf32>, vector<1x16xf32>, vector<1x16xf32> -> vector<1x64xf32>
    %210 = tpu.concatenate %208, %209 in 1 : vector<1x256xf32>, vector<1x64xf32> -> vector<1x320xf32>
    %c0_94 = arith.constant 0 : index
    %c0_95 = arith.constant 0 : index
    %211 = vector.load %arg8[%c0_94, %c0_95] : memref<320x50xf32, #tpu.memory_space<vmem>>, vector<320x50xf32>
    %cst_96 = arith.constant dense<0.000000e+00> : vector<1x50xf32>
    %212 = tpu.matmul %210, %211, %cst_96 {dimension_numbers = #tpu.dot_dimension_numbers<[1], [0], [0], [1], [0, 0, 1, 1], [], []>} : vector<1x320xf32>, vector<320x50xf32>, vector<1x50xf32> -> vector<1x50xf32>
    %c0_97 = arith.constant 0 : index
    %c0_98 = arith.constant 0 : index
    %213 = vector.load %arg9[%c0_97, %c0_98] : memref<1x50xf32, #tpu.memory_space<vmem>>, vector<1x50xf32>
    %214 = arith.addf %212, %213 : vector<1x50xf32>
    %cst_99 = arith.constant 0.000000e+00 : f32
    %215 = vector.broadcast %cst_99 : f32 to vector<1x50xf32>
    %216 = arith.maximumf %214, %215 : vector<1x50xf32>
    %c0_100 = arith.constant 0 : index
    %c0_101 = arith.constant 0 : index
    %217 = vector.load %arg10[%c0_100, %c0_101] : memref<50x10xf32, #tpu.memory_space<vmem>>, vector<50x10xf32>
    %cst_102 = arith.constant dense<0.000000e+00> : vector<1x10xf32>
    %218 = tpu.matmul %216, %217, %cst_102 {dimension_numbers = #tpu.dot_dimension_numbers<[1], [0], [0], [1], [0, 0, 1, 1], [], []>} : vector<1x50xf32>, vector<50x10xf32>, vector<1x10xf32> -> vector<1x10xf32>
    %c0_103 = arith.constant 0 : index
    %c0_104 = arith.constant 0 : index
    %219 = vector.load %arg11[%c0_103, %c0_104] : memref<1x10xf32, #tpu.memory_space<vmem>>, vector<1x10xf32>
    %220 = arith.addf %218, %219 : vector<1x10xf32>
    %cst_105 = arith.constant 0.000000e+00 : f32
    %221 = vector.broadcast %cst_105 : f32 to vector<1x10xf32>
    %222 = arith.maximumf %220, %221 : vector<1x10xf32>
    %c0_106 = arith.constant 0 : index
    %c0_107 = arith.constant 0 : index
    %c0_108 = arith.constant 0 : index
    %223 = vector.load %arg13[%c0_106, %c0_107, %c0_108] : memref<1x1x50xf32, #tpu.memory_space<vmem>>, vector<1x1x50xf32>
    %224 = vector.shape_cast %223 : vector<1x1x50xf32> to vector<1x50xf32>
    %225 = vector.shape_cast %216 : vector<1x50xf32> to vector<1x1x50xf32>
    tpu.vector_store %arg13[%c0_106, %c0_107, %c0_108], %225 {strides = array<i32>} : memref<1x1x50xf32, #tpu.memory_space<vmem>>, vector<1x1x50xf32>,
    %c0_109 = arith.constant 0 : index
    %c0_110 = arith.constant 0 : index
    %c0_111 = arith.constant 0 : index
    %226 = vector.load %arg12[%c0_109, %c0_110, %c0_111] : memref<1x1x10xf32, #tpu.memory_space<vmem>>, vector<1x1x10xf32>
    %227 = vector.shape_cast %226 : vector<1x1x10xf32> to vector<1x10xf32>
    %228 = vector.shape_cast %222 : vector<1x10xf32> to vector<1x1x10xf32>
    tpu.vector_store %arg12[%c0_109, %c0_110, %c0_111], %228 {strides = array<i32>} : memref<1x1x10xf32, #tpu.memory_space<vmem>>, vector<1x1x10xf32>,
    return
  }
  func.func @transform_0(%arg0: i32) -> (i32, i32, i32) {
    %c0_i32 = arith.constant 0 : i32
    %c0_i32_0 = arith.constant 0 : i32
    %c0_i32_1 = arith.constant 0 : i32
    return %arg0, %c0_i32, %c0_i32_0 : i32, i32, i32
  }
  func.func @transform_1(%arg0: i32) -> (i32, i32) {
    %c0_i32 = arith.constant 0 : i32
    %c0_i32_0 = arith.constant 0 : i32
    %c0_i32_1 = arith.constant 0 : i32
    return %c0_i32, %c0_i32_0 : i32, i32
  }
  func.func @transform_2(%arg0: i32) -> (i32, i32) {
    %c0_i32 = arith.constant 0 : i32
    %c0_i32_0 = arith.constant 0 : i32
    %c0_i32_1 = arith.constant 0 : i32
    return %c0_i32, %c0_i32_0 : i32, i32
  }
  func.func @transform_3(%arg0: i32) -> (i32, i32) {
    %c0_i32 = arith.constant 0 : i32
    %c0_i32_0 = arith.constant 0 : i32
    %c0_i32_1 = arith.constant 0 : i32
    return %c0_i32, %c0_i32_0 : i32, i32
  }
  func.func @transform_4(%arg0: i32) -> (i32, i32, i32) {
    %c0_i32 = arith.constant 0 : i32
    %c0_i32_0 = arith.constant 0 : i32
    %c0_i32_1 = arith.constant 0 : i32
    %c0_i32_2 = arith.constant 0 : i32
    return %c0_i32, %c0_i32_0, %c0_i32_1 : i32, i32, i32
  }
  func.func @transform_5(%arg0: i32) -> (i32, i32) {
    %c0_i32 = arith.constant 0 : i32
    %c0_i32_0 = arith.constant 0 : i32
    %c0_i32_1 = arith.constant 0 : i32
    return %c0_i32, %c0_i32_0 : i32, i32
  }
  func.func @transform_6(%arg0: i32) -> (i32, i32) {
    %c0_i32 = arith.constant 0 : i32
    %c0_i32_0 = arith.constant 0 : i32
    %c0_i32_1 = arith.constant 0 : i32
    return %c0_i32, %c0_i32_0 : i32, i32
  }
  func.func @transform_7(%arg0: i32) -> (i32, i32) {
    %c0_i32 = arith.constant 0 : i32
    %c0_i32_0 = arith.constant 0 : i32
    %c0_i32_1 = arith.constant 0 : i32
    return %c0_i32, %c0_i32_0 : i32, i32
  }
  func.func @transform_8(%arg0: i32) -> (i32, i32) {
    %c0_i32 = arith.constant 0 : i32
    %c0_i32_0 = arith.constant 0 : i32
    %c0_i32_1 = arith.constant 0 : i32
    return %c0_i32, %c0_i32_0 : i32, i32
  }
  func.func @transform_9(%arg0: i32) -> (i32, i32) {
    %c0_i32 = arith.constant 0 : i32
    %c0_i32_0 = arith.constant 0 : i32
    %c0_i32_1 = arith.constant 0 : i32
    return %c0_i32, %c0_i32_0 : i32, i32
  }
  func.func @transform_10(%arg0: i32) -> (i32, i32) {
    %c0_i32 = arith.constant 0 : i32
    %c0_i32_0 = arith.constant 0 : i32
    %c0_i32_1 = arith.constant 0 : i32
    return %c0_i32, %c0_i32_0 : i32, i32
  }
  func.func @transform_11(%arg0: i32) -> (i32, i32, i32) {
    %c0_i32 = arith.constant 0 : i32
    %c0_i32_0 = arith.constant 0 : i32
    %c0_i32_1 = arith.constant 0 : i32
    return %arg0, %c0_i32, %c0_i32_0 : i32, i32, i32
  }
  func.func @transform_12(%arg0: i32) -> (i32, i32, i32) {
    %c0_i32 = arith.constant 0 : i32
    %c0_i32_0 = arith.constant 0 : i32
    %c0_i32_1 = arith.constant 0 : i32
    return %arg0, %c0_i32, %c0_i32_0 : i32, i32, i32
  }
}

</mosaic_0001>

<llo_original>
// kernel: mnist_convnet_forward.1
$region0: #{mnist_convnet_forward.1}
  #allocation0 [shape = 'u32[]', space=smem, size = 0x4, offset = 0x4, fixed_abs, tag = 'smem constant byte address 0x4 - core index']
  #allocation1 [shape = 'u32[144,128]{1,0:T(1,128)}', space=vmem, size = 0x12000, scoped, tag = 'internal scratch']
  %s0 = inlined_call_operand.vmem [shape: f32[2,1,900], index: 0, kind: input, shape index: {}]
  %s1 = inlined_call_operand.vmem [shape: f32[10,25], index: 1, kind: input, shape index: {}]
  %s2 = inlined_call_operand.vmem [shape: f32[10,1], index: 2, kind: input, shape index: {}]
  %s3 = inlined_call_operand.vmem [shape: f32[640,144], index: 3, kind: input, shape index: {}]
  %s4 = inlined_call_operand.vmem [shape: f32[25,20,10], index: 4, kind: input, shape index: {}]
  %s5 = inlined_call_operand.vmem [shape: f32[20,1], index: 5, kind: input, shape index: {}]
  %s6 = inlined_call_operand.vmem [shape: f32[80,16], index: 6, kind: input, shape index: {}]
  %s7 = inlined_call_operand.vmem [shape: f32[320,50], index: 7, kind: input, shape index: {}]
  %s8 = inlined_call_operand.vmem [shape: f32[1,50], index: 8, kind: input, shape index: {}]
  %s9 = inlined_call_operand.vmem [shape: f32[50,10], index: 9, kind: input, shape index: {}]
  %s10 = inlined_call_operand.vmem [shape: f32[1,10], index: 10, kind: input, shape index: {}]
  %s11 = inlined_call_operand.hbm [shape: f32[2,1,10], index: 11, kind: output, shape index: {0}]
  %s12 = inlined_call_operand.hbm [shape: f32[2,1,50], index: 12, kind: output, shape index: {1}]
  %13 = xla_tuple %s11, %s12
  %s14 = sld [smem:[#allocation0]]
  $region85: #{mnist_convnet_forward.1} parent=0
    _
  %s16 = ssub.s32 1, %s14
  %s17 = scalar_select 0, %s16, %s14
  $region1: #{mnist_convnet_forward.1} parent=0
    #allocation2 [shape = 'u8[1024]{0}', space=vmem, size = 0x400, scoped, tag = 'output window, operand 0']
    #allocation3 [shape = 's32[2]{0}', space=sflag, size = 0x8, scoped, tag = 'scoped memory for mnist_convnet_forward.1']
    #allocation4 [shape = 'u8[1024]{0}', space=vmem, size = 0x400, scoped, tag = 'output window, operand 1']
    #allocation5 [shape = 's32[2]{0}', space=sflag, size = 0x8, scoped, tag = 'scoped memory for mnist_convnet_forward.1']
    %18 = vsyncpa [#allocation3], 0
    %s19 = scalar_lea.sflag [#allocation3], 1
    %20 = vsyncpa %s19, 0
    %21 = vsyncpa [#allocation5], 0
    %s22 = scalar_lea.sflag [#allocation5], 1
    %23 = vsyncpa %s22, 0
    loop: start=0, step=1, limit=4
    $region2: #{mnist_convnet_forward.1} parent=1 // loop_pre_header
      _
    $region3: #{mnist_convnet_forward.1} parent=1 // loop_header
      %s25 = sphi 0, %s29
      %p26 = scmp.ge.s32.totalorder %s25, 4
      %s35 = sphi 0, %s37
      %s38 = sphi 0, %s35
      %s39 = sphi 0, %s38
      %s55 = sphi 0, %s39
      %s59 = sphi 0, %s59
      %s61 = sphi 0, %s59
      %s62 = sphi 0, %s61
      %s76 = sphi 0, %s62
      %s80 = sphi 0, %s80
      %s82 = sphi 0, %s80
      %s83 = sphi 0, %s82
      %s97 = sphi 0, %s83
      %s101 = sphi 0, %s101
      %s103 = sphi 0, %s101
      %s104 = sphi 0, %s103
      %s118 = sphi 0, %s104
      %s122 = sphi 0, %s122
      %s124 = sphi 0, %s122
      %s125 = sphi 0, %s124
      %s139 = sphi 0, %s125
      %s143 = sphi 0, %s143
      %s145 = sphi 0, %s143
      %s146 = sphi 0, %s145
      %s160 = sphi 0, %s146
      %s164 = sphi 0, %s164
      %s166 = sphi 0, %s164
      %s167 = sphi 0, %s166
      %s181 = sphi 0, %s167
      %s185 = sphi 0, %s185
      %s187 = sphi 0, %s185
      %s188 = sphi 0, %s187
      %s202 = sphi 0, %s188
      %s206 = sphi 0, %s206
      %s208 = sphi 0, %s206
      %s209 = sphi 0, %s208
      %s223 = sphi 0, %s209
      %s227 = sphi 0, %s227
      %s229 = sphi 0, %s227
      %s230 = sphi 0, %s229
      %s244 = sphi 0, %s230
      %s248 = sphi 0, %s248
      %s250 = sphi 0, %s248
      %s251 = sphi 0, %s250
      %s265 = sphi 0, %s251
      %s271 = sphi 0, %s273
      %s274 = sphi 0, %s271
      %s275 = sphi 0, %s274
      %s291 = sphi 0, %s275
      %s297 = sphi 0, %s299
      %s300 = sphi 0, %s297
      %s301 = sphi 0, %s300
      %s317 = sphi 0, %s301
    $region4: #{mnist_convnet_forward.1} parent=1 // loop_header_branch
      %28 = sbr.rel (%p26) target = $region8
    $region5: #{mnist_convnet_forward.1} parent=1 // loop_body
      %s30 = ssub.s32 %s25, 1
      %s31 = ssub.s32 %s25, 2
      %s32 = sadd.s32 %s25, 1
      %s33 = ssub.s32 %s25, %s32
      %p34 = scmp.eq.s32.totalorder %s33, 0
      %s36 = sadd.s32 %s35, 1
      %s37 = scalar_select %p34, %s35, %s36
      %p40 = pneg %p34
      %p41 = scmp.eq.s32.totalorder %s25, 1
      %p42 = por %p40, %p41
      %p43 = scmp.ne.s32.totalorder %s35, %s38
      %p44 = scmp.eq.s32.totalorder %s25, 0
      %p45 = por %p43, %p44
      %p46 = scmp.ne.s32.totalorder %s35, %s38
      %p47 = scmp.eq.s32.totalorder %s30, 1
      %p48 = por %p46, %p47
      %p49 = scmp.ne.s32.totalorder %s38, %s39
      %p50 = scmp.eq.s32.totalorder %s30, 0
      %p51 = por %p49, %p50
      %p52 = scmp.ne.s32.totalorder %s38, %s39
      %p53 = scmp.eq.s32.totalorder %s31, 1
      %p54 = por %p52, %p53
      %p56 = scmp.ne.s32.totalorder %s39, %s55
      %p57 = scmp.eq.s32.totalorder %s31, 0
      %p58 = por %p56, %p57
      %s60 = sadd.s32 %s59, 1
      %p63 = scmp.eq.s32.totalorder %s25, 1
      %p64 = scmp.ne.s32.totalorder %s59, %s61
      %p65 = scmp.eq.s32.totalorder %s25, 0
      %p66 = por %p64, %p65
      %p67 = scmp.ne.s32.totalorder %s59, %s61
      %p68 = scmp.eq.s32.totalorder %s30, 1
      %p69 = por %p67, %p68
      %p70 = scmp.ne.s32.totalorder %s61, %s62
      %p71 = scmp.eq.s32.totalorder %s30, 0
      %p72 = por %p70, %p71
      %p73 = scmp.ne.s32.totalorder %s61, %s62
      %p74 = scmp.eq.s32.totalorder %s31, 1
      %p75 = por %p73, %p74
      %p77 = scmp.ne.s32.totalorder %s62, %s76
      %p78 = scmp.eq.s32.totalorder %s31, 0
      %p79 = por %p77, %p78
      %s81 = sadd.s32 %s80, 1
      %p84 = scmp.eq.s32.totalorder %s25, 1
      %p85 = scmp.ne.s32.totalorder %s80, %s82
      %p86 = scmp.eq.s32.totalorder %s25, 0
      %p87 = por %p85, %p86
      %p88 = scmp.ne.s32.totalorder %s80, %s82
      %p89 = scmp.eq.s32.totalorder %s30, 1
      %p90 = por %p88, %p89
      %p91 = scmp.ne.s32.totalorder %s82, %s83
      %p92 = scmp.eq.s32.totalorder %s30, 0
      %p93 = por %p91, %p92
      %p94 = scmp.ne.s32.totalorder %s82, %s83
      %p95 = scmp.eq.s32.totalorder %s31, 1
      %p96 = por %p94, %p95
      %p98 = scmp.ne.s32.totalorder %s83, %s97
      %p99 = scmp.eq.s32.totalorder %s31, 0
      %p100 = por %p98, %p99
      %s102 = sadd.s32 %s101, 1
      %p105 = scmp.eq.s32.totalorder %s25, 1
      %p106 = scmp.ne.s32.totalorder %s101, %s103
      %p107 = scmp.eq.s32.totalorder %s25, 0
      %p108 = por %p106, %p107
      %p109 = scmp.ne.s32.totalorder %s101, %s103
      %p110 = scmp.eq.s32.totalorder %s30, 1
      %p111 = por %p109, %p110
      %p112 = scmp.ne.s32.totalorder %s103, %s104
      %p113 = scmp.eq.s32.totalorder %s30, 0
      %p114 = por %p112, %p113
      %p115 = scmp.ne.s32.totalorder %s103, %s104
      %p116 = scmp.eq.s32.totalorder %s31, 1
      %p117 = por %p115, %p116
      %p119 = scmp.ne.s32.totalorder %s104, %s118
      %p120 = scmp.eq.s32.totalorder %s31, 0
      %p121 = por %p119, %p120
      %s123 = sadd.s32 %s122, 1
      %p126 = scmp.eq.s32.totalorder %s25, 1
      %p127 = scmp.ne.s32.totalorder %s122, %s124
      %p128 = scmp.eq.s32.totalorder %s25, 0
      %p129 = por %p127, %p128
      %p130 = scmp.ne.s32.totalorder %s122, %s124
      %p131 = scmp.eq.s32.totalorder %s30, 1
      %p132 = por %p130, %p131
      %p133 = scmp.ne.s32.totalorder %s124, %s125
      %p134 = scmp.eq.s32.totalorder %s30, 0
      %p135 = por %p133, %p134
      %p136 = scmp.ne.s32.totalorder %s124, %s125
      %p137 = scmp.eq.s32.totalorder %s31, 1
      %p138 = por %p136, %p137
      %p140 = scmp.ne.s32.totalorder %s125, %s139
      %p141 = scmp.eq.s32.totalorder %s31, 0
      %p142 = por %p140, %p141
      %s144 = sadd.s32 %s143, 1
      %p147 = scmp.eq.s32.totalorder %s25, 1
      %p148 = scmp.ne.s32.totalorder %s143, %s145
      %p149 = scmp.eq.s32.totalorder %s25, 0
      %p150 = por %p148, %p149
      %p151 = scmp.ne.s32.totalorder %s143, %s145
      %p152 = scmp.eq.s32.totalorder %s30, 1
      %p153 = por %p151, %p152
      %p154 = scmp.ne.s32.totalorder %s145, %s146
      %p155 = scmp.eq.s32.totalorder %s30, 0
      %p156 = por %p154, %p155
      %p157 = scmp.ne.s32.totalorder %s145, %s146
      %p158 = scmp.eq.s32.totalorder %s31, 1
      %p159 = por %p157, %p158
      %p161 = scmp.ne.s32.totalorder %s146, %s160
      %p162 = scmp.eq.s32.totalorder %s31, 0
      %p163 = por %p161, %p162
      %s165 = sadd.s32 %s164, 1
      %p168 = scmp.eq.s32.totalorder %s25, 1
      %p169 = scmp.ne.s32.totalorder %s164, %s166
      %p170 = scmp.eq.s32.totalorder %s25, 0
      %p171 = por %p169, %p170
      %p172 = scmp.ne.s32.totalorder %s164, %s166
      %p173 = scmp.eq.s32.totalorder %s30, 1
      %p174 = por %p172, %p173
      %p175 = scmp.ne.s32.totalorder %s166, %s167
      %p176 = scmp.eq.s32.totalorder %s30, 0
      %p177 = por %p175, %p176
      %p178 = scmp.ne.s32.totalorder %s166, %s167
      %p179 = scmp.eq.s32.totalorder %s31, 1
      %p180 = por %p178, %p179
      %p182 = scmp.ne.s32.totalorder %s167, %s181
      %p183 = scmp.eq.s32.totalorder %s31, 0
      %p184 = por %p182, %p183
      %s186 = sadd.s32 %s185, 1
      %p189 = scmp.eq.s32.totalorder %s25, 1
      %p190 = scmp.ne.s32.totalorder %s185, %s187
      %p191 = scmp.eq.s32.totalorder %s25, 0
      %p192 = por %p190, %p191
      %p193 = scmp.ne.s32.totalorder %s185, %s187
      %p194 = scmp.eq.s32.totalorder %s30, 1
      %p195 = por %p193, %p194
      %p196 = scmp.ne.s32.totalorder %s187, %s188
      %p197 = scmp.eq.s32.totalorder %s30, 0
      %p198 = por %p196, %p197
      %p199 = scmp.ne.s32.totalorder %s187, %s188
      %p200 = scmp.eq.s32.totalorder %s31, 1
      %p201 = por %p199, %p200
      %p203 = scmp.ne.s32.totalorder %s188, %s202
      %p204 = scmp.eq.s32.totalorder %s31, 0
      %p205 = por %p203, %p204
      %s207 = sadd.s32 %s206, 1
      %p210 = scmp.eq.s32.totalorder %s25, 1
      %p211 = scmp.ne.s32.totalorder %s206, %s208
      %p212 = scmp.eq.s32.totalorder %s25, 0
      %p213 = por %p211, %p212
      %p214 = scmp.ne.s32.totalorder %s206, %s208
      %p215 = scmp.eq.s32.totalorder %s30, 1
      %p216 = por %p214, %p215
      %p217 = scmp.ne.s32.totalorder %s208, %s209
      %p218 = scmp.eq.s32.totalorder %s30, 0
      %p219 = por %p217, %p218
      %p220 = scmp.ne.s32.totalorder %s208, %s209
      %p221 = scmp.eq.s32.totalorder %s31, 1
      %p222 = por %p220, %p221
      %p224 = scmp.ne.s32.totalorder %s209, %s223
      %p225 = scmp.eq.s32.totalorder %s31, 0
      %p226 = por %p224, %p225
      %s228 = sadd.s32 %s227, 1
      %p231 = scmp.eq.s32.totalorder %s25, 1
      %p232 = scmp.ne.s32.totalorder %s227, %s229
      %p233 = scmp.eq.s32.totalorder %s25, 0
      %p234 = por %p232, %p233
      %p235 = scmp.ne.s32.totalorder %s227, %s229
      %p236 = scmp.eq.s32.totalorder %s30, 1
      %p237 = por %p235, %p236
      %p238 = scmp.ne.s32.totalorder %s229, %s230
      %p239 = scmp.eq.s32.totalorder %s30, 0
      %p240 = por %p238, %p239
      %p241 = scmp.ne.s32.totalorder %s229, %s230
      %p242 = scmp.eq.s32.totalorder %s31, 1
      %p243 = por %p241, %p242
      %p245 = scmp.ne.s32.totalorder %s230, %s244
      %p246 = scmp.eq.s32.totalorder %s31, 0
      %p247 = por %p245, %p246
      %s249 = sadd.s32 %s248, 1
      %p252 = scmp.eq.s32.totalorder %s25, 1
      %p253 = scmp.ne.s32.totalorder %s248, %s250
      %p254 = scmp.eq.s32.totalorder %s25, 0
      %p255 = por %p253, %p254
      %p256 = scmp.ne.s32.totalorder %s248, %s250
      %p257 = scmp.eq.s32.totalorder %s30, 1
      %p258 = por %p256, %p257
      %p259 = scmp.ne.s32.totalorder %s250, %s251
      %p260 = scmp.eq.s32.totalorder %s30, 0
      %p261 = por %p259, %p260
      %p262 = scmp.ne.s32.totalorder %s250, %s251
      %p263 = scmp.eq.s32.totalorder %s31, 1
      %p264 = por %p262, %p263
      %p266 = scmp.ne.s32.totalorder %s251, %s265
      %p267 = scmp.eq.s32.totalorder %s31, 0
      %p268 = por %p266, %p267
      %s269 = ssub.s32 %s25, %s32
      %p270 = scmp.eq.s32.totalorder %s269, 0
      %s272 = sadd.s32 %s271, 1
      %s273 = scalar_select %p270, %s271, %s272
      %p276 = pneg %p270
      %p277 = scmp.eq.s32.totalorder %s25, 1
      %p278 = por %p276, %p277
      %p279 = scmp.ne.s32.totalorder %s271, %s274
      %p280 = scmp.eq.s32.totalorder %s25, 0
      %p281 = por %p279, %p280
      %p282 = scmp.ne.s32.totalorder %s271, %s274
      %p283 = scmp.eq.s32.totalorder %s30, 1
      %p284 = por %p282, %p283
      %p285 = scmp.ne.s32.totalorder %s274, %s275
      %p286 = scmp.eq.s32.totalorder %s30, 0
      %p287 = por %p285, %p286
      %p288 = scmp.ne.s32.totalorder %s274, %s275
      %p289 = scmp.eq.s32.totalorder %s31, 1
      %p290 = por %p288, %p289
      %p292 = scmp.ne.s32.totalorder %s275, %s291
      %p293 = scmp.eq.s32.totalorder %s31, 0
      %p294 = por %p292, %p293
      %s295 = ssub.s32 %s25, %s32
      %p296 = scmp.eq.s32.totalorder %s295, 0
      %s298 = sadd.s32 %s297, 1
      %s299 = scalar_select %p296, %s297, %s298
      %p302 = pneg %p296
      %p303 = scmp.eq.s32.totalorder %s25, 1
      %p304 = por %p302, %p303
      %p305 = scmp.ne.s32.totalorder %s297, %s300
      %p306 = scmp.eq.s32.totalorder %s25, 0
      %p307 = por %p305, %p306
      %p308 = scmp.ne.s32.totalorder %s297, %s300
      %p309 = scmp.eq.s32.totalorder %s30, 1
      %p310 = por %p308, %p309
      %p311 = scmp.ne.s32.totalorder %s300, %s301
      %p312 = scmp.eq.s32.totalorder %s30, 0
      %p313 = por %p311, %p312
      %p314 = scmp.ne.s32.totalorder %s300, %s301
      %p315 = scmp.eq.s32.totalorder %s31, 1
      %p316 = por %p314, %p315
      %p318 = scmp.ne.s32.totalorder %s301, %s317
      %p319 = scmp.eq.s32.totalorder %s31, 0
      %p320 = por %p318, %p319
      %p321 = scmp.le.s32.totalorder 1, %s25
      %p322 = scmp.lt.s32.totalorder %s25, 3
      %p323 = pnand %p321, %p322
      %p324 = pneg %p323
      // Predicated region
      $region9: #{mnist_convnet_forward.1} parent=5 // pred_check
        _
      $region10: #{mnist_convnet_forward.1} parent=5 // pred_check_branch
        %326 = sbr.rel (%p323) target = $region12
      $region11: #{mnist_convnet_forward.1} parent=5 // pred_region
        %s327 = ssub.s32 %s25, 1
        // Predicated region
        $region13: #{mnist_convnet_forward.1} parent=11 // pred_check
          %p328 = pneg %p72
        $region14: #{mnist_convnet_forward.1} parent=11 // pred_check_branch
          %330 = sbr.rel (%p328) target = $region16
        $region15: #{mnist_convnet_forward.1} parent=11 // pred_region
          _
        $region16: #{mnist_convnet_forward.1} parent=11 // pred_fallthru
          _
        // Predicated region
        $region17: #{mnist_convnet_forward.1} parent=11 // pred_check
          %p331 = pneg %p93
        $region18: #{mnist_convnet_forward.1} parent=11 // pred_check_branch
          %333 = sbr.rel (%p331) target = $region20
        $region19: #{mnist_convnet_forward.1} parent=11 // pred_region
          _
        $region20: #{mnist_convnet_forward.1} parent=11 // pred_fallthru
          _
        // Predicated region
        $region21: #{mnist_convnet_forward.1} parent=11 // pred_check
          %p334 = pneg %p114
        $region22: #{mnist_convnet_forward.1} parent=11 // pred_check_branch
          %336 = sbr.rel (%p334) target = $region24
        $region23: #{mnist_convnet_forward.1} parent=11 // pred_region
          _
        $region24: #{mnist_convnet_forward.1} parent=11 // pred_fallthru
          _
        // Predicated region
        $region25: #{mnist_convnet_forward.1} parent=11 // pred_check
          %p337 = pneg %p135
        $region26: #{mnist_convnet_forward.1} parent=11 // pred_check_branch
          %339 = sbr.rel (%p337) target = $region28
        $region27: #{mnist_convnet_forward.1} parent=11 // pred_region
          _
        $region28: #{mnist_convnet_forward.1} parent=11 // pred_fallthru
          _
        // Predicated region
        $region29: #{mnist_convnet_forward.1} parent=11 // pred_check
          %p340 = pneg %p156
        $region30: #{mnist_convnet_forward.1} parent=11 // pred_check_branch
          %342 = sbr.rel (%p340) target = $region32
        $region31: #{mnist_convnet_forward.1} parent=11 // pred_region
          _
        $region32: #{mnist_convnet_forward.1} parent=11 // pred_fallthru
          _
        // Predicated region
        $region33: #{mnist_convnet_forward.1} parent=11 // pred_check
          %p343 = pneg %p177
        $region34: #{mnist_convnet_forward.1} parent=11 // pred_check_branch
          %345 = sbr.rel (%p343) target = $region36
        $region35: #{mnist_convnet_forward.1} parent=11 // pred_region
          _
        $region36: #{mnist_convnet_forward.1} parent=11 // pred_fallthru
          _
        // Predicated region
        $region37: #{mnist_convnet_forward.1} parent=11 // pred_check
          %p346 = pneg %p198
        $region38: #{mnist_convnet_forward.1} parent=11 // pred_check_branch
          %348 = sbr.rel (%p346) target = $region40
        $region39: #{mnist_convnet_forward.1} parent=11 // pred_region
          _
        $region40: #{mnist_convnet_forward.1} parent=11 // pred_fallthru
          _
        // Predicated region
        $region41: #{mnist_convnet_forward.1} parent=11 // pred_check
          %p349 = pneg %p219
        $region42: #{mnist_convnet_forward.1} parent=11 // pred_check_branch
          %351 = sbr.rel (%p349) target = $region44
        $region43: #{mnist_convnet_forward.1} parent=11 // pred_region
          _
        $region44: #{mnist_convnet_forward.1} parent=11 // pred_fallthru
          _
        // Predicated region
        $region45: #{mnist_convnet_forward.1} parent=11 // pred_check
          %p352 = pneg %p240
        $region46: #{mnist_convnet_forward.1} parent=11 // pred_check_branch
          %354 = sbr.rel (%p352) target = $region48
        $region47: #{mnist_convnet_forward.1} parent=11 // pred_region
          _
        $region48: #{mnist_convnet_forward.1} parent=11 // pred_fallthru
          _
        // Predicated region
        $region49: #{mnist_convnet_forward.1} parent=11 // pred_check
          %p355 = pneg %p261
        $region50: #{mnist_convnet_forward.1} parent=11 // pred_check_branch
          %357 = sbr.rel (%p355) target = $region52
        $region51: #{mnist_convnet_forward.1} parent=11 // pred_region
          _
        $region52: #{mnist_convnet_forward.1} parent=11 // pred_fallthru
          _
      $region12: #{mnist_convnet_forward.1} parent=5 // pred_fallthru
        _
      %p358 = scmp.lt.s32.totalorder %s25, 2
      // Predicated region
      $region53: #{mnist_convnet_forward.1} parent=5 // pred_check
        %p359 = pneg %p358
      $region54: #{mnist_convnet_forward.1} parent=5 // pred_check_branch
        %361 = sbr.rel (%p359) target = $region56
      $region55: #{mnist_convnet_forward.1} parent=5 // pred_region
        // Predicated region
        $region57: #{mnist_convnet_forward.1} parent=55 // pred_check
          %p362 = pneg %p45
        $region58: #{mnist_convnet_forward.1} parent=55 // pred_check_branch
          %364 = sbr.rel (%p362) target = $region60
        $region59: #{mnist_convnet_forward.1} parent=55 // pred_region
          %p365 = scmp.lt.s32.totalorder %s25, 1
          %s366 = scalar_select %p365, %s25, 1
          %s367 = smul.addr %s366, 8
          %s368 = scalar_lea.vmem %s0, %s367
        $region60: #{mnist_convnet_forward.1} parent=55 // pred_fallthru
          _
      $region56: #{mnist_convnet_forward.1} parent=5 // pred_fallthru
        _
      %p369 = scmp.le.s32.totalorder 1, %s25
      %p370 = scmp.lt.s32.totalorder %s25, 3
      %p371 = pnand %p369, %p370
      %p372 = pneg %p371
      // Predicated region
      $region61: #{mnist_convnet_forward.1} parent=5 // pred_check
        _
      $region62: #{mnist_convnet_forward.1} parent=5 // pred_check_branch
        %374 = sbr.rel (%p371) target = $region64
      $region63: #{mnist_convnet_forward.1} parent=5 // pred_region
        %s375 = ssub.s32 %s25, 1
        %p376 = scmp.lt.s32.totalorder %s30, 1
        %s377 = scalar_select %p376, %s30, 1
        %s378 = smul.addr %s377, 8
        %s379 = scalar_lea.vmem %s0, %s378
        %p380 = pneg %p51
        %p381 = pneg %p48
        %p382 = pneg %p72
        %p383 = pneg %p69
        %p384 = pneg %p93
        %p385 = pneg %p90
        %p386 = pneg %p114
        %p387 = pneg %p111
        %p388 = pneg %p135
        %p389 = pneg %p132
        %p390 = pneg %p156
        %p391 = pneg %p153
        %p392 = pneg %p177
        %p393 = pneg %p174
        %p394 = pneg %p198
        %p395 = pneg %p195
        %p396 = pneg %p219
        %p397 = pneg %p216
        %p398 = pneg %p240
        %p399 = pneg %p237
        %p400 = pneg %p261
        %p401 = pneg %p258
        %p402 = pneg %p287
        %p403 = pneg %p284
        %s404 = sand.u32 %s274, 1
        %s405 = scalar_lea.sflag [#allocation3], %s404
        %s406 = sand.u32 %s274, 1
        %s407 = scalar_lea.vmem [#allocation2], %s406
        %p408 = pneg %p313
        %p409 = pneg %p310
        %s410 = sand.u32 %s300, 1
        %s411 = scalar_lea.sflag [#allocation5], %s410
        %s412 = sand.u32 %s300, 1
        %s413 = scalar_lea.vmem [#allocation4], %s412
        %p414 = scmp.lt.s32.totalorder %s30, 1
        %s415 = scalar_select %p414, %s30, 1
        %s416 = smul.addr %s415, 8
        %s417 = scalar_lea.vmem %s0, %s416
        %v418 = vld [vmem:[%s417] sm:$0xff]
        %v420 = vlaneseq
        %v421 = vshrl.u32 %v420, 7
        %v422 = vsub.s32 0, %v421
        %v423 = vrot.slane %v418, %v422
        %v424 = vlaneseq
        %v425 = vshrl.u32 %v424, 7
        %v426 = vsub.s32 1, %v425
        %v427 = vrot.slane %v418, %v426
        %v428 = vlaneseq
        %v429 = vshrl.u32 %v428, 7
        %v430 = vsub.s32 2, %v429
        %v431 = vrot.slane %v418, %v430
        %v432 = vlaneseq
        %v433 = vshrl.u32 %v432, 7
        %v434 = vsub.s32 3, %v433
        %v435 = vrot.slane %v418, %v434
        %v436 = vlaneseq
        %v437 = vshrl.u32 %v436, 7
        %v438 = vsub.s32 4, %v437
        %v439 = vrot.slane %v418, %v438
        %v440 = vlaneseq
        %v441 = vshrl.u32 %v440, 7
        %v442 = vsub.s32 5, %v441
        %v443 = vrot.slane %v418, %v442
        %v444 = vlaneseq
        %v445 = vshrl.u32 %v444, 7
        %v446 = vsub.s32 6, %v445
        %v447 = vrot.slane %v418, %v446
        %455 = vrot.lane.b32.xlu0 %v423, 127
        %v456 = vpop.permute.xlu0 %455
        %457 = vrot.lane.b32.xlu0 %v427, 127
        %v458 = vpop.permute.xlu0 %457
        %459 = vrot.lane.b32.xlu0 %v431, 127
        %v460 = vpop.permute.xlu0 %459
        %461 = vrot.lane.b32.xlu0 %v435, 127
        %v462 = vpop.permute.xlu0 %461
        %463 = vrot.lane.b32.xlu0 %v439, 127
        %v464 = vpop.permute.xlu0 %463
        %465 = vrot.lane.b32.xlu0 %v443, 127
        %v466 = vpop.permute.xlu0 %465
        %467 = vrot.lane.b32.xlu0 %v447, 127
        %v468 = vpop.permute.xlu0 %467
        %vm469 = vcmask 1039360
        %v470 = vsel %vm469, %v456, %v458
        %v471 = vsel %vm469, %v458, %v460
        %v472 = vsel %vm469, %v460, %v462
        %v473 = vsel %vm469, %v462, %v464
        %v474 = vsel %vm469, %v464, %v466
        %v475 = vsel %vm469, %v466, %v468
        %483 = vrot.lane.b32.xlu0 %v423, 126
        %v484 = vpop.permute.xlu0 %483
        %485 = vrot.lane.b32.xlu0 %v427, 126
        %v486 = vpop.permute.xlu0 %485
        %487 = vrot.lane.b32.xlu0 %v431, 126
        %v488 = vpop.permute.xlu0 %487
        %489 = vrot.lane.b32.xlu0 %v435, 126
        %v490 = vpop.permute.xlu0 %489
        %491 = vrot.lane.b32.xlu0 %v439, 126
        %v492 = vpop.permute.xlu0 %491
        %493 = vrot.lane.b32.xlu0 %v443, 126
        %v494 = vpop.permute.xlu0 %493
        %495 = vrot.lane.b32.xlu0 %v447, 126
        %v496 = vpop.permute.xlu0 %495
        %vm497 = vcmask 1031168
        %v498 = vsel %vm497, %v484, %v486
        %v499 = vsel %vm497, %v486, %v488
        %v500 = vsel %vm497, %v488, %v490
        %v501 = vsel %vm497, %v490, %v492
        %v502 = vsel %vm497, %v492, %v494
        %v503 = vsel %vm497, %v494, %v496
        %511 = vrot.lane.b32.xlu0 %v423, 125
        %v512 = vpop.permute.xlu0 %511
        %513 = vrot.lane.b32.xlu0 %v427, 125
        %v514 = vpop.permute.xlu0 %513
        %515 = vrot.lane.b32.xlu0 %v431, 125
        %v516 = vpop.permute.xlu0 %515
        %517 = vrot.lane.b32.xlu0 %v435, 125
        %v518 = vpop.permute.xlu0 %517
        %519 = vrot.lane.b32.xlu0 %v439, 125
        %v520 = vpop.permute.xlu0 %519
        %521 = vrot.lane.b32.xlu0 %v443, 125
        %v522 = vpop.permute.xlu0 %521
        %523 = vrot.lane.b32.xlu0 %v447, 125
        %v524 = vpop.permute.xlu0 %523
        %vm525 = vcmask 1022976
        %v526 = vsel %vm525, %v512, %v514
        %v527 = vsel %vm525, %v514, %v516
        %v528 = vsel %vm525, %v516, %v518
        %v529 = vsel %vm525, %v518, %v520
        %v530 = vsel %vm525, %v520, %v522
        %v531 = vsel %vm525, %v522, %v524
        %539 = vrot.lane.b32.xlu0 %v423, 124
        %v540 = vpop.permute.xlu0 %539
        %541 = vrot.lane.b32.xlu0 %v427, 124
        %v542 = vpop.permute.xlu0 %541
        %543 = vrot.lane.b32.xlu0 %v431, 124
        %v544 = vpop.permute.xlu0 %543
        %545 = vrot.lane.b32.xlu0 %v435, 124
        %v546 = vpop.permute.xlu0 %545
        %547 = vrot.lane.b32.xlu0 %v439, 124
        %v548 = vpop.permute.xlu0 %547
        %549 = vrot.lane.b32.xlu0 %v443, 124
        %v550 = vpop.permute.xlu0 %549
        %551 = vrot.lane.b32.xlu0 %v447, 124
        %v552 = vpop.permute.xlu0 %551
        %vm553 = vcmask 1014784
        %v554 = vsel %vm553, %v540, %v542
        %v555 = vsel %vm553, %v542, %v544
        %v556 = vsel %vm553, %v544, %v546
        %v557 = vsel %vm553, %v546, %v548
        %v558 = vsel %vm553, %v548, %v550
        %v559 = vsel %vm553, %v550, %v552
        %567 = vrot.lane.b32.xlu0 %v423, 100
        %v568 = vpop.permute.xlu0 %567
        %569 = vrot.lane.b32.xlu0 %v427, 100
        %v570 = vpop.permute.xlu0 %569
        %571 = vrot.lane.b32.xlu0 %v431, 100
        %v572 = vpop.permute.xlu0 %571
        %573 = vrot.lane.b32.xlu0 %v435, 100
        %v574 = vpop.permute.xlu0 %573
        %575 = vrot.lane.b32.xlu0 %v439, 100
        %v576 = vpop.permute.xlu0 %575
        %577 = vrot.lane.b32.xlu0 %v443, 100
        %v578 = vpop.permute.xlu0 %577
        %579 = vrot.lane.b32.xlu0 %v447, 100
        %v580 = vpop.permute.xlu0 %579
        %vm581 = vcmask 818176
        %v582 = vsel %vm581, %v568, %v570
        %v583 = vsel %vm581, %v570, %v572
        %v584 = vsel %vm581, %v572, %v574
        %v585 = vsel %vm581, %v574, %v576
        %v586 = vsel %vm581, %v576, %v578
        %v587 = vsel %vm581, %v578, %v580
        %595 = vrot.lane.b32.xlu0 %v423, 99
        %v596 = vpop.permute.xlu0 %595
        %597 = vrot.lane.b32.xlu0 %v427, 99
        %v598 = vpop.permute.xlu0 %597
        %599 = vrot.lane.b32.xlu0 %v431, 99
        %v600 = vpop.permute.xlu0 %599
        %601 = vrot.lane.b32.xlu0 %v435, 99
        %v602 = vpop.permute.xlu0 %601
        %603 = vrot.lane.b32.xlu0 %v439, 99
        %v604 = vpop.permute.xlu0 %603
        %605 = vrot.lane.b32.xlu0 %v443, 99
        %v606 = vpop.permute.xlu0 %605
        %607 = vrot.lane.b32.xlu0 %v447, 99
        %v608 = vpop.permute.xlu0 %607
        %vm609 = vcmask 809984
        %v610 = vsel %vm609, %v596, %v598
        %v611 = vsel %vm609, %v598, %v600
        %v612 = vsel %vm609, %v600, %v602
        %v613 = vsel %vm609, %v602, %v604
        %v614 = vsel %vm609, %v604, %v606
        %v615 = vsel %vm609, %v606, %v608
        %623 = vrot.lane.b32.xlu0 %v423, 98
        %v624 = vpop.permute.xlu0 %623
        %625 = vrot.lane.b32.xlu0 %v427, 98
        %v626 = vpop.permute.xlu0 %625
        %627 = vrot.lane.b32.xlu0 %v431, 98
        %v628 = vpop.permute.xlu0 %627
        %629 = vrot.lane.b32.xlu0 %v435, 98
        %v630 = vpop.permute.xlu0 %629
        %631 = vrot.lane.b32.xlu0 %v439, 98
        %v632 = vpop.permute.xlu0 %631
        %633 = vrot.lane.b32.xlu0 %v443, 98
        %v634 = vpop.permute.xlu0 %633
        %635 = vrot.lane.b32.xlu0 %v447, 98
        %v636 = vpop.permute.xlu0 %635
        %vm637 = vcmask 801792
        %v638 = vsel %vm637, %v624, %v626
        %v639 = vsel %vm637, %v626, %v628
        %v640 = vsel %vm637, %v628, %v630
        %v641 = vsel %vm637, %v630, %v632
        %v642 = vsel %vm637, %v632, %v634
        %v643 = vsel %vm637, %v634, %v636
        %651 = vrot.lane.b32.xlu0 %v423, 97
        %v652 = vpop.permute.xlu0 %651
        %653 = vrot.lane.b32.xlu0 %v427, 97
        %v654 = vpop.permute.xlu0 %653
        %655 = vrot.lane.b32.xlu0 %v431, 97
        %v656 = vpop.permute.xlu0 %655
        %657 = vrot.lane.b32.xlu0 %v435, 97
        %v658 = vpop.permute.xlu0 %657
        %659 = vrot.lane.b32.xlu0 %v439, 97
        %v660 = vpop.permute.xlu0 %659
        %661 = vrot.lane.b32.xlu0 %v443, 97
        %v662 = vpop.permute.xlu0 %661
        %663 = vrot.lane.b32.xlu0 %v447, 97
        %v664 = vpop.permute.xlu0 %663
        %vm665 = vcmask 793600
        %v666 = vsel %vm665, %v652, %v654
        %v667 = vsel %vm665, %v654, %v656
        %v668 = vsel %vm665, %v656, %v658
        %v669 = vsel %vm665, %v658, %v660
        %v670 = vsel %vm665, %v660, %v662
        %v671 = vsel %vm665, %v662, %v664
        %679 = vrot.lane.b32.xlu0 %v423, 96
        %v680 = vpop.permute.xlu0 %679
        %681 = vrot.lane.b32.xlu0 %v427, 96
        %v682 = vpop.permute.xlu0 %681
        %683 = vrot.lane.b32.xlu0 %v431, 96
        %v684 = vpop.permute.xlu0 %683
        %685 = vrot.lane.b32.xlu0 %v435, 96
        %v686 = vpop.permute.xlu0 %685
        %687 = vrot.lane.b32.xlu0 %v439, 96
        %v688 = vpop.permute.xlu0 %687
        %689 = vrot.lane.b32.xlu0 %v443, 96
        %v690 = vpop.permute.xlu0 %689
        %691 = vrot.lane.b32.xlu0 %v447, 96
        %v692 = vpop.permute.xlu0 %691
        %vm693 = vcmask 785408
        %v694 = vsel %vm693, %v680, %v682
        %v695 = vsel %vm693, %v682, %v684
        %v696 = vsel %vm693, %v684, %v686
        %v697 = vsel %vm693, %v686, %v688
        %v698 = vsel %vm693, %v688, %v690
        %v699 = vsel %vm693, %v690, %v692
        %707 = vrot.lane.b32.xlu0 %v423, 72
        %v708 = vpop.permute.xlu0 %707
        %709 = vrot.lane.b32.xlu0 %v427, 72
        %v710 = vpop.permute.xlu0 %709
        %711 = vrot.lane.b32.xlu0 %v431, 72
        %v712 = vpop.permute.xlu0 %711
        %713 = vrot.lane.b32.xlu0 %v435, 72
        %v714 = vpop.permute.xlu0 %713
        %715 = vrot.lane.b32.xlu0 %v439, 72
        %v716 = vpop.permute.xlu0 %715
        %717 = vrot.lane.b32.xlu0 %v443, 72
        %v718 = vpop.permute.xlu0 %717
        %719 = vrot.lane.b32.xlu0 %v447, 72
        %v720 = vpop.permute.xlu0 %719
        %vm721 = vcmask 588800
        %v722 = vsel %vm721, %v708, %v710
        %v723 = vsel %vm721, %v710, %v712
        %v724 = vsel %vm721, %v712, %v714
        %v725 = vsel %vm721, %v714, %v716
        %v726 = vsel %vm721, %v716, %v718
        %v727 = vsel %vm721, %v718, %v720
        %735 = vrot.lane.b32.xlu0 %v423, 71
        %v736 = vpop.permute.xlu0 %735
        %737 = vrot.lane.b32.xlu0 %v427, 71
        %v738 = vpop.permute.xlu0 %737
        %739 = vrot.lane.b32.xlu0 %v431, 71
        %v740 = vpop.permute.xlu0 %739
        %741 = vrot.lane.b32.xlu0 %v435, 71
        %v742 = vpop.permute.xlu0 %741
        %743 = vrot.lane.b32.xlu0 %v439, 71
        %v744 = vpop.permute.xlu0 %743
        %745 = vrot.lane.b32.xlu0 %v443, 71
        %v746 = vpop.permute.xlu0 %745
        %747 = vrot.lane.b32.xlu0 %v447, 71
        %v748 = vpop.permute.xlu0 %747
        %vm749 = vcmask 580608
        %v750 = vsel %vm749, %v736, %v738
        %v751 = vsel %vm749, %v738, %v740
        %v752 = vsel %vm749, %v740, %v742
        %v753 = vsel %vm749, %v742, %v744
        %v754 = vsel %vm749, %v744, %v746
        %v755 = vsel %vm749, %v746, %v748
        %763 = vrot.lane.b32.xlu0 %v423, 70
        %v764 = vpop.permute.xlu0 %763
        %765 = vrot.lane.b32.xlu0 %v427, 70
        %v766 = vpop.permute.xlu0 %765
        %767 = vrot.lane.b32.xlu0 %v431, 70
        %v768 = vpop.permute.xlu0 %767
        %769 = vrot.lane.b32.xlu0 %v435, 70
        %v770 = vpop.permute.xlu0 %769
        %771 = vrot.lane.b32.xlu0 %v439, 70
        %v772 = vpop.permute.xlu0 %771
        %773 = vrot.lane.b32.xlu0 %v443, 70
        %v774 = vpop.permute.xlu0 %773
        %775 = vrot.lane.b32.xlu0 %v447, 70
        %v776 = vpop.permute.xlu0 %775
        %vm777 = vcmask 572416
        %v778 = vsel %vm777, %v764, %v766
        %v779 = vsel %vm777, %v766, %v768
        %v780 = vsel %vm777, %v768, %v770
        %v781 = vsel %vm777, %v770, %v772
        %v782 = vsel %vm777, %v772, %v774
        %v783 = vsel %vm777, %v774, %v776
        %791 = vrot.lane.b32.xlu0 %v423, 69
        %v792 = vpop.permute.xlu0 %791
        %793 = vrot.lane.b32.xlu0 %v427, 69
        %v794 = vpop.permute.xlu0 %793
        %795 = vrot.lane.b32.xlu0 %v431, 69
        %v796 = vpop.permute.xlu0 %795
        %797 = vrot.lane.b32.xlu0 %v435, 69
        %v798 = vpop.permute.xlu0 %797
        %799 = vrot.lane.b32.xlu0 %v439, 69
        %v800 = vpop.permute.xlu0 %799
        %801 = vrot.lane.b32.xlu0 %v443, 69
        %v802 = vpop.permute.xlu0 %801
        %803 = vrot.lane.b32.xlu0 %v447, 69
        %v804 = vpop.permute.xlu0 %803
        %vm805 = vcmask 564224
        %v806 = vsel %vm805, %v792, %v794
        %v807 = vsel %vm805, %v794, %v796
        %v808 = vsel %vm805, %v796, %v798
        %v809 = vsel %vm805, %v798, %v800
        %v810 = vsel %vm805, %v800, %v802
        %v811 = vsel %vm805, %v802, %v804
        %819 = vrot.lane.b32.xlu0 %v423, 68
        %v820 = vpop.permute.xlu0 %819
        %821 = vrot.lane.b32.xlu0 %v427, 68
        %v822 = vpop.permute.xlu0 %821
        %823 = vrot.lane.b32.xlu0 %v431, 68
        %v824 = vpop.permute.xlu0 %823
        %825 = vrot.lane.b32.xlu0 %v435, 68
        %v826 = vpop.permute.xlu0 %825
        %827 = vrot.lane.b32.xlu0 %v439, 68
        %v828 = vpop.permute.xlu0 %827
        %829 = vrot.lane.b32.xlu0 %v443, 68
        %v830 = vpop.permute.xlu0 %829
        %831 = vrot.lane.b32.xlu0 %v447, 68
        %v832 = vpop.permute.xlu0 %831
        %vm833 = vcmask 556032
        %v834 = vsel %vm833, %v820, %v822
        %v835 = vsel %vm833, %v822, %v824
        %v836 = vsel %vm833, %v824, %v826
        %v837 = vsel %vm833, %v826, %v828
        %v838 = vsel %vm833, %v828, %v830
        %v839 = vsel %vm833, %v830, %v832
        %847 = vrot.lane.b32.xlu0 %v423, 44
        %v848 = vpop.permute.xlu0 %847
        %849 = vrot.lane.b32.xlu0 %v427, 44
        %v850 = vpop.permute.xlu0 %849
        %851 = vrot.lane.b32.xlu0 %v431, 44
        %v852 = vpop.permute.xlu0 %851
        %853 = vrot.lane.b32.xlu0 %v435, 44
        %v854 = vpop.permute.xlu0 %853
        %855 = vrot.lane.b32.xlu0 %v439, 44
        %v856 = vpop.permute.xlu0 %855
        %857 = vrot.lane.b32.xlu0 %v443, 44
        %v858 = vpop.permute.xlu0 %857
        %859 = vrot.lane.b32.xlu0 %v447, 44
        %v860 = vpop.permute.xlu0 %859
        %vm861 = vcmask 359424
        %v862 = vsel %vm861, %v848, %v850
        %v863 = vsel %vm861, %v850, %v852
        %v864 = vsel %vm861, %v852, %v854
        %v865 = vsel %vm861, %v854, %v856
        %v866 = vsel %vm861, %v856, %v858
        %v867 = vsel %vm861, %v858, %v860
        %vm875 = vcmask 1040384
        %v876 = vsel %vm875, %v423, %v470
        %v877 = vsel %vm875, %v427, %v471
        %v878 = vsel %vm875, %v431, %v472
        %v879 = vsel %vm875, %v435, %v473
        %v880 = vsel %vm875, %v439, %v474
        %v881 = vsel %vm875, %v443, %v475
        %v882 = vsel %vm875, %v447, %v468
        %vm883 = vcmask 1041408
        %v884 = vsel %vm883, %v876, %v498
        %v885 = vsel %vm883, %v877, %v499
        %v886 = vsel %vm883, %v878, %v500
        %v887 = vsel %vm883, %v879, %v501
        %v888 = vsel %vm883, %v880, %v502
        %v889 = vsel %vm883, %v881, %v503
        %v890 = vsel %vm883, %v882, %v496
        %vm891 = vcmask 1042432
        %v892 = vsel %vm891, %v884, %v526
        %v893 = vsel %vm891, %v885, %v527
        %v894 = vsel %vm891, %v886, %v528
        %v895 = vsel %vm891, %v887, %v529
        %v896 = vsel %vm891, %v888, %v530
        %v897 = vsel %vm891, %v889, %v531
        %v898 = vsel %vm891, %v890, %v524
        %vm899 = vcmask 1043456
        %v900 = vsel %vm899, %v892, %v554
        %v901 = vsel %vm899, %v893, %v555
        %v902 = vsel %vm899, %v894, %v556
        %v903 = vsel %vm899, %v895, %v557
        %v904 = vsel %vm899, %v896, %v558
        %v905 = vsel %vm899, %v897, %v559
        %v906 = vsel %vm899, %v898, %v552
        %vm907 = vcmask 1044480
        %v908 = vsel %vm907, %v900, %v582
        %v909 = vsel %vm907, %v901, %v583
        %v910 = vsel %vm907, %v902, %v584
        %v911 = vsel %vm907, %v903, %v585
        %v912 = vsel %vm907, %v904, %v586
        %v913 = vsel %vm907, %v905, %v587
        %v914 = vsel %vm907, %v906, %v580
        %vm915 = vcmask 1045504
        %v916 = vsel %vm915, %v908, %v610
        %v917 = vsel %vm915, %v909, %v611
        %v918 = vsel %vm915, %v910, %v612
        %v919 = vsel %vm915, %v911, %v613
        %v920 = vsel %vm915, %v912, %v614
        %v921 = vsel %vm915, %v913, %v615
        %v922 = vsel %vm915, %v914, %v608
        %vm923 = vcmask 1046528
        %v924 = vsel %vm923, %v916, %v638
        %v925 = vsel %vm923, %v917, %v639
        %v926 = vsel %vm923, %v918, %v640
        %v927 = vsel %vm923, %v919, %v641
        %v928 = vsel %vm923, %v920, %v642
        %v929 = vsel %vm923, %v921, %v643
        %v930 = vsel %vm923, %v922, %v636
        %v931 = vsel %vm875, %v666, %v694
        %v932 = vsel %vm875, %v667, %v695
        %v933 = vsel %vm875, %v668, %v696
        %v934 = vsel %vm875, %v669, %v697
        %v935 = vsel %vm875, %v670, %v698
        %v936 = vsel %vm875, %v671, %v699
        %v937 = vsel %vm875, %v664, %v692
        %v938 = vsel %vm883, %v931, %v722
        %v939 = vsel %vm883, %v932, %v723
        %v940 = vsel %vm883, %v933, %v724
        %v941 = vsel %vm883, %v934, %v725
        %v942 = vsel %vm883, %v935, %v726
        %v943 = vsel %vm883, %v936, %v727
        %v944 = vsel %vm883, %v937, %v720
        %v945 = vsel %vm891, %v938, %v750
        %v946 = vsel %vm891, %v939, %v751
        %v947 = vsel %vm891, %v940, %v752
        %v948 = vsel %vm891, %v941, %v753
        %v949 = vsel %vm891, %v942, %v754
        %v950 = vsel %vm891, %v943, %v755
        %v951 = vsel %vm891, %v944, %v748
        %v952 = vsel %vm899, %v945, %v778
        %v953 = vsel %vm899, %v946, %v779
        %v954 = vsel %vm899, %v947, %v780
        %v955 = vsel %vm899, %v948, %v781
        %v956 = vsel %vm899, %v949, %v782
        %v957 = vsel %vm899, %v950, %v783
        %v958 = vsel %vm899, %v951, %v776
        %v959 = vsel %vm907, %v952, %v806
        %v960 = vsel %vm907, %v953, %v807
        %v961 = vsel %vm907, %v954, %v808
        %v962 = vsel %vm907, %v955, %v809
        %v963 = vsel %vm907, %v956, %v810
        %v964 = vsel %vm907, %v957, %v811
        %v965 = vsel %vm907, %v958, %v804
        %v966 = vsel %vm915, %v959, %v834
        %v967 = vsel %vm915, %v960, %v835
        %v968 = vsel %vm915, %v961, %v836
        %v969 = vsel %vm915, %v962, %v837
        %v970 = vsel %vm915, %v963, %v838
        %v971 = vsel %vm915, %v964, %v839
        %v972 = vsel %vm915, %v965, %v832
        %v973 = vsel %vm923, %v966, %v862
        %v974 = vsel %vm923, %v967, %v863
        %v975 = vsel %vm923, %v968, %v864
        %v976 = vsel %vm923, %v969, %v865
        %v977 = vsel %vm923, %v970, %v866
        %v978 = vsel %vm923, %v971, %v867
        %v979 = vsel %vm923, %v972, %v860
        %980 = vrot.lane.b32.xlu0 %v423, 101
        %v981 = vpop.permute.xlu0 %980
        %982 = vrot.lane.b32.xlu0 %v427, 101
        %v983 = vpop.permute.xlu0 %982
        %984 = vrot.lane.b32.xlu0 %v431, 101
        %v985 = vpop.permute.xlu0 %984
        %986 = vrot.lane.b32.xlu0 %v435, 101
        %v987 = vpop.permute.xlu0 %986
        %988 = vrot.lane.b32.xlu0 %v439, 101
        %v989 = vpop.permute.xlu0 %988
        %990 = vrot.lane.b32.xlu0 %v443, 101
        %v991 = vpop.permute.xlu0 %990
        %992 = vrot.lane.b32.xlu0 %v447, 101
        %v993 = vpop.permute.xlu0 %992
        %vm994 = vcmask 826368
        %v995 = vsel %vm994, %v981, %v983
        %v996 = vsel %vm994, %v983, %v985
        %v997 = vsel %vm994, %v985, %v987
        %v998 = vsel %vm994, %v987, %v989
        %v999 = vsel %vm994, %v989, %v991
        %v1000 = vsel %vm994, %v991, %v993
        %v1008 = vlaneseq
        %v1009 = vshrl.u32 %v1008, 7
        %v1010 = vsub.s32 7, %v1009
        %v1011 = vrot.slane %v418, %v1010
        %1012 = vrot.lane.b32.xlu0 %v1011, 100
        %v1013 = vpop.permute.xlu0 %1012
        %v1014 = vsel %vm581, %v580, %v1013
        %1016 = vrot.lane.b32.xlu0 %v1011, 99
        %v1017 = vpop.permute.xlu0 %1016
        %v1018 = vsel %vm609, %v608, %v1017
        %1020 = vrot.lane.b32.xlu0 %v1011, 98
        %v1021 = vpop.permute.xlu0 %1020
        %v1022 = vsel %vm637, %v636, %v1021
        %1024 = vrot.lane.b32.xlu0 %v1011, 97
        %v1025 = vpop.permute.xlu0 %1024
        %v1026 = vsel %vm665, %v664, %v1025
        %v1027 = vsel %vm899, %v892, %v995
        %v1028 = vsel %vm899, %v893, %v996
        %v1029 = vsel %vm899, %v894, %v997
        %v1030 = vsel %vm899, %v895, %v998
        %v1031 = vsel %vm899, %v896, %v999
        %v1032 = vsel %vm899, %v897, %v1000
        %v1033 = vsel %vm899, %v898, %v993
        %v1034 = vsel %vm907, %v1027, %v582
        %v1035 = vsel %vm907, %v1028, %v583
        %v1036 = vsel %vm907, %v1029, %v584
        %v1037 = vsel %vm907, %v1030, %v585
        %v1038 = vsel %vm907, %v1031, %v586
        %v1039 = vsel %vm907, %v1032, %v587
        %v1040 = vsel %vm907, %v1033, %v1014
        %v1041 = vsel %vm915, %v1034, %v610
        %v1042 = vsel %vm915, %v1035, %v611
        %v1043 = vsel %vm915, %v1036, %v612
        %v1044 = vsel %vm915, %v1037, %v613
        %v1045 = vsel %vm915, %v1038, %v614
        %v1046 = vsel %vm915, %v1039, %v615
        %v1047 = vsel %vm915, %v1040, %v1018
        %v1048 = vsel %vm923, %v1041, %v638
        %v1049 = vsel %vm923, %v1042, %v639
        %v1050 = vsel %vm923, %v1043, %v640
        %v1051 = vsel %vm923, %v1044, %v641
        %v1052 = vsel %vm923, %v1045, %v642
        %v1053 = vsel %vm923, %v1046, %v643
        %v1054 = vsel %vm923, %v1047, %v1022
        %1062 = vrot.lane.b32.xlu0 %v1048, 43
        %v1063 = vpop.permute.xlu0 %1062
        %1064 = vrot.lane.b32.xlu0 %v1049, 43
        %v1065 = vpop.permute.xlu0 %1064
        %1066 = vrot.lane.b32.xlu0 %v1050, 43
        %v1067 = vpop.permute.xlu0 %1066
        %1068 = vrot.lane.b32.xlu0 %v1051, 43
        %v1069 = vpop.permute.xlu0 %1068
        %1070 = vrot.lane.b32.xlu0 %v1052, 43
        %v1071 = vpop.permute.xlu0 %1070
        %1072 = vrot.lane.b32.xlu0 %v1053, 43
        %v1073 = vpop.permute.xlu0 %1072
        %1074 = vrot.lane.b32.xlu0 %v1054, 43
        %v1075 = vpop.permute.xlu0 %1074
        %1076 = vrot.lane.b32.xlu0 %v666, 43
        %v1077 = vpop.permute.xlu0 %1076
        %1078 = vrot.lane.b32.xlu0 %v667, 43
        %v1079 = vpop.permute.xlu0 %1078
        %1080 = vrot.lane.b32.xlu0 %v668, 43
        %v1081 = vpop.permute.xlu0 %1080
        %1082 = vrot.lane.b32.xlu0 %v669, 43
        %v1083 = vpop.permute.xlu0 %1082
        %1084 = vrot.lane.b32.xlu0 %v670, 43
        %v1085 = vpop.permute.xlu0 %1084
        %1086 = vrot.lane.b32.xlu0 %v671, 43
        %v1087 = vpop.permute.xlu0 %1086
        %1088 = vrot.lane.b32.xlu0 %v1026, 43
        %v1089 = vpop.permute.xlu0 %1088
        %vm1090 = vcmask 351232
        %v1091 = vsel %vm1090, %v1063, %v1065
        %v1092 = vsel %vm1090, %v1065, %v1067
        %v1093 = vsel %vm1090, %v1067, %v1069
        %v1094 = vsel %vm1090, %v1069, %v1071
        %v1095 = vsel %vm1090, %v1071, %v1073
        %v1096 = vsel %vm1090, %v1073, %v1075
        %v1097 = vsel %vm1090, %v1077, %v1079
        %v1098 = vsel %vm1090, %v1079, %v1081
        %v1099 = vsel %vm1090, %v1081, %v1083
        %v1100 = vsel %vm1090, %v1083, %v1085
        %v1101 = vsel %vm1090, %v1085, %v1087
        %v1102 = vsel %vm1090, %v1087, %v1089
        %v1110 = vld [vmem:[%s1] sm:$0xff]
        %v1111 = vld [vmem:[%s1 + $0x8] sm:$0x3]
        %v1112 = vld [vmem:[%s2] sm:$0xff]
        %v1113 = vld [vmem:[%s2 + $0x8] sm:$0x3]
        %1115 = vset.pattern.permute.xlu0 0
        %1116 = vperm.xlu0 %1115, %v1112
        %v1117 = vpop.permute.xlu0 %1116
        %1120 = vset.pattern.permute.xlu0 0
        %1121 = vperm.xlu0 %1120, %v1113
        %v1122 = vpop.permute.xlu0 %1121
        %vm1124 = vcmask 203776
        %v1126 = vsel %vm1124, %v1110, 0
        %v1129 = vsel %vm1124, %v1111, 0
        %v1131 = vsel %vm875, %v1097, 0
        %v1133 = vsel %vm875, %v1098, 0
        %v1135 = vsel %vm875, %v1099, 0
        %v1137 = vsel %vm875, %v1100, 0
        %v1139 = vsel %vm875, %v1101, 0
        %v1141 = vsel %vm875, %v1102, 0
        %v1143 = vsel %vm875, %v1089, 0
        %1145 = vmatprep.subr.mxu0 %v925
        %1146 = vmatpush1.msra.mxu0 %v924
        %1147 = vmatprep.subr.mxu0 %v974
        %1148 = vmatpush1.msra.mxu0 %v973
        %1149 = vmatprep.subr.mxu0 %v1092
        %1150 = vmatpush1.msra.mxu0 %v1091
        %1151 = vmatprep.subr.mxu0 %v1133
        %1152 = vmatpush1.msra.mxu0 %v1131
        %1153 = vmatprep.subr.mxu0 0.0
        %1154 = vmatpush1.msra.mxu0 0.0
        %1155 = vmatprep.subr.mxu0 0.0
        %1156 = vmatpush1.msra.mxu0 0.0
        %1157 = vmatprep.subr.mxu0 0.0
        %1158 = vmatpush1.msra.mxu0 0.0
        %1159 = vmatprep.subr.mxu0 0.0
        %1160 = vmatpush1.msra.mxu0 0.0
        %1161 = vmatprep.subr.mxu0 0.0
        %1162 = vmatpush1.msra.mxu0 0.0
        %1163 = vmatprep.subr.mxu0 0.0
        %1164 = vmatpush1.msra.mxu0 0.0
        %1165 = vmatprep.subr.mxu0 0.0
        %1166 = vmatpush1.msra.mxu0 0.0
        %1167 = vmatprep.subr.mxu0 0.0
        %1168 = vmatpush1.msra.mxu0 0.0
        %1169 = vmatprep.subr.mxu0 0.0
        %1170 = vmatpush1.msra.mxu0 0.0
        %1171 = vmatprep.subr.mxu0 0.0
        %1172 = vmatpush1.msra.mxu0 0.0
        %1173 = vmatprep.subr.mxu0 0.0
        %1174 = vmatpush1.msra.mxu0 0.0
        %1175 = vmatprep.subr.mxu0 0.0
        %1176 = vmatpush1.msra.mxu0 0.0
        %1177 = vmatprep.subr.mxu0 0.0
        %1178 = vmatpush1.msra.mxu0 0.0
        %1179 = vmatprep.subr.mxu0 0.0
        %1180 = vmatpush1.msra.mxu0 0.0
        %1181 = vmatprep.subr.mxu0 0.0
        %1182 = vmatpush1.msra.mxu0 0.0
        %1183 = vmatprep.subr.mxu0 0.0
        %1184 = vmatpush1.msra.mxu0 0.0
        %1185 = vmatprep.subr.mxu0 0.0
        %1186 = vmatpush1.msra.mxu0 0.0
        %1187 = vmatprep.subr.mxu0 0.0
        %1188 = vmatpush1.msra.mxu0 0.0
        %1189 = vmatprep.subr.mxu0 0.0
        %1190 = vmatpush1.msra.mxu0 0.0
        %1191 = vmatprep.subr.mxu0 0.0
        %1192 = vmatpush1.msra.mxu0 0.0
        %1193 = vmatprep.subr.mxu0 0.0
        %1194 = vmatpush1.msra.mxu0 0.0
        %1195 = vmatprep.subr.mxu0 0.0
        %1196 = vmatpush1.msra.mxu0 0.0
        %1197 = vmatprep.subr.mxu0 0.0
        %1198 = vmatpush1.msra.mxu0 0.0
        %1199 = vmatprep.subr.mxu0 0.0
        %1200 = vmatpush1.msra.mxu0 0.0
        %1201 = vmatprep.subr.mxu0 0.0
        %1202 = vmatpush1.msra.mxu0 0.0
        %1203 = vmatprep.subr.mxu0 0.0
        %1204 = vmatpush1.msra.mxu0 0.0
        %1205 = vmatprep.subr.mxu0 0.0
        %1206 = vmatpush1.msra.mxu0 0.0
        %1207 = vmatprep.subr.mxu0 0.0
        %1208 = vmatpush1.msra.mxu0 0.0
        %1209 = vmatprep.mubr.f32.mxu0 0.0
        %1210 = vmatmul.mubr.f32.gmra.mrb[0].mxu0 %v1126
        %v1211 = vpop.f32.mrb[0].mxu0
        %v1212 = vadd.f32 %v1117, %v1211
        %v1213 = vpop.f32.mrb[0].mxu0
        %v1214 = vadd.f32 %v1117, %v1213
        %1215 = vmatprep.mubr.f32.mxu0 0.0
        %1216 = vmatmul.mubr.f32.gmra.mrb[0].mxu0 %v1129
        %v1217 = vpop.f32.mrb[0].mxu0
        %v1218 = vadd.f32 %v1122, %v1217
        %v1219 = vpop.f32.mrb[0].mxu0
        %v1220 = vadd.f32 %v1122, %v1219
        %1221 = vdwg.mxu0
        %1222 = vmatprep.subr.mxu0 %v927
        %1223 = vmatpush1.msra.mxu0 %v926
        %1224 = vmatprep.subr.mxu0 %v976
        %1225 = vmatpush1.msra.mxu0 %v975
        %1226 = vmatprep.subr.mxu0 %v1094
        %1227 = vmatpush1.msra.mxu0 %v1093
        %1228 = vmatprep.subr.mxu0 %v1137
        %1229 = vmatpush1.msra.mxu0 %v1135
        %1230 = vmatprep.subr.mxu0 0.0
        %1231 = vmatpush1.msra.mxu0 0.0
        %1232 = vmatprep.subr.mxu0 0.0
        %1233 = vmatpush1.msra.mxu0 0.0
        %1234 = vmatprep.subr.mxu0 0.0
        %1235 = vmatpush1.msra.mxu0 0.0
        %1236 = vmatprep.subr.mxu0 0.0
        %1237 = vmatpush1.msra.mxu0 0.0
        %1238 = vmatprep.subr.mxu0 0.0
        %1239 = vmatpush1.msra.mxu0 0.0
        %1240 = vmatprep.subr.mxu0 0.0
        %1241 = vmatpush1.msra.mxu0 0.0
        %1242 = vmatprep.subr.mxu0 0.0
        %1243 = vmatpush1.msra.mxu0 0.0
        %1244 = vmatprep.subr.mxu0 0.0
        %1245 = vmatpush1.msra.mxu0 0.0
        %1246 = vmatprep.subr.mxu0 0.0
        %1247 = vmatpush1.msra.mxu0 0.0
        %1248 = vmatprep.subr.mxu0 0.0
        %1249 = vmatpush1.msra.mxu0 0.0
        %1250 = vmatprep.subr.mxu0 0.0
        %1251 = vmatpush1.msra.mxu0 0.0
        %1252 = vmatprep.subr.mxu0 0.0
        %1253 = vmatpush1.msra.mxu0 0.0
        %1254 = vmatprep.subr.mxu0 0.0
        %1255 = vmatpush1.msra.mxu0 0.0
        %1256 = vmatprep.subr.mxu0 0.0
        %1257 = vmatpush1.msra.mxu0 0.0
        %1258 = vmatprep.subr.mxu0 0.0
        %1259 = vmatpush1.msra.mxu0 0.0
        %1260 = vmatprep.subr.mxu0 0.0
        %1261 = vmatpush1.msra.mxu0 0.0
        %1262 = vmatprep.subr.mxu0 0.0
        %1263 = vmatpush1.msra.mxu0 0.0
        %1264 = vmatprep.subr.mxu0 0.0
        %1265 = vmatpush1.msra.mxu0 0.0
        %1266 = vmatprep.subr.mxu0 0.0
        %1267 = vmatpush1.msra.mxu0 0.0
        %1268 = vmatprep.subr.mxu0 0.0
        %1269 = vmatpush1.msra.mxu0 0.0
        %1270 = vmatprep.subr.mxu0 0.0
        %1271 = vmatpush1.msra.mxu0 0.0
        %1272 = vmatprep.subr.mxu0 0.0
        %1273 = vmatpush1.msra.mxu0 0.0
        %1274 = vmatprep.subr.mxu0 0.0
        %1275 = vmatpush1.msra.mxu0 0.0
        %1276 = vmatprep.subr.mxu0 0.0
        %1277 = vmatpush1.msra.mxu0 0.0
        %1278 = vmatprep.subr.mxu0 0.0
        %1279 = vmatpush1.msra.mxu0 0.0
        %1280 = vmatprep.subr.mxu0 0.0
        %1281 = vmatpush1.msra.mxu0 0.0
        %1282 = vmatprep.subr.mxu0 0.0
        %1283 = vmatpush1.msra.mxu0 0.0
        %1284 = vmatprep.subr.mxu0 0.0
        %1285 = vmatpush1.msra.mxu0 0.0
        %1286 = vmatprep.mubr.f32.mxu0 0.0
        %1287 = vmatmul.mubr.f32.gmra.mrb[0].mxu0 %v1126
        %v1288 = vpop.f32.mrb[0].mxu0
        %v1289 = vadd.f32 %v1117, %v1288
        %v1290 = vpop.f32.mrb[0].mxu0
        %v1291 = vadd.f32 %v1117, %v1290
        %1292 = vmatprep.mubr.f32.mxu0 0.0
        %1293 = vmatmul.mubr.f32.gmra.mrb[0].mxu0 %v1129
        %v1294 = vpop.f32.mrb[0].mxu0
        %v1295 = vadd.f32 %v1122, %v1294
        %v1296 = vpop.f32.mrb[0].mxu0
        %v1297 = vadd.f32 %v1122, %v1296
        %1298 = vdwg.mxu0
        %1299 = vmatprep.subr.mxu0 %v929
        %1300 = vmatpush1.msra.mxu0 %v928
        %1301 = vmatprep.subr.mxu0 %v978
        %1302 = vmatpush1.msra.mxu0 %v977
        %1303 = vmatprep.subr.mxu0 %v1096
        %1304 = vmatpush1.msra.mxu0 %v1095
        %1305 = vmatprep.subr.mxu0 %v1141
        %1306 = vmatpush1.msra.mxu0 %v1139
        %1307 = vmatprep.subr.mxu0 0.0
        %1308 = vmatpush1.msra.mxu0 0.0
        %1309 = vmatprep.subr.mxu0 0.0
        %1310 = vmatpush1.msra.mxu0 0.0
        %1311 = vmatprep.subr.mxu0 0.0
        %1312 = vmatpush1.msra.mxu0 0.0
        %1313 = vmatprep.subr.mxu0 0.0
        %1314 = vmatpush1.msra.mxu0 0.0
        %1315 = vmatprep.subr.mxu0 0.0
        %1316 = vmatpush1.msra.mxu0 0.0
        %1317 = vmatprep.subr.mxu0 0.0
        %1318 = vmatpush1.msra.mxu0 0.0
        %1319 = vmatprep.subr.mxu0 0.0
        %1320 = vmatpush1.msra.mxu0 0.0
        %1321 = vmatprep.subr.mxu0 0.0
        %1322 = vmatpush1.msra.mxu0 0.0
        %1323 = vmatprep.subr.mxu0 0.0
        %1324 = vmatpush1.msra.mxu0 0.0
        %1325 = vmatprep.subr.mxu0 0.0
        %1326 = vmatpush1.msra.mxu0 0.0
        %1327 = vmatprep.subr.mxu0 0.0
        %1328 = vmatpush1.msra.mxu0 0.0
        %1329 = vmatprep.subr.mxu0 0.0
        %1330 = vmatpush1.msra.mxu0 0.0
        %1331 = vmatprep.subr.mxu0 0.0
        %1332 = vmatpush1.msra.mxu0 0.0
        %1333 = vmatprep.subr.mxu0 0.0
        %1334 = vmatpush1.msra.mxu0 0.0
        %1335 = vmatprep.subr.mxu0 0.0
        %1336 = vmatpush1.msra.mxu0 0.0
        %1337 = vmatprep.subr.mxu0 0.0
        %1338 = vmatpush1.msra.mxu0 0.0
        %1339 = vmatprep.subr.mxu0 0.0
        %1340 = vmatpush1.msra.mxu0 0.0
        %1341 = vmatprep.subr.mxu0 0.0
        %1342 = vmatpush1.msra.mxu0 0.0
        %1343 = vmatprep.subr.mxu0 0.0
        %1344 = vmatpush1.msra.mxu0 0.0
        %1345 = vmatprep.subr.mxu0 0.0
        %1346 = vmatpush1.msra.mxu0 0.0
        %1347 = vmatprep.subr.mxu0 0.0
        %1348 = vmatpush1.msra.mxu0 0.0
        %1349 = vmatprep.subr.mxu0 0.0
        %1350 = vmatpush1.msra.mxu0 0.0
        %1351 = vmatprep.subr.mxu0 0.0
        %1352 = vmatpush1.msra.mxu0 0.0
        %1353 = vmatprep.subr.mxu0 0.0
        %1354 = vmatpush1.msra.mxu0 0.0
        %1355 = vmatprep.subr.mxu0 0.0
        %1356 = vmatpush1.msra.mxu0 0.0
        %1357 = vmatprep.subr.mxu0 0.0
        %1358 = vmatpush1.msra.mxu0 0.0
        %1359 = vmatprep.subr.mxu0 0.0
        %1360 = vmatpush1.msra.mxu0 0.0
        %1361 = vmatprep.subr.mxu0 0.0
        %1362 = vmatpush1.msra.mxu0 0.0
        %1363 = vmatprep.mubr.f32.mxu0 0.0
        %1364 = vmatmul.mubr.f32.gmra.mrb[0].mxu0 %v1126
        %v1365 = vpop.f32.mrb[0].mxu0
        %v1366 = vadd.f32 %v1117, %v1365
        %v1367 = vpop.f32.mrb[0].mxu0
        %v1368 = vadd.f32 %v1117, %v1367
        %1369 = vmatprep.mubr.f32.mxu0 0.0
        %1370 = vmatmul.mubr.f32.gmra.mrb[0].mxu0 %v1129
        %v1371 = vpop.f32.mrb[0].mxu0
        %v1372 = vadd.f32 %v1122, %v1371
        %v1373 = vpop.f32.mrb[0].mxu0
        %v1374 = vadd.f32 %v1122, %v1373
        %1375 = vdwg.mxu0
        %1376 = vmatprep.subr.mxu0 0.0
        %1377 = vmatpush1.msra.mxu0 %v930
        %1378 = vmatprep.subr.mxu0 0.0
        %1379 = vmatpush1.msra.mxu0 %v979
        %1380 = vmatprep.subr.mxu0 0.0
        %1381 = vmatpush1.msra.mxu0 %v1075
        %1382 = vmatprep.subr.mxu0 0.0
        %1383 = vmatpush1.msra.mxu0 %v1143
        %1384 = vmatprep.subr.mxu0 0.0
        %1385 = vmatpush1.msra.mxu0 0.0
        %1386 = vmatprep.subr.mxu0 0.0
        %1387 = vmatpush1.msra.mxu0 0.0
        %1388 = vmatprep.subr.mxu0 0.0
        %1389 = vmatpush1.msra.mxu0 0.0
        %1390 = vmatprep.subr.mxu0 0.0
        %1391 = vmatpush1.msra.mxu0 0.0
        %1392 = vmatprep.subr.mxu0 0.0
        %1393 = vmatpush1.msra.mxu0 0.0
        %1394 = vmatprep.subr.mxu0 0.0
        %1395 = vmatpush1.msra.mxu0 0.0
        %1396 = vmatprep.subr.mxu0 0.0
        %1397 = vmatpush1.msra.mxu0 0.0
        %1398 = vmatprep.subr.mxu0 0.0
        %1399 = vmatpush1.msra.mxu0 0.0
        %1400 = vmatprep.subr.mxu0 0.0
        %1401 = vmatpush1.msra.mxu0 0.0
        %1402 = vmatprep.subr.mxu0 0.0
        %1403 = vmatpush1.msra.mxu0 0.0
        %1404 = vmatprep.subr.mxu0 0.0
        %1405 = vmatpush1.msra.mxu0 0.0
        %1406 = vmatprep.subr.mxu0 0.0
        %1407 = vmatpush1.msra.mxu0 0.0
        %1408 = vmatprep.subr.mxu0 0.0
        %1409 = vmatpush1.msra.mxu0 0.0
        %1410 = vmatprep.subr.mxu0 0.0
        %1411 = vmatpush1.msra.mxu0 0.0
        %1412 = vmatprep.subr.mxu0 0.0
        %1413 = vmatpush1.msra.mxu0 0.0
        %1414 = vmatprep.subr.mxu0 0.0
        %1415 = vmatpush1.msra.mxu0 0.0
        %1416 = vmatprep.subr.mxu0 0.0
        %1417 = vmatpush1.msra.mxu0 0.0
        %1418 = vmatprep.subr.mxu0 0.0
        %1419 = vmatpush1.msra.mxu0 0.0
        %1420 = vmatprep.subr.mxu0 0.0
        %1421 = vmatpush1.msra.mxu0 0.0
        %1422 = vmatprep.subr.mxu0 0.0
        %1423 = vmatpush1.msra.mxu0 0.0
        %1424 = vmatprep.subr.mxu0 0.0
        %1425 = vmatpush1.msra.mxu0 0.0
        %1426 = vmatprep.subr.mxu0 0.0
        %1427 = vmatpush1.msra.mxu0 0.0
        %1428 = vmatprep.subr.mxu0 0.0
        %1429 = vmatpush1.msra.mxu0 0.0
        %1430 = vmatprep.subr.mxu0 0.0
        %1431 = vmatpush1.msra.mxu0 0.0
        %1432 = vmatprep.subr.mxu0 0.0
        %1433 = vmatpush1.msra.mxu0 0.0
        %1434 = vmatprep.subr.mxu0 0.0
        %1435 = vmatpush1.msra.mxu0 0.0
        %1436 = vmatprep.subr.mxu0 0.0
        %1437 = vmatpush1.msra.mxu0 0.0
        %1438 = vmatprep.subr.mxu0 0.0
        %1439 = vmatpush1.msra.mxu0 0.0
        %1440 = vmatprep.mubr.f32.mxu0 0.0
        %1441 = vmatmul.mubr.f32.gmra.mrb[0].mxu0 %v1126
        %v1442 = vpop.f32.mrb[0].mxu0
        %v1443 = vadd.f32 %v1117, %v1442
        %v1444 = vpop.f32.mrb[0].mxu0
        %1445 = vmatprep.mubr.f32.mxu0 0.0
        %1446 = vmatmul.mubr.f32.gmra.mrb[0].mxu0 %v1129
        %v1447 = vpop.f32.mrb[0].mxu0
        %v1448 = vadd.f32 %v1122, %v1447
        %v1449 = vpop.f32.mrb[0].mxu0
        %1450 = vdwg.mxu0
        %v1451 = vmax.f32 %v1212, 0.0
        %v1452 = vmax.f32 %v1214, 0.0
        %v1453 = vmax.f32 %v1289, 0.0
        %v1454 = vmax.f32 %v1291, 0.0
        %v1455 = vmax.f32 %v1366, 0.0
        %v1456 = vmax.f32 %v1368, 0.0
        %v1457 = vmax.f32 %v1443, 0.0
        %v1458 = vmax.f32 %v1218, 0.0
        %v1459 = vmax.f32 %v1220, 0.0
        %v1460 = vmax.f32 %v1295, 0.0
        %v1461 = vmax.f32 %v1297, 0.0
        %v1462 = vmax.f32 %v1372, 0.0
        %v1463 = vmax.f32 %v1374, 0.0
        %v1464 = vmax.f32 %v1448, 0.0
        %1479 = vrot.lane.b32.xlu0 %v1451, 127
        %v1480 = vpop.permute.xlu0 %1479
        %1481 = vrot.lane.b32.xlu0 %v1452, 127
        %v1482 = vpop.permute.xlu0 %1481
        %1483 = vrot.lane.b32.xlu0 %v1453, 127
        %v1484 = vpop.permute.xlu0 %1483
        %1485 = vrot.lane.b32.xlu0 %v1454, 127
        %v1486 = vpop.permute.xlu0 %1485
        %1487 = vrot.lane.b32.xlu0 %v1455, 127
        %v1488 = vpop.permute.xlu0 %1487
        %1489 = vrot.lane.b32.xlu0 %v1456, 127
        %v1490 = vpop.permute.xlu0 %1489
        %1491 = vrot.lane.b32.xlu0 %v1457, 127
        %v1492 = vpop.permute.xlu0 %1491
        %1493 = vrot.lane.b32.xlu0 %v1458, 127
        %v1494 = vpop.permute.xlu0 %1493
        %1495 = vrot.lane.b32.xlu0 %v1459, 127
        %v1496 = vpop.permute.xlu0 %1495
        %1497 = vrot.lane.b32.xlu0 %v1460, 127
        %v1498 = vpop.permute.xlu0 %1497
        %1499 = vrot.lane.b32.xlu0 %v1461, 127
        %v1500 = vpop.permute.xlu0 %1499
        %1501 = vrot.lane.b32.xlu0 %v1462, 127
        %v1502 = vpop.permute.xlu0 %1501
        %1503 = vrot.lane.b32.xlu0 %v1463, 127
        %v1504 = vpop.permute.xlu0 %1503
        %1505 = vrot.lane.b32.xlu0 %v1464, 127
        %v1506 = vpop.permute.xlu0 %1505
        %v1507 = vsel %vm469, %v1480, %v1482
        %v1508 = vsel %vm469, %v1482, %v1484
        %v1509 = vsel %vm469, %v1484, %v1486
        %v1510 = vsel %vm469, %v1486, %v1488
        %v1511 = vsel %vm469, %v1488, %v1490
        %v1512 = vsel %vm469, %v1490, %v1492
        %v1513 = vsel %vm469, %v1494, %v1496
        %v1514 = vsel %vm469, %v1496, %v1498
        %v1515 = vsel %vm469, %v1498, %v1500
        %v1516 = vsel %vm469, %v1500, %v1502
        %v1517 = vsel %vm469, %v1502, %v1504
        %v1518 = vsel %vm469, %v1504, %v1506
        %v1531 = vmax.f32 %v1451, %v1507
        %v1532 = vmax.f32 %v1452, %v1508
        %v1533 = vmax.f32 %v1453, %v1509
        %v1534 = vmax.f32 %v1454, %v1510
        %v1535 = vmax.f32 %v1455, %v1511
        %v1536 = vmax.f32 %v1456, %v1512
        %v1537 = vmax.f32 %v1458, %v1513
        %v1538 = vmax.f32 %v1459, %v1514
        %v1539 = vmax.f32 %v1460, %v1515
        %v1540 = vmax.f32 %v1461, %v1516
        %v1541 = vmax.f32 %v1462, %v1517
        %v1542 = vmax.f32 %v1463, %v1518
        %1555 = vrot.lane.b32.xlu0 %v1531, 100
        %v1556 = vpop.permute.xlu0 %1555
        %1557 = vrot.lane.b32.xlu0 %v1532, 100
        %v1558 = vpop.permute.xlu0 %1557
        %1559 = vrot.lane.b32.xlu0 %v1533, 100
        %v1560 = vpop.permute.xlu0 %1559
        %1561 = vrot.lane.b32.xlu0 %v1534, 100
        %v1562 = vpop.permute.xlu0 %1561
        %1563 = vrot.lane.b32.xlu0 %v1535, 100
        %v1564 = vpop.permute.xlu0 %1563
        %1565 = vrot.lane.b32.xlu0 %v1536, 100
        %v1566 = vpop.permute.xlu0 %1565
        %1567 = vrot.lane.b32.xlu0 %v1537, 100
        %v1568 = vpop.permute.xlu0 %1567
        %1569 = vrot.lane.b32.xlu0 %v1538, 100
        %v1570 = vpop.permute.xlu0 %1569
        %1571 = vrot.lane.b32.xlu0 %v1539, 100
        %v1572 = vpop.permute.xlu0 %1571
        %1573 = vrot.lane.b32.xlu0 %v1540, 100
        %v1574 = vpop.permute.xlu0 %1573
        %1575 = vrot.lane.b32.xlu0 %v1541, 100
        %v1576 = vpop.permute.xlu0 %1575
        %1577 = vrot.lane.b32.xlu0 %v1542, 100
        %v1578 = vpop.permute.xlu0 %1577
        %v1579 = vsel %vm581, %v1556, %v1558
        %v1580 = vsel %vm581, %v1558, %v1560
        %v1581 = vsel %vm581, %v1560, %v1562
        %v1582 = vsel %vm581, %v1562, %v1564
        %v1583 = vsel %vm581, %v1564, %v1566
        %v1584 = vsel %vm581, %v1568, %v1570
        %v1585 = vsel %vm581, %v1570, %v1572
        %v1586 = vsel %vm581, %v1572, %v1574
        %v1587 = vsel %vm581, %v1574, %v1576
        %v1588 = vsel %vm581, %v1576, %v1578
        %v1599 = vmax.f32 %v1531, %v1579
        %v1600 = vmax.f32 %v1532, %v1580
        %v1601 = vmax.f32 %v1533, %v1581
        %v1602 = vmax.f32 %v1534, %v1582
        %v1603 = vmax.f32 %v1535, %v1583
        %v1604 = vmax.f32 %v1537, %v1584
        %v1605 = vmax.f32 %v1538, %v1585
        %v1606 = vmax.f32 %v1539, %v1586
        %v1607 = vmax.f32 %v1540, %v1587
        %v1608 = vmax.f32 %v1541, %v1588
        %v1609 = vld [vmem:[%s3] sm:$0xff]
        %v1610 = vld [vmem:[%s3 + $0x8] sm:$0xff]
        %v1611 = vld [vmem:[%s3 + $0x10] sm:$0xff]
        %v1612 = vld [vmem:[%s3 + $0x18] sm:$0xff]
        %v1613 = vld [vmem:[%s3 + $0x20] sm:$0xff]
        %v1614 = vld [vmem:[%s3 + $0x28] sm:$0xff]
        %v1615 = vld [vmem:[%s3 + $0x30] sm:$0xff]
        %v1616 = vld [vmem:[%s3 + $0x38] sm:$0xff]
        %v1617 = vld [vmem:[%s3 + $0x40] sm:$0xff]
        %v1618 = vld [vmem:[%s3 + $0x48] sm:$0xff]
        %v1619 = vld [vmem:[%s3 + $0x50] sm:$0xff]
        %v1620 = vld [vmem:[%s3 + $0x58] sm:$0xff]
        %v1621 = vld [vmem:[%s3 + $0x60] sm:$0xff]
        %v1622 = vld [vmem:[%s3 + $0x68] sm:$0xff]
        %v1623 = vld [vmem:[%s3 + $0x70] sm:$0xff]
        %v1624 = vld [vmem:[%s3 + $0x78] sm:$0xff]
        %v1625 = vld [vmem:[%s3 + $0x80] sm:$0xff]
        %v1626 = vld [vmem:[%s3 + $0x88] sm:$0xff]
        %v1627 = vld [vmem:[%s3 + $0x90] sm:$0xff]
        %v1628 = vld [vmem:[%s3 + $0x98] sm:$0xff]
        %v1629 = vld [vmem:[%s3 + $0xa0] sm:$0xff]
        %v1630 = vld [vmem:[%s3 + $0xa8] sm:$0xff]
        %v1631 = vld [vmem:[%s3 + $0xb0] sm:$0xff]
        %v1632 = vld [vmem:[%s3 + $0xb8] sm:$0xff]
        %v1633 = vld [vmem:[%s3 + $0xc0] sm:$0xff]
        %v1634 = vld [vmem:[%s3 + $0xc8] sm:$0xff]
        %v1635 = vld [vmem:[%s3 + $0xd0] sm:$0xff]
        %v1636 = vld [vmem:[%s3 + $0xd8] sm:$0xff]
        %v1637 = vld [vmem:[%s3 + $0xe0] sm:$0xff]
        %v1638 = vld [vmem:[%s3 + $0xe8] sm:$0xff]
        %v1639 = vld [vmem:[%s3 + $0xf0] sm:$0xff]
        %v1640 = vld [vmem:[%s3 + $0xf8] sm:$0xff]
        %v1641 = vld [vmem:[%s3 + $0x100] sm:$0xff]
        %v1642 = vld [vmem:[%s3 + $0x108] sm:$0xff]
        %v1643 = vld [vmem:[%s3 + $0x110] sm:$0xff]
        %v1644 = vld [vmem:[%s3 + $0x118] sm:$0xff]
        %v1645 = vld [vmem:[%s3 + $0x120] sm:$0xff]
        %v1646 = vld [vmem:[%s3 + $0x128] sm:$0xff]
        %v1647 = vld [vmem:[%s3 + $0x130] sm:$0xff]
        %v1648 = vld [vmem:[%s3 + $0x138] sm:$0xff]
        %v1649 = vld [vmem:[%s3 + $0x140] sm:$0xff]
        %v1650 = vld [vmem:[%s3 + $0x148] sm:$0xff]
        %v1651 = vld [vmem:[%s3 + $0x150] sm:$0xff]
        %v1652 = vld [vmem:[%s3 + $0x158] sm:$0xff]
        %v1653 = vld [vmem:[%s3 + $0x160] sm:$0xff]
        %v1654 = vld [vmem:[%s3 + $0x168] sm:$0xff]
        %v1655 = vld [vmem:[%s3 + $0x170] sm:$0xff]
        %v1656 = vld [vmem:[%s3 + $0x178] sm:$0xff]
        %v1657 = vld [vmem:[%s3 + $0x180] sm:$0xff]
        %v1658 = vld [vmem:[%s3 + $0x188] sm:$0xff]
        %v1659 = vld [vmem:[%s3 + $0x190] sm:$0xff]
        %v1660 = vld [vmem:[%s3 + $0x198] sm:$0xff]
        %v1661 = vld [vmem:[%s3 + $0x1a0] sm:$0xff]
        %v1662 = vld [vmem:[%s3 + $0x1a8] sm:$0xff]
        %v1663 = vld [vmem:[%s3 + $0x1b0] sm:$0xff]
        %v1664 = vld [vmem:[%s3 + $0x1b8] sm:$0xff]
        %v1665 = vld [vmem:[%s3 + $0x1c0] sm:$0xff]
        %v1666 = vld [vmem:[%s3 + $0x1c8] sm:$0xff]
        %v1667 = vld [vmem:[%s3 + $0x1d0] sm:$0xff]
        %v1668 = vld [vmem:[%s3 + $0x1d8] sm:$0xff]
        %v1669 = vld [vmem:[%s3 + $0x1e0] sm:$0xff]
        %v1670 = vld [vmem:[%s3 + $0x1e8] sm:$0xff]
        %v1671 = vld [vmem:[%s3 + $0x1f0] sm:$0xff]
        %v1672 = vld [vmem:[%s3 + $0x1f8] sm:$0xff]
        %v1673 = vld [vmem:[%s3 + $0x200] sm:$0xff]
        %v1674 = vld [vmem:[%s3 + $0x208] sm:$0xff]
        %v1675 = vld [vmem:[%s3 + $0x210] sm:$0xff]
        %v1676 = vld [vmem:[%s3 + $0x218] sm:$0xff]
        %v1677 = vld [vmem:[%s3 + $0x220] sm:$0xff]
        %v1678 = vld [vmem:[%s3 + $0x228] sm:$0xff]
        %v1679 = vld [vmem:[%s3 + $0x230] sm:$0xff]
        %v1680 = vld [vmem:[%s3 + $0x238] sm:$0xff]
        %v1681 = vld [vmem:[%s3 + $0x240] sm:$0xff]
        %v1682 = vld [vmem:[%s3 + $0x248] sm:$0xff]
        %v1683 = vld [vmem:[%s3 + $0x250] sm:$0xff]
        %v1684 = vld [vmem:[%s3 + $0x258] sm:$0xff]
        %v1685 = vld [vmem:[%s3 + $0x260] sm:$0xff]
        %v1686 = vld [vmem:[%s3 + $0x268] sm:$0xff]
        %v1687 = vld [vmem:[%s3 + $0x270] sm:$0xff]
        %v1688 = vld [vmem:[%s3 + $0x278] sm:$0xff]
        %v1689 = vld [vmem:[%s3 + $0x280] sm:$0xff]
        %v1690 = vld [vmem:[%s3 + $0x288] sm:$0xff]
        %v1691 = vld [vmem:[%s3 + $0x290] sm:$0xff]
        %v1692 = vld [vmem:[%s3 + $0x298] sm:$0xff]
        %v1693 = vld [vmem:[%s3 + $0x2a0] sm:$0xff]
        %v1694 = vld [vmem:[%s3 + $0x2a8] sm:$0xff]
        %v1695 = vld [vmem:[%s3 + $0x2b0] sm:$0xff]
        %v1696 = vld [vmem:[%s3 + $0x2b8] sm:$0xff]
        %v1697 = vld [vmem:[%s3 + $0x2c0] sm:$0xff]
        %v1698 = vld [vmem:[%s3 + $0x2c8] sm:$0xff]
        %v1699 = vld [vmem:[%s3 + $0x2d0] sm:$0xff]
        %v1700 = vld [vmem:[%s3 + $0x2d8] sm:$0xff]
        %v1701 = vld [vmem:[%s3 + $0x2e0] sm:$0xff]
        %v1702 = vld [vmem:[%s3 + $0x2e8] sm:$0xff]
        %v1703 = vld [vmem:[%s3 + $0x2f0] sm:$0xff]
        %v1704 = vld [vmem:[%s3 + $0x2f8] sm:$0xff]
        %v1705 = vld [vmem:[%s3 + $0x300] sm:$0xff]
        %v1706 = vld [vmem:[%s3 + $0x308] sm:$0xff]
        %v1707 = vld [vmem:[%s3 + $0x310] sm:$0xff]
        %v1708 = vld [vmem:[%s3 + $0x318] sm:$0xff]
        %v1709 = vld [vmem:[%s3 + $0x320] sm:$0xff]
        %v1710 = vld [vmem:[%s3 + $0x328] sm:$0xff]
        %v1711 = vld [vmem:[%s3 + $0x330] sm:$0xff]
        %v1712 = vld [vmem:[%s3 + $0x338] sm:$0xff]
        %v1713 = vld [vmem:[%s3 + $0x340] sm:$0xff]
        %v1714 = vld [vmem:[%s3 + $0x348] sm:$0xff]
        %v1715 = vld [vmem:[%s3 + $0x350] sm:$0xff]
        %v1716 = vld [vmem:[%s3 + $0x358] sm:$0xff]
        %v1717 = vld [vmem:[%s3 + $0x360] sm:$0xff]
        %v1718 = vld [vmem:[%s3 + $0x368] sm:$0xff]
        %v1719 = vld [vmem:[%s3 + $0x370] sm:$0xff]
        %v1720 = vld [vmem:[%s3 + $0x378] sm:$0xff]
        %v1721 = vld [vmem:[%s3 + $0x380] sm:$0xff]
        %v1722 = vld [vmem:[%s3 + $0x388] sm:$0xff]
        %v1723 = vld [vmem:[%s3 + $0x390] sm:$0xff]
        %v1724 = vld [vmem:[%s3 + $0x398] sm:$0xff]
        %v1725 = vld [vmem:[%s3 + $0x3a0] sm:$0xff]
        %v1726 = vld [vmem:[%s3 + $0x3a8] sm:$0xff]
        %v1727 = vld [vmem:[%s3 + $0x3b0] sm:$0xff]
        %v1728 = vld [vmem:[%s3 + $0x3b8] sm:$0xff]
        %v1729 = vld [vmem:[%s3 + $0x3c0] sm:$0xff]
        %v1730 = vld [vmem:[%s3 + $0x3c8] sm:$0xff]
        %v1731 = vld [vmem:[%s3 + $0x3d0] sm:$0xff]
        %v1732 = vld [vmem:[%s3 + $0x3d8] sm:$0xff]
        %v1733 = vld [vmem:[%s3 + $0x3e0] sm:$0xff]
        %v1734 = vld [vmem:[%s3 + $0x3e8] sm:$0xff]
        %v1735 = vld [vmem:[%s3 + $0x3f0] sm:$0xff]
        %v1736 = vld [vmem:[%s3 + $0x3f8] sm:$0xff]
        %v1737 = vld [vmem:[%s3 + $0x400] sm:$0xff]
        %v1738 = vld [vmem:[%s3 + $0x408] sm:$0xff]
        %v1739 = vld [vmem:[%s3 + $0x410] sm:$0xff]
        %v1740 = vld [vmem:[%s3 + $0x418] sm:$0xff]
        %v1741 = vld [vmem:[%s3 + $0x420] sm:$0xff]
        %v1742 = vld [vmem:[%s3 + $0x428] sm:$0xff]
        %v1743 = vld [vmem:[%s3 + $0x430] sm:$0xff]
        %v1744 = vld [vmem:[%s3 + $0x438] sm:$0xff]
        %v1745 = vld [vmem:[%s3 + $0x440] sm:$0xff]
        %v1746 = vld [vmem:[%s3 + $0x448] sm:$0xff]
        %v1747 = vld [vmem:[%s3 + $0x450] sm:$0xff]
        %v1748 = vld [vmem:[%s3 + $0x458] sm:$0xff]
        %v1749 = vld [vmem:[%s3 + $0x460] sm:$0xff]
        %v1750 = vld [vmem:[%s3 + $0x468] sm:$0xff]
        %v1751 = vld [vmem:[%s3 + $0x470] sm:$0xff]
        %v1752 = vld [vmem:[%s3 + $0x478] sm:$0xff]
        %v1753 = vld [vmem:[%s3 + $0x480] sm:$0xff]
        %v1754 = vld [vmem:[%s3 + $0x488] sm:$0xff]
        %v1755 = vld [vmem:[%s3 + $0x490] sm:$0xff]
        %v1756 = vld [vmem:[%s3 + $0x498] sm:$0xff]
        %v1757 = vld [vmem:[%s3 + $0x4a0] sm:$0xff]
        %v1758 = vld [vmem:[%s3 + $0x4a8] sm:$0xff]
        %v1759 = vld [vmem:[%s3 + $0x4b0] sm:$0xff]
        %v1760 = vld [vmem:[%s3 + $0x4b8] sm:$0xff]
        %v1761 = vld [vmem:[%s3 + $0x4c0] sm:$0xff]
        %v1762 = vld [vmem:[%s3 + $0x4c8] sm:$0xff]
        %v1763 = vld [vmem:[%s3 + $0x4d0] sm:$0xff]
        %v1764 = vld [vmem:[%s3 + $0x4d8] sm:$0xff]
        %v1765 = vld [vmem:[%s3 + $0x4e0] sm:$0xff]
        %v1766 = vld [vmem:[%s3 + $0x4e8] sm:$0xff]
        %v1767 = vld [vmem:[%s3 + $0x4f0] sm:$0xff]
        %v1768 = vld [vmem:[%s3 + $0x4f8] sm:$0xff]
        %1769 = vmatprep.subr.mxu0 %v1610
        %1770 = vmatpush1.msra.mxu0 %v1609
        %1771 = vmatprep.subr.mxu0 %v1612
        %1772 = vmatpush1.msra.mxu0 %v1611
        %1773 = vmatprep.subr.mxu0 %v1614
        %1774 = vmatpush1.msra.mxu0 %v1613
        %1775 = vmatprep.subr.mxu0 %v1616
        %1776 = vmatpush1.msra.mxu0 %v1615
        %1777 = vmatprep.subr.mxu0 %v1618
        %1778 = vmatpush1.msra.mxu0 %v1617
        %1779 = vmatprep.subr.mxu0 %v1620
        %1780 = vmatpush1.msra.mxu0 %v1619
        %1781 = vmatprep.subr.mxu0 %v1622
        %1782 = vmatpush1.msra.mxu0 %v1621
        %1783 = vmatprep.subr.mxu0 %v1624
        %1784 = vmatpush1.msra.mxu0 %v1623
        %1785 = vmatprep.subr.mxu0 %v1626
        %1786 = vmatpush1.msra.mxu0 %v1625
        %1787 = vmatprep.subr.mxu0 %v1628
        %1788 = vmatpush1.msra.mxu0 %v1627
        %1789 = vmatprep.subr.mxu0 %v1630
        %1790 = vmatpush1.msra.mxu0 %v1629
        %1791 = vmatprep.subr.mxu0 %v1632
        %1792 = vmatpush1.msra.mxu0 %v1631
        %1793 = vmatprep.subr.mxu0 %v1634
        %1794 = vmatpush1.msra.mxu0 %v1633
        %1795 = vmatprep.subr.mxu0 %v1636
        %1796 = vmatpush1.msra.mxu0 %v1635
        %1797 = vmatprep.subr.mxu0 %v1638
        %1798 = vmatpush1.msra.mxu0 %v1637
        %1799 = vmatprep.subr.mxu0 %v1640
        %1800 = vmatpush1.msra.mxu0 %v1639
        %1801 = vmatprep.subr.mxu0 %v1642
        %1802 = vmatpush1.msra.mxu0 %v1641
        %1803 = vmatprep.subr.mxu0 %v1644
        %1804 = vmatpush1.msra.mxu0 %v1643
        %1805 = vmatprep.subr.mxu0 %v1646
        %1806 = vmatpush1.msra.mxu0 %v1645
        %1807 = vmatprep.subr.mxu0 %v1648
        %1808 = vmatpush1.msra.mxu0 %v1647
        %1809 = vmatprep.subr.mxu0 %v1650
        %1810 = vmatpush1.msra.mxu0 %v1649
        %1811 = vmatprep.subr.mxu0 %v1652
        %1812 = vmatpush1.msra.mxu0 %v1651
        %1813 = vmatprep.subr.mxu0 %v1654
        %1814 = vmatpush1.msra.mxu0 %v1653
        %1815 = vmatprep.subr.mxu0 %v1656
        %1816 = vmatpush1.msra.mxu0 %v1655
        %1817 = vmatprep.subr.mxu0 %v1658
        %1818 = vmatpush1.msra.mxu0 %v1657
        %1819 = vmatprep.subr.mxu0 %v1660
        %1820 = vmatpush1.msra.mxu0 %v1659
        %1821 = vmatprep.subr.mxu0 %v1662
        %1822 = vmatpush1.msra.mxu0 %v1661
        %1823 = vmatprep.subr.mxu0 %v1664
        %1824 = vmatpush1.msra.mxu0 %v1663
        %1825 = vmatprep.subr.mxu0 %v1666
        %1826 = vmatpush1.msra.mxu0 %v1665
        %1827 = vmatprep.subr.mxu0 %v1668
        %1828 = vmatpush1.msra.mxu0 %v1667
        %1829 = vmatprep.subr.mxu0 %v1670
        %1830 = vmatpush1.msra.mxu0 %v1669
        %1831 = vmatprep.subr.mxu0 %v1672
        %1832 = vmatpush1.msra.mxu0 %v1671
        %1833 = vmatprep.mubr.f32.mxu0 %v1600
        %1834 = vmatmul.mubr.f32.gmra.mrb[0].mxu0 %v1599
        %v1835 = vpop.f32.mrb[0].mxu0
        %v1836 = vadd.f32 0.0, %v1835
        %v1837 = vpop.f32.mrb[0].mxu0
        %v1838 = vadd.f32 0.0, %v1837
        %1839 = vmatprep.mubr.f32.mxu0 %v1605
        %1840 = vmatmul.mubr.f32.gmra.mrb[0].mxu0 %v1604
        %v1841 = vpop.f32.mrb[0].mxu0
        %v1842 = vadd.f32 0.0, %v1841
        %v1843 = vpop.f32.mrb[0].mxu0
        %v1844 = vadd.f32 0.0, %v1843
        %1845 = vdwg.mxu0
        %1846 = vmatprep.subr.mxu0 %v1674
        %1847 = vmatpush1.msra.mxu0 %v1673
        %1848 = vmatprep.subr.mxu0 %v1676
        %1849 = vmatpush1.msra.mxu0 %v1675
        %1850 = vmatprep.subr.mxu0 %v1678
        %1851 = vmatpush1.msra.mxu0 %v1677
        %1852 = vmatprep.subr.mxu0 %v1680
        %1853 = vmatpush1.msra.mxu0 %v1679
        %1854 = vmatprep.subr.mxu0 %v1682
        %1855 = vmatpush1.msra.mxu0 %v1681
        %1856 = vmatprep.subr.mxu0 %v1684
        %1857 = vmatpush1.msra.mxu0 %v1683
        %1858 = vmatprep.subr.mxu0 %v1686
        %1859 = vmatpush1.msra.mxu0 %v1685
        %1860 = vmatprep.subr.mxu0 %v1688
        %1861 = vmatpush1.msra.mxu0 %v1687
        %1862 = vmatprep.subr.mxu0 %v1690
        %1863 = vmatpush1.msra.mxu0 %v1689
        %1864 = vmatprep.subr.mxu0 %v1692
        %1865 = vmatpush1.msra.mxu0 %v1691
        %1866 = vmatprep.subr.mxu0 %v1694
        %1867 = vmatpush1.msra.mxu0 %v1693
        %1868 = vmatprep.subr.mxu0 %v1696
        %1869 = vmatpush1.msra.mxu0 %v1695
        %1870 = vmatprep.subr.mxu0 %v1698
        %1871 = vmatpush1.msra.mxu0 %v1697
        %1872 = vmatprep.subr.mxu0 %v1700
        %1873 = vmatpush1.msra.mxu0 %v1699
        %1874 = vmatprep.subr.mxu0 %v1702
        %1875 = vmatpush1.msra.mxu0 %v1701
        %1876 = vmatprep.subr.mxu0 %v1704
        %1877 = vmatpush1.msra.mxu0 %v1703
        %1878 = vmatprep.subr.mxu0 %v1706
        %1879 = vmatpush1.msra.mxu0 %v1705
        %1880 = vmatprep.subr.mxu0 %v1708
        %1881 = vmatpush1.msra.mxu0 %v1707
        %1882 = vmatprep.subr.mxu0 %v1710
        %1883 = vmatpush1.msra.mxu0 %v1709
        %1884 = vmatprep.subr.mxu0 %v1712
        %1885 = vmatpush1.msra.mxu0 %v1711
        %1886 = vmatprep.subr.mxu0 %v1714
        %1887 = vmatpush1.msra.mxu0 %v1713
        %1888 = vmatprep.subr.mxu0 %v1716
        %1889 = vmatpush1.msra.mxu0 %v1715
        %1890 = vmatprep.subr.mxu0 %v1718
        %1891 = vmatpush1.msra.mxu0 %v1717
        %1892 = vmatprep.subr.mxu0 %v1720
        %1893 = vmatpush1.msra.mxu0 %v1719
        %1894 = vmatprep.subr.mxu0 %v1722
        %1895 = vmatpush1.msra.mxu0 %v1721
        %1896 = vmatprep.subr.mxu0 %v1724
        %1897 = vmatpush1.msra.mxu0 %v1723
        %1898 = vmatprep.subr.mxu0 %v1726
        %1899 = vmatpush1.msra.mxu0 %v1725
        %1900 = vmatprep.subr.mxu0 %v1728
        %1901 = vmatpush1.msra.mxu0 %v1727
        %1902 = vmatprep.subr.mxu0 %v1730
        %1903 = vmatpush1.msra.mxu0 %v1729
        %1904 = vmatprep.subr.mxu0 %v1732
        %1905 = vmatpush1.msra.mxu0 %v1731
        %1906 = vmatprep.subr.mxu0 %v1734
        %1907 = vmatpush1.msra.mxu0 %v1733
        %1908 = vmatprep.subr.mxu0 %v1736
        %1909 = vmatpush1.msra.mxu0 %v1735
        %1910 = vmatprep.mubr.f32.mxu0 %v1602
        %1911 = vmatmul.mubr.f32.gmra.mrb[0].mxu0 %v1601
        %v1912 = vpop.f32.mrb[0].mxu0
        %v1913 = vadd.f32 %v1836, %v1912
        %v1914 = vpop.f32.mrb[0].mxu0
        %v1915 = vadd.f32 %v1838, %v1914
        %1916 = vmatprep.mubr.f32.mxu0 %v1607
        %1917 = vmatmul.mubr.f32.gmra.mrb[0].mxu0 %v1606
        %v1918 = vpop.f32.mrb[0].mxu0
        %v1919 = vadd.f32 %v1842, %v1918
        %v1920 = vpop.f32.mrb[0].mxu0
        %v1921 = vadd.f32 %v1844, %v1920
        %1922 = vdwg.mxu0
        %1923 = vmatprep.subr.mxu0 %v1738
        %1924 = vmatpush1.msra.mxu0 %v1737
        %1925 = vmatprep.subr.mxu0 %v1740
        %1926 = vmatpush1.msra.mxu0 %v1739
        %1927 = vmatprep.subr.mxu0 %v1742
        %1928 = vmatpush1.msra.mxu0 %v1741
        %1929 = vmatprep.subr.mxu0 %v1744
        %1930 = vmatpush1.msra.mxu0 %v1743
        %1931 = vmatprep.subr.mxu0 %v1746
        %1932 = vmatpush1.msra.mxu0 %v1745
        %1933 = vmatprep.subr.mxu0 %v1748
        %1934 = vmatpush1.msra.mxu0 %v1747
        %1935 = vmatprep.subr.mxu0 %v1750
        %1936 = vmatpush1.msra.mxu0 %v1749
        %1937 = vmatprep.subr.mxu0 %v1752
        %1938 = vmatpush1.msra.mxu0 %v1751
        %1939 = vmatprep.subr.mxu0 %v1754
        %1940 = vmatpush1.msra.mxu0 %v1753
        %1941 = vmatprep.subr.mxu0 %v1756
        %1942 = vmatpush1.msra.mxu0 %v1755
        %1943 = vmatprep.subr.mxu0 %v1758
        %1944 = vmatpush1.msra.mxu0 %v1757
        %1945 = vmatprep.subr.mxu0 %v1760
        %1946 = vmatpush1.msra.mxu0 %v1759
        %1947 = vmatprep.subr.mxu0 %v1762
        %1948 = vmatpush1.msra.mxu0 %v1761
        %1949 = vmatprep.subr.mxu0 %v1764
        %1950 = vmatpush1.msra.mxu0 %v1763
        %1951 = vmatprep.subr.mxu0 %v1766
        %1952 = vmatpush1.msra.mxu0 %v1765
        %1953 = vmatprep.subr.mxu0 %v1768
        %1954 = vmatpush1.msra.mxu0 %v1767
        %1955 = vmatprep.subr.mxu0 0.0
        %1956 = vmatpush1.msra.mxu0 0.0
        %1957 = vmatprep.subr.mxu0 0.0
        %1958 = vmatpush1.msra.mxu0 0.0
        %1959 = vmatprep.subr.mxu0 0.0
        %1960 = vmatpush1.msra.mxu0 0.0
        %1961 = vmatprep.subr.mxu0 0.0
        %1962 = vmatpush1.msra.mxu0 0.0
        %1963 = vmatprep.subr.mxu0 0.0
        %1964 = vmatpush1.msra.mxu0 0.0
        %1965 = vmatprep.subr.mxu0 0.0
        %1966 = vmatpush1.msra.mxu0 0.0
        %1967 = vmatprep.subr.mxu0 0.0
        %1968 = vmatpush1.msra.mxu0 0.0
        %1969 = vmatprep.subr.mxu0 0.0
        %1970 = vmatpush1.msra.mxu0 0.0
        %1971 = vmatprep.subr.mxu0 0.0
        %1972 = vmatpush1.msra.mxu0 0.0
        %1973 = vmatprep.subr.mxu0 0.0
        %1974 = vmatpush1.msra.mxu0 0.0
        %1975 = vmatprep.subr.mxu0 0.0
        %1976 = vmatpush1.msra.mxu0 0.0
        %1977 = vmatprep.subr.mxu0 0.0
        %1978 = vmatpush1.msra.mxu0 0.0
        %1979 = vmatprep.subr.mxu0 0.0
        %1980 = vmatpush1.msra.mxu0 0.0
        %1981 = vmatprep.subr.mxu0 0.0
        %1982 = vmatpush1.msra.mxu0 0.0
        %1983 = vmatprep.subr.mxu0 0.0
        %1984 = vmatpush1.msra.mxu0 0.0
        %1985 = vmatprep.subr.mxu0 0.0
        %1986 = vmatpush1.msra.mxu0 0.0
        %1987 = vmatprep.mubr.f32.mxu0 0.0
        %1988 = vmatmul.mubr.f32.gmra.mrb[0].mxu0 %v1603
        %v1989 = vpop.f32.mrb[0].mxu0
        %v1990 = vadd.f32 %v1913, %v1989
        %v1991 = vpop.f32.mrb[0].mxu0
        %v1992 = vadd.f32 %v1915, %v1991
        %1993 = vmatprep.mubr.f32.mxu0 0.0
        %1994 = vmatmul.mubr.f32.gmra.mrb[0].mxu0 %v1608
        %v1995 = vpop.f32.mrb[0].mxu0
        %v1996 = vadd.f32 %v1919, %v1995
        %v1997 = vpop.f32.mrb[0].mxu0
        %v1998 = vadd.f32 %v1921, %v1997
        %1999 = vdwg.mxu0
        %vm2000 = vcmask 130048
        %v2001 = vsel %vm2000, %v1992, 0.0
        %v2002 = vsel %vm2000, %v1998, 0.0
        %v2003 = vld [vmem:[%s4] sm:$0xff]
        %v2004 = vld [vmem:[%s4 + $0x8] sm:$0xff]
        %v2005 = vld [vmem:[%s4 + $0x10] sm:$0xf]
        %s2006 = scalar_lea.vmem %s4, 24
        %v2007 = vld [vmem:[%s2006] sm:$0xff]
        %v2008 = vld [vmem:[%s2006 + $0x8] sm:$0xff]
        %v2009 = vld [vmem:[%s2006 + $0x10] sm:$0xf]
        %2014 = vrot.lane.b32.xlu0 %v1990, 127
        %v2015 = vpop.permute.xlu0 %2014
        %2016 = vrot.lane.b32.xlu0 %v2001, 127
        %v2017 = vpop.permute.xlu0 %2016
        %2018 = vrot.lane.b32.xlu0 %v1996, 127
        %v2019 = vpop.permute.xlu0 %2018
        %2020 = vrot.lane.b32.xlu0 %v2002, 127
        %v2021 = vpop.permute.xlu0 %2020
        %v2022 = vsel %vm469, %v2015, %v2017
        %v2023 = vsel %vm469, %v2019, %v2021
        %vm2026 = vcmask 80896
        %v2028 = vsel %vm2026, %v2007, 0
        %v2031 = vsel %vm2026, %v2008, 0
        %v2034 = vsel %vm2026, %v2009, 0
        %v2036 = vsel %vm883, %v2023, 0
        %v2038 = vsel %vm883, %v2021, 0
        %2040 = vmatprep.subr.mxu0 %v2017
        %2041 = vmatpush1.msra.mxu0 %v2022
        %2042 = vmatprep.subr.mxu0 %v2038
        %2043 = vmatpush1.msra.mxu0 %v2036
        %2044 = vmatprep.subr.mxu0 0.0
        %2045 = vmatpush1.msra.mxu0 0.0
        %2046 = vmatprep.subr.mxu0 0.0
        %2047 = vmatpush1.msra.mxu0 0.0
        %2048 = vmatprep.subr.mxu0 0.0
        %2049 = vmatpush1.msra.mxu0 0.0
        %2050 = vmatprep.subr.mxu0 0.0
        %2051 = vmatpush1.msra.mxu0 0.0
        %2052 = vmatprep.subr.mxu0 0.0
        %2053 = vmatpush1.msra.mxu0 0.0
        %2054 = vmatprep.subr.mxu0 0.0
        %2055 = vmatpush1.msra.mxu0 0.0
        %2056 = vmatprep.subr.mxu0 0.0
        %2057 = vmatpush1.msra.mxu0 0.0
        %2058 = vmatprep.subr.mxu0 0.0
        %2059 = vmatpush1.msra.mxu0 0.0
        %2060 = vmatprep.subr.mxu0 0.0
        %2061 = vmatpush1.msra.mxu0 0.0
        %2062 = vmatprep.subr.mxu0 0.0
        %2063 = vmatpush1.msra.mxu0 0.0
        %2064 = vmatprep.subr.mxu0 0.0
        %2065 = vmatpush1.msra.mxu0 0.0
        %2066 = vmatprep.subr.mxu0 0.0
        %2067 = vmatpush1.msra.mxu0 0.0
        %2068 = vmatprep.subr.mxu0 0.0
        %2069 = vmatpush1.msra.mxu0 0.0
        %2070 = vmatprep.subr.mxu0 0.0
        %2071 = vmatpush1.msra.mxu0 0.0
        %2072 = vmatprep.subr.mxu0 0.0
        %2073 = vmatpush1.msra.mxu0 0.0
        %2074 = vmatprep.subr.mxu0 0.0
        %2075 = vmatpush1.msra.mxu0 0.0
        %2076 = vmatprep.subr.mxu0 0.0
        %2077 = vmatpush1.msra.mxu0 0.0
        %2078 = vmatprep.subr.mxu0 0.0
        %2079 = vmatpush1.msra.mxu0 0.0
        %2080 = vmatprep.subr.mxu0 0.0
        %2081 = vmatpush1.msra.mxu0 0.0
        %2082 = vmatprep.subr.mxu0 0.0
        %2083 = vmatpush1.msra.mxu0 0.0
        %2084 = vmatprep.subr.mxu0 0.0
        %2085 = vmatpush1.msra.mxu0 0.0
        %2086 = vmatprep.subr.mxu0 0.0
        %2087 = vmatpush1.msra.mxu0 0.0
        %2088 = vmatprep.subr.mxu0 0.0
        %2089 = vmatpush1.msra.mxu0 0.0
        %2090 = vmatprep.subr.mxu0 0.0
        %2091 = vmatpush1.msra.mxu0 0.0
        %2092 = vmatprep.subr.mxu0 0.0
        %2093 = vmatpush1.msra.mxu0 0.0
        %2094 = vmatprep.subr.mxu0 0.0
        %2095 = vmatpush1.msra.mxu0 0.0
        %2096 = vmatprep.subr.mxu0 0.0
        %2097 = vmatpush1.msra.mxu0 0.0
        %2098 = vmatprep.subr.mxu0 0.0
        %2099 = vmatpush1.msra.mxu0 0.0
        %2100 = vmatprep.subr.mxu0 0.0
        %2101 = vmatpush1.msra.mxu0 0.0
        %2102 = vmatprep.subr.mxu0 0.0
        %2103 = vmatpush1.msra.mxu0 0.0
        %2104 = vmatprep.mubr.f32.mxu0 0.0
        %2105 = vmatmul.mubr.f32.gmra.mrb[0].mxu0 %v2028
        %v2106 = vpop.f32.mrb[0].mxu0
        %v2107 = vadd.f32 0.0, %v2106
        %v2108 = vpop.f32.mrb[0].mxu0
        %v2109 = vadd.f32 0.0, %v2108
        %2110 = vmatprep.mubr.f32.mxu0 0.0
        %2111 = vmatmul.mubr.f32.gmra.mrb[0].mxu0 %v2031
        %v2112 = vpop.f32.mrb[0].mxu0
        %v2113 = vadd.f32 0.0, %v2112
        %v2114 = vpop.f32.mrb[0].mxu0
        %v2115 = vadd.f32 0.0, %v2114
        %2116 = vmatprep.mubr.f32.mxu0 0.0
        %2117 = vmatmul.mubr.f32.gmra.mrb[0].mxu0 %v2034
        %v2118 = vpop.f32.mrb[0].mxu0
        %v2119 = vadd.f32 0.0, %v2118
        %v2120 = vpop.f32.mrb[0].mxu0
        %v2121 = vadd.f32 0.0, %v2120
        %2122 = vdwg.mxu0
        %v2124 = vsel %vm2026, %v2003, 0
        %v2127 = vsel %vm2026, %v2004, 0
        %v2130 = vsel %vm2026, %v2005, 0
        %v2132 = vsel %vm883, %v1996, 0
        %v2134 = vsel %vm883, %v2002, 0
        %2136 = vmatprep.subr.mxu0 %v2001
        %2137 = vmatpush1.msra.mxu0 %v1990
        %2138 = vmatprep.subr.mxu0 %v2134
        %2139 = vmatpush1.msra.mxu0 %v2132
        %2140 = vmatprep.subr.mxu0 0.0
        %2141 = vmatpush1.msra.mxu0 0.0
        %2142 = vmatprep.subr.mxu0 0.0
        %2143 = vmatpush1.msra.mxu0 0.0
        %2144 = vmatprep.subr.mxu0 0.0
        %2145 = vmatpush1.msra.mxu0 0.0
        %2146 = vmatprep.subr.mxu0 0.0
        %2147 = vmatpush1.msra.mxu0 0.0
        %2148 = vmatprep.subr.mxu0 0.0
        %2149 = vmatpush1.msra.mxu0 0.0
        %2150 = vmatprep.subr.mxu0 0.0
        %2151 = vmatpush1.msra.mxu0 0.0
        %2152 = vmatprep.subr.mxu0 0.0
        %2153 = vmatpush1.msra.mxu0 0.0
        %2154 = vmatprep.subr.mxu0 0.0
        %2155 = vmatpush1.msra.mxu0 0.0
        %2156 = vmatprep.subr.mxu0 0.0
        %2157 = vmatpush1.msra.mxu0 0.0
        %2158 = vmatprep.subr.mxu0 0.0
        %2159 = vmatpush1.msra.mxu0 0.0
        %2160 = vmatprep.subr.mxu0 0.0
        %2161 = vmatpush1.msra.mxu0 0.0
        %2162 = vmatprep.subr.mxu0 0.0
        %2163 = vmatpush1.msra.mxu0 0.0
        %2164 = vmatprep.subr.mxu0 0.0
        %2165 = vmatpush1.msra.mxu0 0.0
        %2166 = vmatprep.subr.mxu0 0.0
        %2167 = vmatpush1.msra.mxu0 0.0
        %2168 = vmatprep.subr.mxu0 0.0
        %2169 = vmatpush1.msra.mxu0 0.0
        %2170 = vmatprep.subr.mxu0 0.0
        %2171 = vmatpush1.msra.mxu0 0.0
        %2172 = vmatprep.subr.mxu0 0.0
        %2173 = vmatpush1.msra.mxu0 0.0
        %2174 = vmatprep.subr.mxu0 0.0
        %2175 = vmatpush1.msra.mxu0 0.0
        %2176 = vmatprep.subr.mxu0 0.0
        %2177 = vmatpush1.msra.mxu0 0.0
        %2178 = vmatprep.subr.mxu0 0.0
        %2179 = vmatpush1.msra.mxu0 0.0
        %2180 = vmatprep.subr.mxu0 0.0
        %2181 = vmatpush1.msra.mxu0 0.0
        %2182 = vmatprep.subr.mxu0 0.0
        %2183 = vmatpush1.msra.mxu0 0.0
        %2184 = vmatprep.subr.mxu0 0.0
        %2185 = vmatpush1.msra.mxu0 0.0
        %2186 = vmatprep.subr.mxu0 0.0
        %2187 = vmatpush1.msra.mxu0 0.0
        %2188 = vmatprep.subr.mxu0 0.0
        %2189 = vmatpush1.msra.mxu0 0.0
        %2190 = vmatprep.subr.mxu0 0.0
        %2191 = vmatpush1.msra.mxu0 0.0
        %2192 = vmatprep.subr.mxu0 0.0
        %2193 = vmatpush1.msra.mxu0 0.0
        %2194 = vmatprep.subr.mxu0 0.0
        %2195 = vmatpush1.msra.mxu0 0.0
        %2196 = vmatprep.subr.mxu0 0.0
        %2197 = vmatpush1.msra.mxu0 0.0
        %2198 = vmatprep.subr.mxu0 0.0
        %2199 = vmatpush1.msra.mxu0 0.0
        %2200 = vmatprep.mubr.f32.mxu0 0.0
        %2201 = vmatmul.mubr.f32.gmra.mrb[0].mxu0 %v2124
        %v2202 = vpop.f32.mrb[0].mxu0
        %v2203 = vadd.f32 %v2107, %v2202
        %v2204 = vpop.f32.mrb[0].mxu0
        %v2205 = vadd.f32 %v2109, %v2204
        %2206 = vmatprep.mubr.f32.mxu0 0.0
        %2207 = vmatmul.mubr.f32.gmra.mrb[0].mxu0 %v2127
        %v2208 = vpop.f32.mrb[0].mxu0
        %v2209 = vadd.f32 %v2113, %v2208
        %v2210 = vpop.f32.mrb[0].mxu0
        %v2211 = vadd.f32 %v2115, %v2210
        %2212 = vmatprep.mubr.f32.mxu0 0.0
        %2213 = vmatmul.mubr.f32.gmra.mrb[0].mxu0 %v2130
        %v2214 = vpop.f32.mrb[0].mxu0
        %v2215 = vadd.f32 %v2119, %v2214
        %v2216 = vpop.f32.mrb[0].mxu0
        %v2217 = vadd.f32 %v2121, %v2216
        %2218 = vdwg.mxu0
        %s2219 = scalar_lea.vmem %s4, 48
        %v2220 = vld [vmem:[%s2219] sm:$0xff]
        %v2221 = vld [vmem:[%s2219 + $0x8] sm:$0xff]
        %v2222 = vld [vmem:[%s2219 + $0x10] sm:$0xf]
        %2223 = vrot.lane.b32.xlu0 %v1990, 126
        %v2224 = vpop.permute.xlu0 %2223
        %2225 = vrot.lane.b32.xlu0 %v2001, 126
        %v2226 = vpop.permute.xlu0 %2225
        %2227 = vrot.lane.b32.xlu0 %v1996, 126
        %v2228 = vpop.permute.xlu0 %2227
        %2229 = vrot.lane.b32.xlu0 %v2002, 126
        %v2230 = vpop.permute.xlu0 %2229
        %v2231 = vsel %vm497, %v2224, %v2226
        %v2232 = vsel %vm497, %v2228, %v2230
        %v2236 = vsel %vm2026, %v2220, 0
        %v2239 = vsel %vm2026, %v2221, 0
        %v2242 = vsel %vm2026, %v2222, 0
        %v2244 = vsel %vm883, %v2232, 0
        %v2246 = vsel %vm883, %v2230, 0
        %2248 = vmatprep.subr.mxu0 %v2226
        %2249 = vmatpush1.msra.mxu0 %v2231
        %2250 = vmatprep.subr.mxu0 %v2246
        %2251 = vmatpush1.msra.mxu0 %v2244
        %2252 = vmatprep.subr.mxu0 0.0
        %2253 = vmatpush1.msra.mxu0 0.0
        %2254 = vmatprep.subr.mxu0 0.0
        %2255 = vmatpush1.msra.mxu0 0.0
        %2256 = vmatprep.subr.mxu0 0.0
        %2257 = vmatpush1.msra.mxu0 0.0
        %2258 = vmatprep.subr.mxu0 0.0
        %2259 = vmatpush1.msra.mxu0 0.0
        %2260 = vmatprep.subr.mxu0 0.0
        %2261 = vmatpush1.msra.mxu0 0.0
        %2262 = vmatprep.subr.mxu0 0.0
        %2263 = vmatpush1.msra.mxu0 0.0
        %2264 = vmatprep.subr.mxu0 0.0
        %2265 = vmatpush1.msra.mxu0 0.0
        %2266 = vmatprep.subr.mxu0 0.0
        %2267 = vmatpush1.msra.mxu0 0.0
        %2268 = vmatprep.subr.mxu0 0.0
        %2269 = vmatpush1.msra.mxu0 0.0
        %2270 = vmatprep.subr.mxu0 0.0
        %2271 = vmatpush1.msra.mxu0 0.0
        %2272 = vmatprep.subr.mxu0 0.0
        %2273 = vmatpush1.msra.mxu0 0.0
        %2274 = vmatprep.subr.mxu0 0.0
        %2275 = vmatpush1.msra.mxu0 0.0
        %2276 = vmatprep.subr.mxu0 0.0
        %2277 = vmatpush1.msra.mxu0 0.0
        %2278 = vmatprep.subr.mxu0 0.0
        %2279 = vmatpush1.msra.mxu0 0.0
        %2280 = vmatprep.subr.mxu0 0.0
        %2281 = vmatpush1.msra.mxu0 0.0
        %2282 = vmatprep.subr.mxu0 0.0
        %2283 = vmatpush1.msra.mxu0 0.0
        %2284 = vmatprep.subr.mxu0 0.0
        %2285 = vmatpush1.msra.mxu0 0.0
        %2286 = vmatprep.subr.mxu0 0.0
        %2287 = vmatpush1.msra.mxu0 0.0
        %2288 = vmatprep.subr.mxu0 0.0
        %2289 = vmatpush1.msra.mxu0 0.0
        %2290 = vmatprep.subr.mxu0 0.0
        %2291 = vmatpush1.msra.mxu0 0.0
        %2292 = vmatprep.subr.mxu0 0.0
        %2293 = vmatpush1.msra.mxu0 0.0
        %2294 = vmatprep.subr.mxu0 0.0
        %2295 = vmatpush1.msra.mxu0 0.0
        %2296 = vmatprep.subr.mxu0 0.0
        %2297 = vmatpush1.msra.mxu0 0.0
        %2298 = vmatprep.subr.mxu0 0.0
        %2299 = vmatpush1.msra.mxu0 0.0
        %2300 = vmatprep.subr.mxu0 0.0
        %2301 = vmatpush1.msra.mxu0 0.0
        %2302 = vmatprep.subr.mxu0 0.0
        %2303 = vmatpush1.msra.mxu0 0.0
        %2304 = vmatprep.subr.mxu0 0.0
        %2305 = vmatpush1.msra.mxu0 0.0
        %2306 = vmatprep.subr.mxu0 0.0
        %2307 = vmatpush1.msra.mxu0 0.0
        %2308 = vmatprep.subr.mxu0 0.0
        %2309 = vmatpush1.msra.mxu0 0.0
        %2310 = vmatprep.subr.mxu0 0.0
        %2311 = vmatpush1.msra.mxu0 0.0
        %2312 = vmatprep.mubr.f32.mxu0 0.0
        %2313 = vmatmul.mubr.f32.gmra.mrb[0].mxu0 %v2236
        %v2314 = vpop.f32.mrb[0].mxu0
        %v2315 = vadd.f32 0.0, %v2314
        %v2316 = vpop.f32.mrb[0].mxu0
        %v2317 = vadd.f32 0.0, %v2316
        %2318 = vmatprep.mubr.f32.mxu0 0.0
        %2319 = vmatmul.mubr.f32.gmra.mrb[0].mxu0 %v2239
        %v2320 = vpop.f32.mrb[0].mxu0
        %v2321 = vadd.f32 0.0, %v2320
        %v2322 = vpop.f32.mrb[0].mxu0
        %v2323 = vadd.f32 0.0, %v2322
        %2324 = vmatprep.mubr.f32.mxu0 0.0
        %2325 = vmatmul.mubr.f32.gmra.mrb[0].mxu0 %v2242
        %v2326 = vpop.f32.mrb[0].mxu0
        %v2327 = vadd.f32 0.0, %v2326
        %v2328 = vpop.f32.mrb[0].mxu0
        %v2329 = vadd.f32 0.0, %v2328
        %2330 = vdwg.mxu0
        %v2331 = vadd.f32 %v2203, %v2315
        %v2332 = vadd.f32 %v2205, %v2317
        %v2333 = vadd.f32 %v2209, %v2321
        %v2334 = vadd.f32 %v2211, %v2323
        %v2335 = vadd.f32 %v2215, %v2327
        %v2336 = vadd.f32 %v2217, %v2329
        %s2337 = scalar_lea.vmem %s4, 72
        %v2338 = vld [vmem:[%s2337] sm:$0xff]
        %v2339 = vld [vmem:[%s2337 + $0x8] sm:$0xff]
        %v2340 = vld [vmem:[%s2337 + $0x10] sm:$0xf]
        %2341 = vrot.lane.b32.xlu0 %v1990, 125
        %v2342 = vpop.permute.xlu0 %2341
        %2343 = vrot.lane.b32.xlu0 %v2001, 125
        %v2344 = vpop.permute.xlu0 %2343
        %2345 = vrot.lane.b32.xlu0 %v1996, 125
        %v2346 = vpop.permute.xlu0 %2345
        %2347 = vrot.lane.b32.xlu0 %v2002, 125
        %v2348 = vpop.permute.xlu0 %2347
        %v2349 = vsel %vm525, %v2342, %v2344
        %v2350 = vsel %vm525, %v2346, %v2348
        %v2354 = vsel %vm2026, %v2338, 0
        %v2357 = vsel %vm2026, %v2339, 0
        %v2360 = vsel %vm2026, %v2340, 0
        %v2362 = vsel %vm883, %v2350, 0
        %v2364 = vsel %vm883, %v2348, 0
        %2366 = vmatprep.subr.mxu0 %v2344
        %2367 = vmatpush1.msra.mxu0 %v2349
        %2368 = vmatprep.subr.mxu0 %v2364
        %2369 = vmatpush1.msra.mxu0 %v2362
        %2370 = vmatprep.subr.mxu0 0.0
        %2371 = vmatpush1.msra.mxu0 0.0
        %2372 = vmatprep.subr.mxu0 0.0
        %2373 = vmatpush1.msra.mxu0 0.0
        %2374 = vmatprep.subr.mxu0 0.0
        %2375 = vmatpush1.msra.mxu0 0.0
        %2376 = vmatprep.subr.mxu0 0.0
        %2377 = vmatpush1.msra.mxu0 0.0
        %2378 = vmatprep.subr.mxu0 0.0
        %2379 = vmatpush1.msra.mxu0 0.0
        %2380 = vmatprep.subr.mxu0 0.0
        %2381 = vmatpush1.msra.mxu0 0.0
        %2382 = vmatprep.subr.mxu0 0.0
        %2383 = vmatpush1.msra.mxu0 0.0
        %2384 = vmatprep.subr.mxu0 0.0
        %2385 = vmatpush1.msra.mxu0 0.0
        %2386 = vmatprep.subr.mxu0 0.0
        %2387 = vmatpush1.msra.mxu0 0.0
        %2388 = vmatprep.subr.mxu0 0.0
        %2389 = vmatpush1.msra.mxu0 0.0
        %2390 = vmatprep.subr.mxu0 0.0
        %2391 = vmatpush1.msra.mxu0 0.0
        %2392 = vmatprep.subr.mxu0 0.0
        %2393 = vmatpush1.msra.mxu0 0.0
        %2394 = vmatprep.subr.mxu0 0.0
        %2395 = vmatpush1.msra.mxu0 0.0
        %2396 = vmatprep.subr.mxu0 0.0
        %2397 = vmatpush1.msra.mxu0 0.0
        %2398 = vmatprep.subr.mxu0 0.0
        %2399 = vmatpush1.msra.mxu0 0.0
        %2400 = vmatprep.subr.mxu0 0.0
        %2401 = vmatpush1.msra.mxu0 0.0
        %2402 = vmatprep.subr.mxu0 0.0
        %2403 = vmatpush1.msra.mxu0 0.0
        %2404 = vmatprep.subr.mxu0 0.0
        %2405 = vmatpush1.msra.mxu0 0.0
        %2406 = vmatprep.subr.mxu0 0.0
        %2407 = vmatpush1.msra.mxu0 0.0
        %2408 = vmatprep.subr.mxu0 0.0
        %2409 = vmatpush1.msra.mxu0 0.0
        %2410 = vmatprep.subr.mxu0 0.0
        %2411 = vmatpush1.msra.mxu0 0.0
        %2412 = vmatprep.subr.mxu0 0.0
        %2413 = vmatpush1.msra.mxu0 0.0
        %2414 = vmatprep.subr.mxu0 0.0
        %2415 = vmatpush1.msra.mxu0 0.0
        %2416 = vmatprep.subr.mxu0 0.0
        %2417 = vmatpush1.msra.mxu0 0.0
        %2418 = vmatprep.subr.mxu0 0.0
        %2419 = vmatpush1.msra.mxu0 0.0
        %2420 = vmatprep.subr.mxu0 0.0
        %2421 = vmatpush1.msra.mxu0 0.0
        %2422 = vmatprep.subr.mxu0 0.0
        %2423 = vmatpush1.msra.mxu0 0.0
        %2424 = vmatprep.subr.mxu0 0.0
        %2425 = vmatpush1.msra.mxu0 0.0
        %2426 = vmatprep.subr.mxu0 0.0
        %2427 = vmatpush1.msra.mxu0 0.0
        %2428 = vmatprep.subr.mxu0 0.0
        %2429 = vmatpush1.msra.mxu0 0.0
        %2430 = vmatprep.mubr.f32.mxu0 0.0
        %2431 = vmatmul.mubr.f32.gmra.mrb[0].mxu0 %v2354
        %v2432 = vpop.f32.mrb[0].mxu0
        %v2433 = vadd.f32 0.0, %v2432
        %v2434 = vpop.f32.mrb[0].mxu0
        %v2435 = vadd.f32 0.0, %v2434
        %2436 = vmatprep.mubr.f32.mxu0 0.0
        %2437 = vmatmul.mubr.f32.gmra.mrb[0].mxu0 %v2357
        %v2438 = vpop.f32.mrb[0].mxu0
        %v2439 = vadd.f32 0.0, %v2438
        %v2440 = vpop.f32.mrb[0].mxu0
        %v2441 = vadd.f32 0.0, %v2440
        %2442 = vmatprep.mubr.f32.mxu0 0.0
        %2443 = vmatmul.mubr.f32.gmra.mrb[0].mxu0 %v2360
        %v2444 = vpop.f32.mrb[0].mxu0
        %v2445 = vadd.f32 0.0, %v2444
        %v2446 = vpop.f32.mrb[0].mxu0
        %v2447 = vadd.f32 0.0, %v2446
        %2448 = vdwg.mxu0
        %v2449 = vadd.f32 %v2331, %v2433
        %v2450 = vadd.f32 %v2332, %v2435
        %v2451 = vadd.f32 %v2333, %v2439
        %v2452 = vadd.f32 %v2334, %v2441
        %v2453 = vadd.f32 %v2335, %v2445
        %v2454 = vadd.f32 %v2336, %v2447
        %s2455 = scalar_lea.vmem %s4, 96
        %v2456 = vld [vmem:[%s2455] sm:$0xff]
        %v2457 = vld [vmem:[%s2455 + $0x8] sm:$0xff]
        %v2458 = vld [vmem:[%s2455 + $0x10] sm:$0xf]
        %2459 = vrot.lane.b32.xlu0 %v1990, 124
        %v2460 = vpop.permute.xlu0 %2459
        %2461 = vrot.lane.b32.xlu0 %v2001, 124
        %v2462 = vpop.permute.xlu0 %2461
        %2463 = vrot.lane.b32.xlu0 %v1996, 124
        %v2464 = vpop.permute.xlu0 %2463
        %2465 = vrot.lane.b32.xlu0 %v2002, 124
        %v2466 = vpop.permute.xlu0 %2465
        %v2467 = vsel %vm553, %v2460, %v2462
        %v2468 = vsel %vm553, %v2464, %v2466
        %v2472 = vsel %vm2026, %v2456, 0
        %v2475 = vsel %vm2026, %v2457, 0
        %v2478 = vsel %vm2026, %v2458, 0
        %v2480 = vsel %vm883, %v2468, 0
        %v2482 = vsel %vm883, %v2466, 0
        %2484 = vmatprep.subr.mxu0 %v2462
        %2485 = vmatpush1.msra.mxu0 %v2467
        %2486 = vmatprep.subr.mxu0 %v2482
        %2487 = vmatpush1.msra.mxu0 %v2480
        %2488 = vmatprep.subr.mxu0 0.0
        %2489 = vmatpush1.msra.mxu0 0.0
        %2490 = vmatprep.subr.mxu0 0.0
        %2491 = vmatpush1.msra.mxu0 0.0
        %2492 = vmatprep.subr.mxu0 0.0
        %2493 = vmatpush1.msra.mxu0 0.0
        %2494 = vmatprep.subr.mxu0 0.0
        %2495 = vmatpush1.msra.mxu0 0.0
        %2496 = vmatprep.subr.mxu0 0.0
        %2497 = vmatpush1.msra.mxu0 0.0
        %2498 = vmatprep.subr.mxu0 0.0
        %2499 = vmatpush1.msra.mxu0 0.0
        %2500 = vmatprep.subr.mxu0 0.0
        %2501 = vmatpush1.msra.mxu0 0.0
        %2502 = vmatprep.subr.mxu0 0.0
        %2503 = vmatpush1.msra.mxu0 0.0
        %2504 = vmatprep.subr.mxu0 0.0
        %2505 = vmatpush1.msra.mxu0 0.0
        %2506 = vmatprep.subr.mxu0 0.0
        %2507 = vmatpush1.msra.mxu0 0.0
        %2508 = vmatprep.subr.mxu0 0.0
        %2509 = vmatpush1.msra.mxu0 0.0
        %2510 = vmatprep.subr.mxu0 0.0
        %2511 = vmatpush1.msra.mxu0 0.0
        %2512 = vmatprep.subr.mxu0 0.0
        %2513 = vmatpush1.msra.mxu0 0.0
        %2514 = vmatprep.subr.mxu0 0.0
        %2515 = vmatpush1.msra.mxu0 0.0
        %2516 = vmatprep.subr.mxu0 0.0
        %2517 = vmatpush1.msra.mxu0 0.0
        %2518 = vmatprep.subr.mxu0 0.0
        %2519 = vmatpush1.msra.mxu0 0.0
        %2520 = vmatprep.subr.mxu0 0.0
        %2521 = vmatpush1.msra.mxu0 0.0
        %2522 = vmatprep.subr.mxu0 0.0
        %2523 = vmatpush1.msra.mxu0 0.0
        %2524 = vmatprep.subr.mxu0 0.0
        %2525 = vmatpush1.msra.mxu0 0.0
        %2526 = vmatprep.subr.mxu0 0.0
        %2527 = vmatpush1.msra.mxu0 0.0
        %2528 = vmatprep.subr.mxu0 0.0
        %2529 = vmatpush1.msra.mxu0 0.0
        %2530 = vmatprep.subr.mxu0 0.0
        %2531 = vmatpush1.msra.mxu0 0.0
        %2532 = vmatprep.subr.mxu0 0.0
        %2533 = vmatpush1.msra.mxu0 0.0
        %2534 = vmatprep.subr.mxu0 0.0
        %2535 = vmatpush1.msra.mxu0 0.0
        %2536 = vmatprep.subr.mxu0 0.0
        %2537 = vmatpush1.msra.mxu0 0.0
        %2538 = vmatprep.subr.mxu0 0.0
        %2539 = vmatpush1.msra.mxu0 0.0
        %2540 = vmatprep.subr.mxu0 0.0
        %2541 = vmatpush1.msra.mxu0 0.0
        %2542 = vmatprep.subr.mxu0 0.0
        %2543 = vmatpush1.msra.mxu0 0.0
        %2544 = vmatprep.subr.mxu0 0.0
        %2545 = vmatpush1.msra.mxu0 0.0
        %2546 = vmatprep.subr.mxu0 0.0
        %2547 = vmatpush1.msra.mxu0 0.0
        %2548 = vmatprep.mubr.f32.mxu0 0.0
        %2549 = vmatmul.mubr.f32.gmra.mrb[0].mxu0 %v2472
        %v2550 = vpop.f32.mrb[0].mxu0
        %v2551 = vadd.f32 0.0, %v2550
        %v2552 = vpop.f32.mrb[0].mxu0
        %v2553 = vadd.f32 0.0, %v2552
        %2554 = vmatprep.mubr.f32.mxu0 0.0
        %2555 = vmatmul.mubr.f32.gmra.mrb[0].mxu0 %v2475
        %v2556 = vpop.f32.mrb[0].mxu0
        %v2557 = vadd.f32 0.0, %v2556
        %v2558 = vpop.f32.mrb[0].mxu0
        %v2559 = vadd.f32 0.0, %v2558
        %2560 = vmatprep.mubr.f32.mxu0 0.0
        %2561 = vmatmul.mubr.f32.gmra.mrb[0].mxu0 %v2478
        %v2562 = vpop.f32.mrb[0].mxu0
        %v2563 = vadd.f32 0.0, %v2562
        %v2564 = vpop.f32.mrb[0].mxu0
        %v2565 = vadd.f32 0.0, %v2564
        %2566 = vdwg.mxu0
        %v2567 = vadd.f32 %v2449, %v2551
        %v2568 = vadd.f32 %v2450, %v2553
        %v2569 = vadd.f32 %v2451, %v2557
        %v2570 = vadd.f32 %v2452, %v2559
        %v2571 = vadd.f32 %v2453, %v2563
        %v2572 = vadd.f32 %v2454, %v2565
        %s2573 = scalar_lea.vmem %s4, 120
        %v2574 = vld [vmem:[%s2573] sm:$0xff]
        %v2575 = vld [vmem:[%s2573 + $0x8] sm:$0xff]
        %v2576 = vld [vmem:[%s2573 + $0x10] sm:$0xf]
        %2577 = vrot.lane.b32.xlu0 %v1990, 116
        %v2578 = vpop.permute.xlu0 %2577
        %2579 = vrot.lane.b32.xlu0 %v2001, 116
        %v2580 = vpop.permute.xlu0 %2579
        %2581 = vrot.lane.b32.xlu0 %v1996, 116
        %v2582 = vpop.permute.xlu0 %2581
        %2583 = vrot.lane.b32.xlu0 %v2002, 116
        %v2584 = vpop.permute.xlu0 %2583
        %vm2585 = vcmask 949248
        %v2586 = vsel %vm2585, %v2578, %v2580
        %v2587 = vsel %vm2585, %v2582, %v2584
        %v2591 = vsel %vm2026, %v2574, 0
        %v2594 = vsel %vm2026, %v2575, 0
        %v2597 = vsel %vm2026, %v2576, 0
        %v2599 = vsel %vm883, %v2587, 0
        %v2601 = vsel %vm883, %v2584, 0
        %2603 = vmatprep.subr.mxu0 %v2580
        %2604 = vmatpush1.msra.mxu0 %v2586
        %2605 = vmatprep.subr.mxu0 %v2601
        %2606 = vmatpush1.msra.mxu0 %v2599
        %2607 = vmatprep.subr.mxu0 0.0
        %2608 = vmatpush1.msra.mxu0 0.0
        %2609 = vmatprep.subr.mxu0 0.0
        %2610 = vmatpush1.msra.mxu0 0.0
        %2611 = vmatprep.subr.mxu0 0.0
        %2612 = vmatpush1.msra.mxu0 0.0
        %2613 = vmatprep.subr.mxu0 0.0
        %2614 = vmatpush1.msra.mxu0 0.0
        %2615 = vmatprep.subr.mxu0 0.0
        %2616 = vmatpush1.msra.mxu0 0.0
        %2617 = vmatprep.subr.mxu0 0.0
        %2618 = vmatpush1.msra.mxu0 0.0
        %2619 = vmatprep.subr.mxu0 0.0
        %2620 = vmatpush1.msra.mxu0 0.0
        %2621 = vmatprep.subr.mxu0 0.0
        %2622 = vmatpush1.msra.mxu0 0.0
        %2623 = vmatprep.subr.mxu0 0.0
        %2624 = vmatpush1.msra.mxu0 0.0
        %2625 = vmatprep.subr.mxu0 0.0
        %2626 = vmatpush1.msra.mxu0 0.0
        %2627 = vmatprep.subr.mxu0 0.0
        %2628 = vmatpush1.msra.mxu0 0.0
        %2629 = vmatprep.subr.mxu0 0.0
        %2630 = vmatpush1.msra.mxu0 0.0
        %2631 = vmatprep.subr.mxu0 0.0
        %2632 = vmatpush1.msra.mxu0 0.0
        %2633 = vmatprep.subr.mxu0 0.0
        %2634 = vmatpush1.msra.mxu0 0.0
        %2635 = vmatprep.subr.mxu0 0.0
        %2636 = vmatpush1.msra.mxu0 0.0
        %2637 = vmatprep.subr.mxu0 0.0
        %2638 = vmatpush1.msra.mxu0 0.0
        %2639 = vmatprep.subr.mxu0 0.0
        %2640 = vmatpush1.msra.mxu0 0.0
        %2641 = vmatprep.subr.mxu0 0.0
        %2642 = vmatpush1.msra.mxu0 0.0
        %2643 = vmatprep.subr.mxu0 0.0
        %2644 = vmatpush1.msra.mxu0 0.0
        %2645 = vmatprep.subr.mxu0 0.0
        %2646 = vmatpush1.msra.mxu0 0.0
        %2647 = vmatprep.subr.mxu0 0.0
        %2648 = vmatpush1.msra.mxu0 0.0
        %2649 = vmatprep.subr.mxu0 0.0
        %2650 = vmatpush1.msra.mxu0 0.0
        %2651 = vmatprep.subr.mxu0 0.0
        %2652 = vmatpush1.msra.mxu0 0.0
        %2653 = vmatprep.subr.mxu0 0.0
        %2654 = vmatpush1.msra.mxu0 0.0
        %2655 = vmatprep.subr.mxu0 0.0
        %2656 = vmatpush1.msra.mxu0 0.0
        %2657 = vmatprep.subr.mxu0 0.0
        %2658 = vmatpush1.msra.mxu0 0.0
        %2659 = vmatprep.subr.mxu0 0.0
        %2660 = vmatpush1.msra.mxu0 0.0
        %2661 = vmatprep.subr.mxu0 0.0
        %2662 = vmatpush1.msra.mxu0 0.0
        %2663 = vmatprep.subr.mxu0 0.0
        %2664 = vmatpush1.msra.mxu0 0.0
        %2665 = vmatprep.subr.mxu0 0.0
        %2666 = vmatpush1.msra.mxu0 0.0
        %2667 = vmatprep.mubr.f32.mxu0 0.0
        %2668 = vmatmul.mubr.f32.gmra.mrb[0].mxu0 %v2591
        %v2669 = vpop.f32.mrb[0].mxu0
        %v2670 = vadd.f32 0.0, %v2669
        %v2671 = vpop.f32.mrb[0].mxu0
        %v2672 = vadd.f32 0.0, %v2671
        %2673 = vmatprep.mubr.f32.mxu0 0.0
        %2674 = vmatmul.mubr.f32.gmra.mrb[0].mxu0 %v2594
        %v2675 = vpop.f32.mrb[0].mxu0
        %v2676 = vadd.f32 0.0, %v2675
        %v2677 = vpop.f32.mrb[0].mxu0
        %v2678 = vadd.f32 0.0, %v2677
        %2679 = vmatprep.mubr.f32.mxu0 0.0
        %2680 = vmatmul.mubr.f32.gmra.mrb[0].mxu0 %v2597
        %v2681 = vpop.f32.mrb[0].mxu0
        %v2682 = vadd.f32 0.0, %v2681
        %v2683 = vpop.f32.mrb[0].mxu0
        %v2684 = vadd.f32 0.0, %v2683
        %2685 = vdwg.mxu0
        %v2686 = vadd.f32 %v2567, %v2670
        %v2687 = vadd.f32 %v2568, %v2672
        %v2688 = vadd.f32 %v2569, %v2676
        %v2689 = vadd.f32 %v2570, %v2678
        %v2690 = vadd.f32 %v2571, %v2682
        %v2691 = vadd.f32 %v2572, %v2684
        %s2692 = scalar_lea.vmem %s4, 144
        %v2693 = vld [vmem:[%s2692] sm:$0xff]
        %v2694 = vld [vmem:[%s2692 + $0x8] sm:$0xff]
        %v2695 = vld [vmem:[%s2692 + $0x10] sm:$0xf]
        %2696 = vrot.lane.b32.xlu0 %v1990, 115
        %v2697 = vpop.permute.xlu0 %2696
        %2698 = vrot.lane.b32.xlu0 %v2001, 115
        %v2699 = vpop.permute.xlu0 %2698
        %2700 = vrot.lane.b32.xlu0 %v1996, 115
        %v2701 = vpop.permute.xlu0 %2700
        %2702 = vrot.lane.b32.xlu0 %v2002, 115
        %v2703 = vpop.permute.xlu0 %2702
        %vm2704 = vcmask 941056
        %v2705 = vsel %vm2704, %v2697, %v2699
        %v2706 = vsel %vm2704, %v2701, %v2703
        %v2710 = vsel %vm2026, %v2693, 0
        %v2713 = vsel %vm2026, %v2694, 0
        %v2716 = vsel %vm2026, %v2695, 0
        %v2718 = vsel %vm883, %v2706, 0
        %v2720 = vsel %vm883, %v2703, 0
        %2722 = vmatprep.subr.mxu0 %v2699
        %2723 = vmatpush1.msra.mxu0 %v2705
        %2724 = vmatprep.subr.mxu0 %v2720
        %2725 = vmatpush1.msra.mxu0 %v2718
        %2726 = vmatprep.subr.mxu0 0.0
        %2727 = vmatpush1.msra.mxu0 0.0
        %2728 = vmatprep.subr.mxu0 0.0
        %2729 = vmatpush1.msra.mxu0 0.0
        %2730 = vmatprep.subr.mxu0 0.0
        %2731 = vmatpush1.msra.mxu0 0.0
        %2732 = vmatprep.subr.mxu0 0.0
        %2733 = vmatpush1.msra.mxu0 0.0
        %2734 = vmatprep.subr.mxu0 0.0
        %2735 = vmatpush1.msra.mxu0 0.0
        %2736 = vmatprep.subr.mxu0 0.0
        %2737 = vmatpush1.msra.mxu0 0.0
        %2738 = vmatprep.subr.mxu0 0.0
        %2739 = vmatpush1.msra.mxu0 0.0
        %2740 = vmatprep.subr.mxu0 0.0
        %2741 = vmatpush1.msra.mxu0 0.0
        %2742 = vmatprep.subr.mxu0 0.0
        %2743 = vmatpush1.msra.mxu0 0.0
        %2744 = vmatprep.subr.mxu0 0.0
        %2745 = vmatpush1.msra.mxu0 0.0
        %2746 = vmatprep.subr.mxu0 0.0
        %2747 = vmatpush1.msra.mxu0 0.0
        %2748 = vmatprep.subr.mxu0 0.0
        %2749 = vmatpush1.msra.mxu0 0.0
        %2750 = vmatprep.subr.mxu0 0.0
        %2751 = vmatpush1.msra.mxu0 0.0
        %2752 = vmatprep.subr.mxu0 0.0
        %2753 = vmatpush1.msra.mxu0 0.0
        %2754 = vmatprep.subr.mxu0 0.0
        %2755 = vmatpush1.msra.mxu0 0.0
        %2756 = vmatprep.subr.mxu0 0.0
        %2757 = vmatpush1.msra.mxu0 0.0
        %2758 = vmatprep.subr.mxu0 0.0
        %2759 = vmatpush1.msra.mxu0 0.0
        %2760 = vmatprep.subr.mxu0 0.0
        %2761 = vmatpush1.msra.mxu0 0.0
        %2762 = vmatprep.subr.mxu0 0.0
        %2763 = vmatpush1.msra.mxu0 0.0
        %2764 = vmatprep.subr.mxu0 0.0
        %2765 = vmatpush1.msra.mxu0 0.0
        %2766 = vmatprep.subr.mxu0 0.0
        %2767 = vmatpush1.msra.mxu0 0.0
        %2768 = vmatprep.subr.mxu0 0.0
        %2769 = vmatpush1.msra.mxu0 0.0
        %2770 = vmatprep.subr.mxu0 0.0
        %2771 = vmatpush1.msra.mxu0 0.0
        %2772 = vmatprep.subr.mxu0 0.0
        %2773 = vmatpush1.msra.mxu0 0.0
        %2774 = vmatprep.subr.mxu0 0.0
        %2775 = vmatpush1.msra.mxu0 0.0
        %2776 = vmatprep.subr.mxu0 0.0
        %2777 = vmatpush1.msra.mxu0 0.0
        %2778 = vmatprep.subr.mxu0 0.0
        %2779 = vmatpush1.msra.mxu0 0.0
        %2780 = vmatprep.subr.mxu0 0.0
        %2781 = vmatpush1.msra.mxu0 0.0
        %2782 = vmatprep.subr.mxu0 0.0
        %2783 = vmatpush1.msra.mxu0 0.0
        %2784 = vmatprep.subr.mxu0 0.0
        %2785 = vmatpush1.msra.mxu0 0.0
        %2786 = vmatprep.mubr.f32.mxu0 0.0
        %2787 = vmatmul.mubr.f32.gmra.mrb[0].mxu0 %v2710
        %v2788 = vpop.f32.mrb[0].mxu0
        %v2789 = vadd.f32 0.0, %v2788
        %v2790 = vpop.f32.mrb[0].mxu0
        %v2791 = vadd.f32 0.0, %v2790
        %2792 = vmatprep.mubr.f32.mxu0 0.0
        %2793 = vmatmul.mubr.f32.gmra.mrb[0].mxu0 %v2713
        %v2794 = vpop.f32.mrb[0].mxu0
        %v2795 = vadd.f32 0.0, %v2794
        %v2796 = vpop.f32.mrb[0].mxu0
        %v2797 = vadd.f32 0.0, %v2796
        %2798 = vmatprep.mubr.f32.mxu0 0.0
        %2799 = vmatmul.mubr.f32.gmra.mrb[0].mxu0 %v2716
        %v2800 = vpop.f32.mrb[0].mxu0
        %v2801 = vadd.f32 0.0, %v2800
        %v2802 = vpop.f32.mrb[0].mxu0
        %v2803 = vadd.f32 0.0, %v2802
        %2804 = vdwg.mxu0
        %v2805 = vadd.f32 %v2686, %v2789
        %v2806 = vadd.f32 %v2687, %v2791
        %v2807 = vadd.f32 %v2688, %v2795
        %v2808 = vadd.f32 %v2689, %v2797
        %v2809 = vadd.f32 %v2690, %v2801
        %v2810 = vadd.f32 %v2691, %v2803
        %s2811 = scalar_lea.vmem %s4, 168
        %v2812 = vld [vmem:[%s2811] sm:$0xff]
        %v2813 = vld [vmem:[%s2811 + $0x8] sm:$0xff]
        %v2814 = vld [vmem:[%s2811 + $0x10] sm:$0xf]
        %2815 = vrot.lane.b32.xlu0 %v1990, 114
        %v2816 = vpop.permute.xlu0 %2815
        %2817 = vrot.lane.b32.xlu0 %v2001, 114
        %v2818 = vpop.permute.xlu0 %2817
        %2819 = vrot.lane.b32.xlu0 %v1996, 114
        %v2820 = vpop.permute.xlu0 %2819
        %2821 = vrot.lane.b32.xlu0 %v2002, 114
        %v2822 = vpop.permute.xlu0 %2821
        %vm2823 = vcmask 932864
        %v2824 = vsel %vm2823, %v2816, %v2818
        %v2825 = vsel %vm2823, %v2820, %v2822
        %v2829 = vsel %vm2026, %v2812, 0
        %v2832 = vsel %vm2026, %v2813, 0
        %v2835 = vsel %vm2026, %v2814, 0
        %v2837 = vsel %vm883, %v2825, 0
        %v2839 = vsel %vm883, %v2822, 0
        %2841 = vmatprep.subr.mxu0 %v2818
        %2842 = vmatpush1.msra.mxu0 %v2824
        %2843 = vmatprep.subr.mxu0 %v2839
        %2844 = vmatpush1.msra.mxu0 %v2837
        %2845 = vmatprep.subr.mxu0 0.0
        %2846 = vmatpush1.msra.mxu0 0.0
        %2847 = vmatprep.subr.mxu0 0.0
        %2848 = vmatpush1.msra.mxu0 0.0
        %2849 = vmatprep.subr.mxu0 0.0
        %2850 = vmatpush1.msra.mxu0 0.0
        %2851 = vmatprep.subr.mxu0 0.0
        %2852 = vmatpush1.msra.mxu0 0.0
        %2853 = vmatprep.subr.mxu0 0.0
        %2854 = vmatpush1.msra.mxu0 0.0
        %2855 = vmatprep.subr.mxu0 0.0
        %2856 = vmatpush1.msra.mxu0 0.0
        %2857 = vmatprep.subr.mxu0 0.0
        %2858 = vmatpush1.msra.mxu0 0.0
        %2859 = vmatprep.subr.mxu0 0.0
        %2860 = vmatpush1.msra.mxu0 0.0
        %2861 = vmatprep.subr.mxu0 0.0
        %2862 = vmatpush1.msra.mxu0 0.0
        %2863 = vmatprep.subr.mxu0 0.0
        %2864 = vmatpush1.msra.mxu0 0.0
        %2865 = vmatprep.subr.mxu0 0.0
        %2866 = vmatpush1.msra.mxu0 0.0
        %2867 = vmatprep.subr.mxu0 0.0
        %2868 = vmatpush1.msra.mxu0 0.0
        %2869 = vmatprep.subr.mxu0 0.0
        %2870 = vmatpush1.msra.mxu0 0.0
        %2871 = vmatprep.subr.mxu0 0.0
        %2872 = vmatpush1.msra.mxu0 0.0
        %2873 = vmatprep.subr.mxu0 0.0
        %2874 = vmatpush1.msra.mxu0 0.0
        %2875 = vmatprep.subr.mxu0 0.0
        %2876 = vmatpush1.msra.mxu0 0.0
        %2877 = vmatprep.subr.mxu0 0.0
        %2878 = vmatpush1.msra.mxu0 0.0
        %2879 = vmatprep.subr.mxu0 0.0
        %2880 = vmatpush1.msra.mxu0 0.0
        %2881 = vmatprep.subr.mxu0 0.0
        %2882 = vmatpush1.msra.mxu0 0.0
        %2883 = vmatprep.subr.mxu0 0.0
        %2884 = vmatpush1.msra.mxu0 0.0
        %2885 = vmatprep.subr.mxu0 0.0
        %2886 = vmatpush1.msra.mxu0 0.0
        %2887 = vmatprep.subr.mxu0 0.0
        %2888 = vmatpush1.msra.mxu0 0.0
        %2889 = vmatprep.subr.mxu0 0.0
        %2890 = vmatpush1.msra.mxu0 0.0
        %2891 = vmatprep.subr.mxu0 0.0
        %2892 = vmatpush1.msra.mxu0 0.0
        %2893 = vmatprep.subr.mxu0 0.0
        %2894 = vmatpush1.msra.mxu0 0.0
        %2895 = vmatprep.subr.mxu0 0.0
        %2896 = vmatpush1.msra.mxu0 0.0
        %2897 = vmatprep.subr.mxu0 0.0
        %2898 = vmatpush1.msra.mxu0 0.0
        %2899 = vmatprep.subr.mxu0 0.0
        %2900 = vmatpush1.msra.mxu0 0.0
        %2901 = vmatprep.subr.mxu0 0.0
        %2902 = vmatpush1.msra.mxu0 0.0
        %2903 = vmatprep.subr.mxu0 0.0
        %2904 = vmatpush1.msra.mxu0 0.0
        %2905 = vmatprep.mubr.f32.mxu0 0.0
        %2906 = vmatmul.mubr.f32.gmra.mrb[0].mxu0 %v2829
        %v2907 = vpop.f32.mrb[0].mxu0
        %v2908 = vadd.f32 0.0, %v2907
        %v2909 = vpop.f32.mrb[0].mxu0
        %v2910 = vadd.f32 0.0, %v2909
        %2911 = vmatprep.mubr.f32.mxu0 0.0
        %2912 = vmatmul.mubr.f32.gmra.mrb[0].mxu0 %v2832
        %v2913 = vpop.f32.mrb[0].mxu0
        %v2914 = vadd.f32 0.0, %v2913
        %v2915 = vpop.f32.mrb[0].mxu0
        %v2916 = vadd.f32 0.0, %v2915
        %2917 = vmatprep.mubr.f32.mxu0 0.0
        %2918 = vmatmul.mubr.f32.gmra.mrb[0].mxu0 %v2835
        %v2919 = vpop.f32.mrb[0].mxu0
        %v2920 = vadd.f32 0.0, %v2919
        %v2921 = vpop.f32.mrb[0].mxu0
        %v2922 = vadd.f32 0.0, %v2921
        %2923 = vdwg.mxu0
        %v2924 = vadd.f32 %v2805, %v2908
        %v2925 = vadd.f32 %v2806, %v2910
        %v2926 = vadd.f32 %v2807, %v2914
        %v2927 = vadd.f32 %v2808, %v2916
        %v2928 = vadd.f32 %v2809, %v2920
        %v2929 = vadd.f32 %v2810, %v2922
        %s2930 = scalar_lea.vmem %s4, 192
        %v2931 = vld [vmem:[%s2930] sm:$0xff]
        %v2932 = vld [vmem:[%s2930 + $0x8] sm:$0xff]
        %v2933 = vld [vmem:[%s2930 + $0x10] sm:$0xf]
        %2934 = vrot.lane.b32.xlu0 %v1990, 113
        %v2935 = vpop.permute.xlu0 %2934
        %2936 = vrot.lane.b32.xlu0 %v2001, 113
        %v2937 = vpop.permute.xlu0 %2936
        %2938 = vrot.lane.b32.xlu0 %v1996, 113
        %v2939 = vpop.permute.xlu0 %2938
        %2940 = vrot.lane.b32.xlu0 %v2002, 113
        %v2941 = vpop.permute.xlu0 %2940
        %vm2942 = vcmask 924672
        %v2943 = vsel %vm2942, %v2935, %v2937
        %v2944 = vsel %vm2942, %v2939, %v2941
        %v2948 = vsel %vm2026, %v2931, 0
        %v2951 = vsel %vm2026, %v2932, 0
        %v2954 = vsel %vm2026, %v2933, 0
        %v2956 = vsel %vm883, %v2944, 0
        %v2958 = vsel %vm883, %v2941, 0
        %2960 = vmatprep.subr.mxu0 %v2937
        %2961 = vmatpush1.msra.mxu0 %v2943
        %2962 = vmatprep.subr.mxu0 %v2958
        %2963 = vmatpush1.msra.mxu0 %v2956
        %2964 = vmatprep.subr.mxu0 0.0
        %2965 = vmatpush1.msra.mxu0 0.0
        %2966 = vmatprep.subr.mxu0 0.0
        %2967 = vmatpush1.msra.mxu0 0.0
        %2968 = vmatprep.subr.mxu0 0.0
        %2969 = vmatpush1.msra.mxu0 0.0
        %2970 = vmatprep.subr.mxu0 0.0
        %2971 = vmatpush1.msra.mxu0 0.0
        %2972 = vmatprep.subr.mxu0 0.0
        %2973 = vmatpush1.msra.mxu0 0.0
        %2974 = vmatprep.subr.mxu0 0.0
        %2975 = vmatpush1.msra.mxu0 0.0
        %2976 = vmatprep.subr.mxu0 0.0
        %2977 = vmatpush1.msra.mxu0 0.0
        %2978 = vmatprep.subr.mxu0 0.0
        %2979 = vmatpush1.msra.mxu0 0.0
        %2980 = vmatprep.subr.mxu0 0.0
        %2981 = vmatpush1.msra.mxu0 0.0
        %2982 = vmatprep.subr.mxu0 0.0
        %2983 = vmatpush1.msra.mxu0 0.0
        %2984 = vmatprep.subr.mxu0 0.0
        %2985 = vmatpush1.msra.mxu0 0.0
        %2986 = vmatprep.subr.mxu0 0.0
        %2987 = vmatpush1.msra.mxu0 0.0
        %2988 = vmatprep.subr.mxu0 0.0
        %2989 = vmatpush1.msra.mxu0 0.0
        %2990 = vmatprep.subr.mxu0 0.0
        %2991 = vmatpush1.msra.mxu0 0.0
        %2992 = vmatprep.subr.mxu0 0.0
        %2993 = vmatpush1.msra.mxu0 0.0
        %2994 = vmatprep.subr.mxu0 0.0
        %2995 = vmatpush1.msra.mxu0 0.0
        %2996 = vmatprep.subr.mxu0 0.0
        %2997 = vmatpush1.msra.mxu0 0.0
        %2998 = vmatprep.subr.mxu0 0.0
        %2999 = vmatpush1.msra.mxu0 0.0
        %3000 = vmatprep.subr.mxu0 0.0
        %3001 = vmatpush1.msra.mxu0 0.0
        %3002 = vmatprep.subr.mxu0 0.0
        %3003 = vmatpush1.msra.mxu0 0.0
        %3004 = vmatprep.subr.mxu0 0.0
        %3005 = vmatpush1.msra.mxu0 0.0
        %3006 = vmatprep.subr.mxu0 0.0
        %3007 = vmatpush1.msra.mxu0 0.0
        %3008 = vmatprep.subr.mxu0 0.0
        %3009 = vmatpush1.msra.mxu0 0.0
        %3010 = vmatprep.subr.mxu0 0.0
        %3011 = vmatpush1.msra.mxu0 0.0
        %3012 = vmatprep.subr.mxu0 0.0
        %3013 = vmatpush1.msra.mxu0 0.0
        %3014 = vmatprep.subr.mxu0 0.0
        %3015 = vmatpush1.msra.mxu0 0.0
        %3016 = vmatprep.subr.mxu0 0.0
        %3017 = vmatpush1.msra.mxu0 0.0
        %3018 = vmatprep.subr.mxu0 0.0
        %3019 = vmatpush1.msra.mxu0 0.0
        %3020 = vmatprep.subr.mxu0 0.0
        %3021 = vmatpush1.msra.mxu0 0.0
        %3022 = vmatprep.subr.mxu0 0.0
        %3023 = vmatpush1.msra.mxu0 0.0
        %3024 = vmatprep.mubr.f32.mxu0 0.0
        %3025 = vmatmul.mubr.f32.gmra.mrb[0].mxu0 %v2948
        %v3026 = vpop.f32.mrb[0].mxu0
        %v3027 = vadd.f32 0.0, %v3026
        %v3028 = vpop.f32.mrb[0].mxu0
        %v3029 = vadd.f32 0.0, %v3028
        %3030 = vmatprep.mubr.f32.mxu0 0.0
        %3031 = vmatmul.mubr.f32.gmra.mrb[0].mxu0 %v2951
        %v3032 = vpop.f32.mrb[0].mxu0
        %v3033 = vadd.f32 0.0, %v3032
        %v3034 = vpop.f32.mrb[0].mxu0
        %v3035 = vadd.f32 0.0, %v3034
        %3036 = vmatprep.mubr.f32.mxu0 0.0
        %3037 = vmatmul.mubr.f32.gmra.mrb[0].mxu0 %v2954
        %v3038 = vpop.f32.mrb[0].mxu0
        %v3039 = vadd.f32 0.0, %v3038
        %v3040 = vpop.f32.mrb[0].mxu0
        %v3041 = vadd.f32 0.0, %v3040
        %3042 = vdwg.mxu0
        %v3043 = vadd.f32 %v2924, %v3027
        %v3044 = vadd.f32 %v2925, %v3029
        %v3045 = vadd.f32 %v2926, %v3033
        %v3046 = vadd.f32 %v2927, %v3035
        %v3047 = vadd.f32 %v2928, %v3039
        %v3048 = vadd.f32 %v2929, %v3041
        %s3049 = scalar_lea.vmem %s4, 216
        %v3050 = vld [vmem:[%s3049] sm:$0xff]
        %v3051 = vld [vmem:[%s3049 + $0x8] sm:$0xff]
        %v3052 = vld [vmem:[%s3049 + $0x10] sm:$0xf]
        %3053 = vrot.lane.b32.xlu0 %v1990, 112
        %v3054 = vpop.permute.xlu0 %3053
        %3055 = vrot.lane.b32.xlu0 %v2001, 112
        %v3056 = vpop.permute.xlu0 %3055
        %3057 = vrot.lane.b32.xlu0 %v1996, 112
        %v3058 = vpop.permute.xlu0 %3057
        %3059 = vrot.lane.b32.xlu0 %v2002, 112
        %v3060 = vpop.permute.xlu0 %3059
        %vm3061 = vcmask 916480
        %v3062 = vsel %vm3061, %v3054, %v3056
        %v3063 = vsel %vm3061, %v3058, %v3060
        %v3067 = vsel %vm2026, %v3050, 0
        %v3070 = vsel %vm2026, %v3051, 0
        %v3073 = vsel %vm2026, %v3052, 0
        %v3075 = vsel %vm883, %v3063, 0
        %v3077 = vsel %vm883, %v3060, 0
        %3079 = vmatprep.subr.mxu0 %v3056
        %3080 = vmatpush1.msra.mxu0 %v3062
        %3081 = vmatprep.subr.mxu0 %v3077
        %3082 = vmatpush1.msra.mxu0 %v3075
        %3083 = vmatprep.subr.mxu0 0.0
        %3084 = vmatpush1.msra.mxu0 0.0
        %3085 = vmatprep.subr.mxu0 0.0
        %3086 = vmatpush1.msra.mxu0 0.0
        %3087 = vmatprep.subr.mxu0 0.0
        %3088 = vmatpush1.msra.mxu0 0.0
        %3089 = vmatprep.subr.mxu0 0.0
        %3090 = vmatpush1.msra.mxu0 0.0
        %3091 = vmatprep.subr.mxu0 0.0
        %3092 = vmatpush1.msra.mxu0 0.0
        %3093 = vmatprep.subr.mxu0 0.0
        %3094 = vmatpush1.msra.mxu0 0.0
        %3095 = vmatprep.subr.mxu0 0.0
        %3096 = vmatpush1.msra.mxu0 0.0
        %3097 = vmatprep.subr.mxu0 0.0
        %3098 = vmatpush1.msra.mxu0 0.0
        %3099 = vmatprep.subr.mxu0 0.0
        %3100 = vmatpush1.msra.mxu0 0.0
        %3101 = vmatprep.subr.mxu0 0.0
        %3102 = vmatpush1.msra.mxu0 0.0
        %3103 = vmatprep.subr.mxu0 0.0
        %3104 = vmatpush1.msra.mxu0 0.0
        %3105 = vmatprep.subr.mxu0 0.0
        %3106 = vmatpush1.msra.mxu0 0.0
        %3107 = vmatprep.subr.mxu0 0.0
        %3108 = vmatpush1.msra.mxu0 0.0
        %3109 = vmatprep.subr.mxu0 0.0
        %3110 = vmatpush1.msra.mxu0 0.0
        %3111 = vmatprep.subr.mxu0 0.0
        %3112 = vmatpush1.msra.mxu0 0.0
        %3113 = vmatprep.subr.mxu0 0.0
        %3114 = vmatpush1.msra.mxu0 0.0
        %3115 = vmatprep.subr.mxu0 0.0
        %3116 = vmatpush1.msra.mxu0 0.0
        %3117 = vmatprep.subr.mxu0 0.0
        %3118 = vmatpush1.msra.mxu0 0.0
        %3119 = vmatprep.subr.mxu0 0.0
        %3120 = vmatpush1.msra.mxu0 0.0
        %3121 = vmatprep.subr.mxu0 0.0
        %3122 = vmatpush1.msra.mxu0 0.0
        %3123 = vmatprep.subr.mxu0 0.0
        %3124 = vmatpush1.msra.mxu0 0.0
        %3125 = vmatprep.subr.mxu0 0.0
        %3126 = vmatpush1.msra.mxu0 0.0
        %3127 = vmatprep.subr.mxu0 0.0
        %3128 = vmatpush1.msra.mxu0 0.0
        %3129 = vmatprep.subr.mxu0 0.0
        %3130 = vmatpush1.msra.mxu0 0.0
        %3131 = vmatprep.subr.mxu0 0.0
        %3132 = vmatpush1.msra.mxu0 0.0
        %3133 = vmatprep.subr.mxu0 0.0
        %3134 = vmatpush1.msra.mxu0 0.0
        %3135 = vmatprep.subr.mxu0 0.0
        %3136 = vmatpush1.msra.mxu0 0.0
        %3137 = vmatprep.subr.mxu0 0.0
        %3138 = vmatpush1.msra.mxu0 0.0
        %3139 = vmatprep.subr.mxu0 0.0
        %3140 = vmatpush1.msra.mxu0 0.0
        %3141 = vmatprep.subr.mxu0 0.0
        %3142 = vmatpush1.msra.mxu0 0.0
        %3143 = vmatprep.mubr.f32.mxu0 0.0
        %3144 = vmatmul.mubr.f32.gmra.mrb[0].mxu0 %v3067
        %v3145 = vpop.f32.mrb[0].mxu0
        %v3146 = vadd.f32 0.0, %v3145
        %v3147 = vpop.f32.mrb[0].mxu0
        %v3148 = vadd.f32 0.0, %v3147
        %3149 = vmatprep.mubr.f32.mxu0 0.0
        %3150 = vmatmul.mubr.f32.gmra.mrb[0].mxu0 %v3070
        %v3151 = vpop.f32.mrb[0].mxu0
        %v3152 = vadd.f32 0.0, %v3151
        %v3153 = vpop.f32.mrb[0].mxu0
        %v3154 = vadd.f32 0.0, %v3153
        %3155 = vmatprep.mubr.f32.mxu0 0.0
        %3156 = vmatmul.mubr.f32.gmra.mrb[0].mxu0 %v3073
        %v3157 = vpop.f32.mrb[0].mxu0
        %v3158 = vadd.f32 0.0, %v3157
        %v3159 = vpop.f32.mrb[0].mxu0
        %v3160 = vadd.f32 0.0, %v3159
        %3161 = vdwg.mxu0
        %v3162 = vadd.f32 %v3043, %v3146
        %v3163 = vadd.f32 %v3044, %v3148
        %v3164 = vadd.f32 %v3045, %v3152
        %v3165 = vadd.f32 %v3046, %v3154
        %v3166 = vadd.f32 %v3047, %v3158
        %v3167 = vadd.f32 %v3048, %v3160
        %s3168 = scalar_lea.vmem %s4, 240
        %v3169 = vld [vmem:[%s3168] sm:$0xff]
        %v3170 = vld [vmem:[%s3168 + $0x8] sm:$0xff]
        %v3171 = vld [vmem:[%s3168 + $0x10] sm:$0xf]
        %3172 = vrot.lane.b32.xlu0 %v1990, 104
        %v3173 = vpop.permute.xlu0 %3172
        %3174 = vrot.lane.b32.xlu0 %v2001, 104
        %v3175 = vpop.permute.xlu0 %3174
        %3176 = vrot.lane.b32.xlu0 %v1996, 104
        %v3177 = vpop.permute.xlu0 %3176
        %3178 = vrot.lane.b32.xlu0 %v2002, 104
        %v3179 = vpop.permute.xlu0 %3178
        %vm3180 = vcmask 850944
        %v3181 = vsel %vm3180, %v3173, %v3175
        %v3182 = vsel %vm3180, %v3177, %v3179
        %v3186 = vsel %vm2026, %v3169, 0
        %v3189 = vsel %vm2026, %v3170, 0
        %v3192 = vsel %vm2026, %v3171, 0
        %v3194 = vsel %vm883, %v3182, 0
        %v3196 = vsel %vm883, %v3179, 0
        %3198 = vmatprep.subr.mxu0 %v3175
        %3199 = vmatpush1.msra.mxu0 %v3181
        %3200 = vmatprep.subr.mxu0 %v3196
        %3201 = vmatpush1.msra.mxu0 %v3194
        %3202 = vmatprep.subr.mxu0 0.0
        %3203 = vmatpush1.msra.mxu0 0.0
        %3204 = vmatprep.subr.mxu0 0.0
        %3205 = vmatpush1.msra.mxu0 0.0
        %3206 = vmatprep.subr.mxu0 0.0
        %3207 = vmatpush1.msra.mxu0 0.0
        %3208 = vmatprep.subr.mxu0 0.0
        %3209 = vmatpush1.msra.mxu0 0.0
        %3210 = vmatprep.subr.mxu0 0.0
        %3211 = vmatpush1.msra.mxu0 0.0
        %3212 = vmatprep.subr.mxu0 0.0
        %3213 = vmatpush1.msra.mxu0 0.0
        %3214 = vmatprep.subr.mxu0 0.0
        %3215 = vmatpush1.msra.mxu0 0.0
        %3216 = vmatprep.subr.mxu0 0.0
        %3217 = vmatpush1.msra.mxu0 0.0
        %3218 = vmatprep.subr.mxu0 0.0
        %3219 = vmatpush1.msra.mxu0 0.0
        %3220 = vmatprep.subr.mxu0 0.0
        %3221 = vmatpush1.msra.mxu0 0.0
        %3222 = vmatprep.subr.mxu0 0.0
        %3223 = vmatpush1.msra.mxu0 0.0
        %3224 = vmatprep.subr.mxu0 0.0
        %3225 = vmatpush1.msra.mxu0 0.0
        %3226 = vmatprep.subr.mxu0 0.0
        %3227 = vmatpush1.msra.mxu0 0.0
        %3228 = vmatprep.subr.mxu0 0.0
        %3229 = vmatpush1.msra.mxu0 0.0
        %3230 = vmatprep.subr.mxu0 0.0
        %3231 = vmatpush1.msra.mxu0 0.0
        %3232 = vmatprep.subr.mxu0 0.0
        %3233 = vmatpush1.msra.mxu0 0.0
        %3234 = vmatprep.subr.mxu0 0.0
        %3235 = vmatpush1.msra.mxu0 0.0
        %3236 = vmatprep.subr.mxu0 0.0
        %3237 = vmatpush1.msra.mxu0 0.0
        %3238 = vmatprep.subr.mxu0 0.0
        %3239 = vmatpush1.msra.mxu0 0.0
        %3240 = vmatprep.subr.mxu0 0.0
        %3241 = vmatpush1.msra.mxu0 0.0
        %3242 = vmatprep.subr.mxu0 0.0
        %3243 = vmatpush1.msra.mxu0 0.0
        %3244 = vmatprep.subr.mxu0 0.0
        %3245 = vmatpush1.msra.mxu0 0.0
        %3246 = vmatprep.subr.mxu0 0.0
        %3247 = vmatpush1.msra.mxu0 0.0
        %3248 = vmatprep.subr.mxu0 0.0
        %3249 = vmatpush1.msra.mxu0 0.0
        %3250 = vmatprep.subr.mxu0 0.0
        %3251 = vmatpush1.msra.mxu0 0.0
        %3252 = vmatprep.subr.mxu0 0.0
        %3253 = vmatpush1.msra.mxu0 0.0
        %3254 = vmatprep.subr.mxu0 0.0
        %3255 = vmatpush1.msra.mxu0 0.0
        %3256 = vmatprep.subr.mxu0 0.0
        %3257 = vmatpush1.msra.mxu0 0.0
        %3258 = vmatprep.subr.mxu0 0.0
        %3259 = vmatpush1.msra.mxu0 0.0
        %3260 = vmatprep.subr.mxu0 0.0
        %3261 = vmatpush1.msra.mxu0 0.0
        %3262 = vmatprep.mubr.f32.mxu0 0.0
        %3263 = vmatmul.mubr.f32.gmra.mrb[0].mxu0 %v3186
        %v3264 = vpop.f32.mrb[0].mxu0
        %v3265 = vadd.f32 0.0, %v3264
        %v3266 = vpop.f32.mrb[0].mxu0
        %v3267 = vadd.f32 0.0, %v3266
        %3268 = vmatprep.mubr.f32.mxu0 0.0
        %3269 = vmatmul.mubr.f32.gmra.mrb[0].mxu0 %v3189
        %v3270 = vpop.f32.mrb[0].mxu0
        %v3271 = vadd.f32 0.0, %v3270
        %v3272 = vpop.f32.mrb[0].mxu0
        %v3273 = vadd.f32 0.0, %v3272
        %3274 = vmatprep.mubr.f32.mxu0 0.0
        %3275 = vmatmul.mubr.f32.gmra.mrb[0].mxu0 %v3192
        %v3276 = vpop.f32.mrb[0].mxu0
        %v3277 = vadd.f32 0.0, %v3276
        %v3278 = vpop.f32.mrb[0].mxu0
        %v3279 = vadd.f32 0.0, %v3278
        %3280 = vdwg.mxu0
        %v3281 = vadd.f32 %v3162, %v3265
        %v3282 = vadd.f32 %v3163, %v3267
        %v3283 = vadd.f32 %v3164, %v3271
        %v3284 = vadd.f32 %v3165, %v3273
        %v3285 = vadd.f32 %v3166, %v3277
        %v3286 = vadd.f32 %v3167, %v3279
        %s3287 = scalar_lea.vmem %s4, 264
        %v3288 = vld [vmem:[%s3287] sm:$0xff]
        %v3289 = vld [vmem:[%s3287 + $0x8] sm:$0xff]
        %v3290 = vld [vmem:[%s3287 + $0x10] sm:$0xf]
        %3291 = vrot.lane.b32.xlu0 %v1990, 103
        %v3292 = vpop.permute.xlu0 %3291
        %3293 = vrot.lane.b32.xlu0 %v2001, 103
        %v3294 = vpop.permute.xlu0 %3293
        %3295 = vrot.lane.b32.xlu0 %v1996, 103
        %v3296 = vpop.permute.xlu0 %3295
        %3297 = vrot.lane.b32.xlu0 %v2002, 103
        %v3298 = vpop.permute.xlu0 %3297
        %vm3299 = vcmask 842752
        %v3300 = vsel %vm3299, %v3292, %v3294
        %v3301 = vsel %vm3299, %v3296, %v3298
        %v3305 = vsel %vm2026, %v3288, 0
        %v3308 = vsel %vm2026, %v3289, 0
        %v3311 = vsel %vm2026, %v3290, 0
        %v3313 = vsel %vm883, %v3301, 0
        %v3315 = vsel %vm883, %v3298, 0
        %3317 = vmatprep.subr.mxu0 %v3294
        %3318 = vmatpush1.msra.mxu0 %v3300
        %3319 = vmatprep.subr.mxu0 %v3315
        %3320 = vmatpush1.msra.mxu0 %v3313
        %3321 = vmatprep.subr.mxu0 0.0
        %3322 = vmatpush1.msra.mxu0 0.0
        %3323 = vmatprep.subr.mxu0 0.0
        %3324 = vmatpush1.msra.mxu0 0.0
        %3325 = vmatprep.subr.mxu0 0.0
        %3326 = vmatpush1.msra.mxu0 0.0
        %3327 = vmatprep.subr.mxu0 0.0
        %3328 = vmatpush1.msra.mxu0 0.0
        %3329 = vmatprep.subr.mxu0 0.0
        %3330 = vmatpush1.msra.mxu0 0.0
        %3331 = vmatprep.subr.mxu0 0.0
        %3332 = vmatpush1.msra.mxu0 0.0
        %3333 = vmatprep.subr.mxu0 0.0
        %3334 = vmatpush1.msra.mxu0 0.0
        %3335 = vmatprep.subr.mxu0 0.0
        %3336 = vmatpush1.msra.mxu0 0.0
        %3337 = vmatprep.subr.mxu0 0.0
        %3338 = vmatpush1.msra.mxu0 0.0
        %3339 = vmatprep.subr.mxu0 0.0
        %3340 = vmatpush1.msra.mxu0 0.0
        %3341 = vmatprep.subr.mxu0 0.0
        %3342 = vmatpush1.msra.mxu0 0.0
        %3343 = vmatprep.subr.mxu0 0.0
        %3344 = vmatpush1.msra.mxu0 0.0
        %3345 = vmatprep.subr.mxu0 0.0
        %3346 = vmatpush1.msra.mxu0 0.0
        %3347 = vmatprep.subr.mxu0 0.0
        %3348 = vmatpush1.msra.mxu0 0.0
        %3349 = vmatprep.subr.mxu0 0.0
        %3350 = vmatpush1.msra.mxu0 0.0
        %3351 = vmatprep.subr.mxu0 0.0
        %3352 = vmatpush1.msra.mxu0 0.0
        %3353 = vmatprep.subr.mxu0 0.0
        %3354 = vmatpush1.msra.mxu0 0.0
        %3355 = vmatprep.subr.mxu0 0.0
        %3356 = vmatpush1.msra.mxu0 0.0
        %3357 = vmatprep.subr.mxu0 0.0
        %3358 = vmatpush1.msra.mxu0 0.0
        %3359 = vmatprep.subr.mxu0 0.0
        %3360 = vmatpush1.msra.mxu0 0.0
        %3361 = vmatprep.subr.mxu0 0.0
        %3362 = vmatpush1.msra.mxu0 0.0
        %3363 = vmatprep.subr.mxu0 0.0
        %3364 = vmatpush1.msra.mxu0 0.0
        %3365 = vmatprep.subr.mxu0 0.0
        %3366 = vmatpush1.msra.mxu0 0.0
        %3367 = vmatprep.subr.mxu0 0.0
        %3368 = vmatpush1.msra.mxu0 0.0
        %3369 = vmatprep.subr.mxu0 0.0
        %3370 = vmatpush1.msra.mxu0 0.0
        %3371 = vmatprep.subr.mxu0 0.0
        %3372 = vmatpush1.msra.mxu0 0.0
        %3373 = vmatprep.subr.mxu0 0.0
        %3374 = vmatpush1.msra.mxu0 0.0
        %3375 = vmatprep.subr.mxu0 0.0
        %3376 = vmatpush1.msra.mxu0 0.0
        %3377 = vmatprep.subr.mxu0 0.0
        %3378 = vmatpush1.msra.mxu0 0.0
        %3379 = vmatprep.subr.mxu0 0.0
        %3380 = vmatpush1.msra.mxu0 0.0
        %3381 = vmatprep.mubr.f32.mxu0 0.0
        %3382 = vmatmul.mubr.f32.gmra.mrb[0].mxu0 %v3305
        %v3383 = vpop.f32.mrb[0].mxu0
        %v3384 = vadd.f32 0.0, %v3383
        %v3385 = vpop.f32.mrb[0].mxu0
        %v3386 = vadd.f32 0.0, %v3385
        %3387 = vmatprep.mubr.f32.mxu0 0.0
        %3388 = vmatmul.mubr.f32.gmra.mrb[0].mxu0 %v3308
        %v3389 = vpop.f32.mrb[0].mxu0
        %v3390 = vadd.f32 0.0, %v3389
        %v3391 = vpop.f32.mrb[0].mxu0
        %v3392 = vadd.f32 0.0, %v3391
        %3393 = vmatprep.mubr.f32.mxu0 0.0
        %3394 = vmatmul.mubr.f32.gmra.mrb[0].mxu0 %v3311
        %v3395 = vpop.f32.mrb[0].mxu0
        %v3396 = vadd.f32 0.0, %v3395
        %v3397 = vpop.f32.mrb[0].mxu0
        %v3398 = vadd.f32 0.0, %v3397
        %3399 = vdwg.mxu0
        %v3400 = vadd.f32 %v3281, %v3384
        %v3401 = vadd.f32 %v3282, %v3386
        %v3402 = vadd.f32 %v3283, %v3390
        %v3403 = vadd.f32 %v3284, %v3392
        %v3404 = vadd.f32 %v3285, %v3396
        %v3405 = vadd.f32 %v3286, %v3398
        %s3406 = scalar_lea.vmem %s4, 288
        %v3407 = vld [vmem:[%s3406] sm:$0xff]
        %v3408 = vld [vmem:[%s3406 + $0x8] sm:$0xff]
        %v3409 = vld [vmem:[%s3406 + $0x10] sm:$0xf]
        %3410 = vrot.lane.b32.xlu0 %v1990, 102
        %v3411 = vpop.permute.xlu0 %3410
        %3412 = vrot.lane.b32.xlu0 %v2001, 102
        %v3413 = vpop.permute.xlu0 %3412
        %3414 = vrot.lane.b32.xlu0 %v1996, 102
        %v3415 = vpop.permute.xlu0 %3414
        %3416 = vrot.lane.b32.xlu0 %v2002, 102
        %v3417 = vpop.permute.xlu0 %3416
        %vm3418 = vcmask 834560
        %v3419 = vsel %vm3418, %v3411, %v3413
        %v3420 = vsel %vm3418, %v3415, %v3417
        %v3424 = vsel %vm2026, %v3407, 0
        %v3427 = vsel %vm2026, %v3408, 0
        %v3430 = vsel %vm2026, %v3409, 0
        %v3432 = vsel %vm883, %v3420, 0
        %v3434 = vsel %vm883, %v3417, 0
        %3436 = vmatprep.subr.mxu0 %v3413
        %3437 = vmatpush1.msra.mxu0 %v3419
        %3438 = vmatprep.subr.mxu0 %v3434
        %3439 = vmatpush1.msra.mxu0 %v3432
        %3440 = vmatprep.subr.mxu0 0.0
        %3441 = vmatpush1.msra.mxu0 0.0
        %3442 = vmatprep.subr.mxu0 0.0
        %3443 = vmatpush1.msra.mxu0 0.0
        %3444 = vmatprep.subr.mxu0 0.0
        %3445 = vmatpush1.msra.mxu0 0.0
        %3446 = vmatprep.subr.mxu0 0.0
        %3447 = vmatpush1.msra.mxu0 0.0
        %3448 = vmatprep.subr.mxu0 0.0
        %3449 = vmatpush1.msra.mxu0 0.0
        %3450 = vmatprep.subr.mxu0 0.0
        %3451 = vmatpush1.msra.mxu0 0.0
        %3452 = vmatprep.subr.mxu0 0.0
        %3453 = vmatpush1.msra.mxu0 0.0
        %3454 = vmatprep.subr.mxu0 0.0
        %3455 = vmatpush1.msra.mxu0 0.0
        %3456 = vmatprep.subr.mxu0 0.0
        %3457 = vmatpush1.msra.mxu0 0.0
        %3458 = vmatprep.subr.mxu0 0.0
        %3459 = vmatpush1.msra.mxu0 0.0
        %3460 = vmatprep.subr.mxu0 0.0
        %3461 = vmatpush1.msra.mxu0 0.0
        %3462 = vmatprep.subr.mxu0 0.0
        %3463 = vmatpush1.msra.mxu0 0.0
        %3464 = vmatprep.subr.mxu0 0.0
        %3465 = vmatpush1.msra.mxu0 0.0
        %3466 = vmatprep.subr.mxu0 0.0
        %3467 = vmatpush1.msra.mxu0 0.0
        %3468 = vmatprep.subr.mxu0 0.0
        %3469 = vmatpush1.msra.mxu0 0.0
        %3470 = vmatprep.subr.mxu0 0.0
        %3471 = vmatpush1.msra.mxu0 0.0
        %3472 = vmatprep.subr.mxu0 0.0
        %3473 = vmatpush1.msra.mxu0 0.0
        %3474 = vmatprep.subr.mxu0 0.0
        %3475 = vmatpush1.msra.mxu0 0.0
        %3476 = vmatprep.subr.mxu0 0.0
        %3477 = vmatpush1.msra.mxu0 0.0
        %3478 = vmatprep.subr.mxu0 0.0
        %3479 = vmatpush1.msra.mxu0 0.0
        %3480 = vmatprep.subr.mxu0 0.0
        %3481 = vmatpush1.msra.mxu0 0.0
        %3482 = vmatprep.subr.mxu0 0.0
        %3483 = vmatpush1.msra.mxu0 0.0
        %3484 = vmatprep.subr.mxu0 0.0
        %3485 = vmatpush1.msra.mxu0 0.0
        %3486 = vmatprep.subr.mxu0 0.0
        %3487 = vmatpush1.msra.mxu0 0.0
        %3488 = vmatprep.subr.mxu0 0.0
        %3489 = vmatpush1.msra.mxu0 0.0
        %3490 = vmatprep.subr.mxu0 0.0
        %3491 = vmatpush1.msra.mxu0 0.0
        %3492 = vmatprep.subr.mxu0 0.0
        %3493 = vmatpush1.msra.mxu0 0.0
        %3494 = vmatprep.subr.mxu0 0.0
        %3495 = vmatpush1.msra.mxu0 0.0
        %3496 = vmatprep.subr.mxu0 0.0
        %3497 = vmatpush1.msra.mxu0 0.0
        %3498 = vmatprep.subr.mxu0 0.0
        %3499 = vmatpush1.msra.mxu0 0.0
        %3500 = vmatprep.mubr.f32.mxu0 0.0
        %3501 = vmatmul.mubr.f32.gmra.mrb[0].mxu0 %v3424
        %v3502 = vpop.f32.mrb[0].mxu0
        %v3503 = vadd.f32 0.0, %v3502
        %v3504 = vpop.f32.mrb[0].mxu0
        %v3505 = vadd.f32 0.0, %v3504
        %3506 = vmatprep.mubr.f32.mxu0 0.0
        %3507 = vmatmul.mubr.f32.gmra.mrb[0].mxu0 %v3427
        %v3508 = vpop.f32.mrb[0].mxu0
        %v3509 = vadd.f32 0.0, %v3508
        %v3510 = vpop.f32.mrb[0].mxu0
        %v3511 = vadd.f32 0.0, %v3510
        %3512 = vmatprep.mubr.f32.mxu0 0.0
        %3513 = vmatmul.mubr.f32.gmra.mrb[0].mxu0 %v3430
        %v3514 = vpop.f32.mrb[0].mxu0
        %v3515 = vadd.f32 0.0, %v3514
        %v3516 = vpop.f32.mrb[0].mxu0
        %v3517 = vadd.f32 0.0, %v3516
        %3518 = vdwg.mxu0
        %v3519 = vadd.f32 %v3400, %v3503
        %v3520 = vadd.f32 %v3401, %v3505
        %v3521 = vadd.f32 %v3402, %v3509
        %v3522 = vadd.f32 %v3403, %v3511
        %v3523 = vadd.f32 %v3404, %v3515
        %v3524 = vadd.f32 %v3405, %v3517
        %s3525 = scalar_lea.vmem %s4, 312
        %v3526 = vld [vmem:[%s3525] sm:$0xff]
        %v3527 = vld [vmem:[%s3525 + $0x8] sm:$0xff]
        %v3528 = vld [vmem:[%s3525 + $0x10] sm:$0xf]
        %3529 = vrot.lane.b32.xlu0 %v1990, 101
        %v3530 = vpop.permute.xlu0 %3529
        %3531 = vrot.lane.b32.xlu0 %v2001, 101
        %v3532 = vpop.permute.xlu0 %3531
        %3533 = vrot.lane.b32.xlu0 %v1996, 101
        %v3534 = vpop.permute.xlu0 %3533
        %3535 = vrot.lane.b32.xlu0 %v2002, 101
        %v3536 = vpop.permute.xlu0 %3535
        %v3537 = vsel %vm994, %v3530, %v3532
        %v3538 = vsel %vm994, %v3534, %v3536
        %v3542 = vsel %vm2026, %v3526, 0
        %v3545 = vsel %vm2026, %v3527, 0
        %v3548 = vsel %vm2026, %v3528, 0
        %v3550 = vsel %vm883, %v3538, 0
        %v3552 = vsel %vm883, %v3536, 0
        %3554 = vmatprep.subr.mxu0 %v3532
        %3555 = vmatpush1.msra.mxu0 %v3537
        %3556 = vmatprep.subr.mxu0 %v3552
        %3557 = vmatpush1.msra.mxu0 %v3550
        %3558 = vmatprep.subr.mxu0 0.0
        %3559 = vmatpush1.msra.mxu0 0.0
        %3560 = vmatprep.subr.mxu0 0.0
        %3561 = vmatpush1.msra.mxu0 0.0
        %3562 = vmatprep.subr.mxu0 0.0
        %3563 = vmatpush1.msra.mxu0 0.0
        %3564 = vmatprep.subr.mxu0 0.0
        %3565 = vmatpush1.msra.mxu0 0.0
        %3566 = vmatprep.subr.mxu0 0.0
        %3567 = vmatpush1.msra.mxu0 0.0
        %3568 = vmatprep.subr.mxu0 0.0
        %3569 = vmatpush1.msra.mxu0 0.0
        %3570 = vmatprep.subr.mxu0 0.0
        %3571 = vmatpush1.msra.mxu0 0.0
        %3572 = vmatprep.subr.mxu0 0.0
        %3573 = vmatpush1.msra.mxu0 0.0
        %3574 = vmatprep.subr.mxu0 0.0
        %3575 = vmatpush1.msra.mxu0 0.0
        %3576 = vmatprep.subr.mxu0 0.0
        %3577 = vmatpush1.msra.mxu0 0.0
        %3578 = vmatprep.subr.mxu0 0.0
        %3579 = vmatpush1.msra.mxu0 0.0
        %3580 = vmatprep.subr.mxu0 0.0
        %3581 = vmatpush1.msra.mxu0 0.0
        %3582 = vmatprep.subr.mxu0 0.0
        %3583 = vmatpush1.msra.mxu0 0.0
        %3584 = vmatprep.subr.mxu0 0.0
        %3585 = vmatpush1.msra.mxu0 0.0
        %3586 = vmatprep.subr.mxu0 0.0
        %3587 = vmatpush1.msra.mxu0 0.0
        %3588 = vmatprep.subr.mxu0 0.0
        %3589 = vmatpush1.msra.mxu0 0.0
        %3590 = vmatprep.subr.mxu0 0.0
        %3591 = vmatpush1.msra.mxu0 0.0
        %3592 = vmatprep.subr.mxu0 0.0
        %3593 = vmatpush1.msra.mxu0 0.0
        %3594 = vmatprep.subr.mxu0 0.0
        %3595 = vmatpush1.msra.mxu0 0.0
        %3596 = vmatprep.subr.mxu0 0.0
        %3597 = vmatpush1.msra.mxu0 0.0
        %3598 = vmatprep.subr.mxu0 0.0
        %3599 = vmatpush1.msra.mxu0 0.0
        %3600 = vmatprep.subr.mxu0 0.0
        %3601 = vmatpush1.msra.mxu0 0.0
        %3602 = vmatprep.subr.mxu0 0.0
        %3603 = vmatpush1.msra.mxu0 0.0
        %3604 = vmatprep.subr.mxu0 0.0
        %3605 = vmatpush1.msra.mxu0 0.0
        %3606 = vmatprep.subr.mxu0 0.0
        %3607 = vmatpush1.msra.mxu0 0.0
        %3608 = vmatprep.subr.mxu0 0.0
        %3609 = vmatpush1.msra.mxu0 0.0
        %3610 = vmatprep.subr.mxu0 0.0
        %3611 = vmatpush1.msra.mxu0 0.0
        %3612 = vmatprep.subr.mxu0 0.0
        %3613 = vmatpush1.msra.mxu0 0.0
        %3614 = vmatprep.subr.mxu0 0.0
        %3615 = vmatpush1.msra.mxu0 0.0
        %3616 = vmatprep.subr.mxu0 0.0
        %3617 = vmatpush1.msra.mxu0 0.0
        %3618 = vmatprep.mubr.f32.mxu0 0.0
        %3619 = vmatmul.mubr.f32.gmra.mrb[0].mxu0 %v3542
        %v3620 = vpop.f32.mrb[0].mxu0
        %v3621 = vadd.f32 0.0, %v3620
        %v3622 = vpop.f32.mrb[0].mxu0
        %v3623 = vadd.f32 0.0, %v3622
        %3624 = vmatprep.mubr.f32.mxu0 0.0
        %3625 = vmatmul.mubr.f32.gmra.mrb[0].mxu0 %v3545
        %v3626 = vpop.f32.mrb[0].mxu0
        %v3627 = vadd.f32 0.0, %v3626
        %v3628 = vpop.f32.mrb[0].mxu0
        %v3629 = vadd.f32 0.0, %v3628
        %3630 = vmatprep.mubr.f32.mxu0 0.0
        %3631 = vmatmul.mubr.f32.gmra.mrb[0].mxu0 %v3548
        %v3632 = vpop.f32.mrb[0].mxu0
        %v3633 = vadd.f32 0.0, %v3632
        %v3634 = vpop.f32.mrb[0].mxu0
        %v3635 = vadd.f32 0.0, %v3634
        %3636 = vdwg.mxu0
        %v3637 = vadd.f32 %v3519, %v3621
        %v3638 = vadd.f32 %v3520, %v3623
        %v3639 = vadd.f32 %v3521, %v3627
        %v3640 = vadd.f32 %v3522, %v3629
        %v3641 = vadd.f32 %v3523, %v3633
        %v3642 = vadd.f32 %v3524, %v3635
        %s3643 = scalar_lea.vmem %s4, 336
        %v3644 = vld [vmem:[%s3643] sm:$0xff]
        %v3645 = vld [vmem:[%s3643 + $0x8] sm:$0xff]
        %v3646 = vld [vmem:[%s3643 + $0x10] sm:$0xf]
        %3647 = vrot.lane.b32.xlu0 %v1990, 100
        %v3648 = vpop.permute.xlu0 %3647
        %3649 = vrot.lane.b32.xlu0 %v2001, 100
        %v3650 = vpop.permute.xlu0 %3649
        %3651 = vrot.lane.b32.xlu0 %v1996, 100
        %v3652 = vpop.permute.xlu0 %3651
        %3653 = vrot.lane.b32.xlu0 %v2002, 100
        %v3654 = vpop.permute.xlu0 %3653
        %v3655 = vsel %vm581, %v3648, %v3650
        %v3656 = vsel %vm581, %v3652, %v3654
        %v3660 = vsel %vm2026, %v3644, 0
        %v3663 = vsel %vm2026, %v3645, 0
        %v3666 = vsel %vm2026, %v3646, 0
        %v3668 = vsel %vm883, %v3656, 0
        %v3670 = vsel %vm883, %v3654, 0
        %3672 = vmatprep.subr.mxu0 %v3650
        %3673 = vmatpush1.msra.mxu0 %v3655
        %3674 = vmatprep.subr.mxu0 %v3670
        %3675 = vmatpush1.msra.mxu0 %v3668
        %3676 = vmatprep.subr.mxu0 0.0
        %3677 = vmatpush1.msra.mxu0 0.0
        %3678 = vmatprep.subr.mxu0 0.0
        %3679 = vmatpush1.msra.mxu0 0.0
        %3680 = vmatprep.subr.mxu0 0.0
        %3681 = vmatpush1.msra.mxu0 0.0
        %3682 = vmatprep.subr.mxu0 0.0
        %3683 = vmatpush1.msra.mxu0 0.0
        %3684 = vmatprep.subr.mxu0 0.0
        %3685 = vmatpush1.msra.mxu0 0.0
        %3686 = vmatprep.subr.mxu0 0.0
        %3687 = vmatpush1.msra.mxu0 0.0
        %3688 = vmatprep.subr.mxu0 0.0
        %3689 = vmatpush1.msra.mxu0 0.0
        %3690 = vmatprep.subr.mxu0 0.0
        %3691 = vmatpush1.msra.mxu0 0.0
        %3692 = vmatprep.subr.mxu0 0.0
        %3693 = vmatpush1.msra.mxu0 0.0
        %3694 = vmatprep.subr.mxu0 0.0
        %3695 = vmatpush1.msra.mxu0 0.0
        %3696 = vmatprep.subr.mxu0 0.0
        %3697 = vmatpush1.msra.mxu0 0.0
        %3698 = vmatprep.subr.mxu0 0.0
        %3699 = vmatpush1.msra.mxu0 0.0
        %3700 = vmatprep.subr.mxu0 0.0
        %3701 = vmatpush1.msra.mxu0 0.0
        %3702 = vmatprep.subr.mxu0 0.0
        %3703 = vmatpush1.msra.mxu0 0.0
        %3704 = vmatprep.subr.mxu0 0.0
        %3705 = vmatpush1.msra.mxu0 0.0
        %3706 = vmatprep.subr.mxu0 0.0
        %3707 = vmatpush1.msra.mxu0 0.0
        %3708 = vmatprep.subr.mxu0 0.0
        %3709 = vmatpush1.msra.mxu0 0.0
        %3710 = vmatprep.subr.mxu0 0.0
        %3711 = vmatpush1.msra.mxu0 0.0
        %3712 = vmatprep.subr.mxu0 0.0
        %3713 = vmatpush1.msra.mxu0 0.0
        %3714 = vmatprep.subr.mxu0 0.0
        %3715 = vmatpush1.msra.mxu0 0.0
        %3716 = vmatprep.subr.mxu0 0.0
        %3717 = vmatpush1.msra.mxu0 0.0
        %3718 = vmatprep.subr.mxu0 0.0
        %3719 = vmatpush1.msra.mxu0 0.0
        %3720 = vmatprep.subr.mxu0 0.0
        %3721 = vmatpush1.msra.mxu0 0.0
        %3722 = vmatprep.subr.mxu0 0.0
        %3723 = vmatpush1.msra.mxu0 0.0
        %3724 = vmatprep.subr.mxu0 0.0
        %3725 = vmatpush1.msra.mxu0 0.0
        %3726 = vmatprep.subr.mxu0 0.0
        %3727 = vmatpush1.msra.mxu0 0.0
        %3728 = vmatprep.subr.mxu0 0.0
        %3729 = vmatpush1.msra.mxu0 0.0
        %3730 = vmatprep.subr.mxu0 0.0
        %3731 = vmatpush1.msra.mxu0 0.0
        %3732 = vmatprep.subr.mxu0 0.0
        %3733 = vmatpush1.msra.mxu0 0.0
        %3734 = vmatprep.subr.mxu0 0.0
        %3735 = vmatpush1.msra.mxu0 0.0
        %3736 = vmatprep.mubr.f32.mxu0 0.0
        %3737 = vmatmul.mubr.f32.gmra.mrb[0].mxu0 %v3660
        %v3738 = vpop.f32.mrb[0].mxu0
        %v3739 = vadd.f32 0.0, %v3738
        %v3740 = vpop.f32.mrb[0].mxu0
        %v3741 = vadd.f32 0.0, %v3740
        %3742 = vmatprep.mubr.f32.mxu0 0.0
        %3743 = vmatmul.mubr.f32.gmra.mrb[0].mxu0 %v3663
        %v3744 = vpop.f32.mrb[0].mxu0
        %v3745 = vadd.f32 0.0, %v3744
        %v3746 = vpop.f32.mrb[0].mxu0
        %v3747 = vadd.f32 0.0, %v3746
        %3748 = vmatprep.mubr.f32.mxu0 0.0
        %3749 = vmatmul.mubr.f32.gmra.mrb[0].mxu0 %v3666
        %v3750 = vpop.f32.mrb[0].mxu0
        %v3751 = vadd.f32 0.0, %v3750
        %v3752 = vpop.f32.mrb[0].mxu0
        %v3753 = vadd.f32 0.0, %v3752
        %3754 = vdwg.mxu0
        %v3755 = vadd.f32 %v3637, %v3739
        %v3756 = vadd.f32 %v3638, %v3741
        %v3757 = vadd.f32 %v3639, %v3745
        %v3758 = vadd.f32 %v3640, %v3747
        %v3759 = vadd.f32 %v3641, %v3751
        %v3760 = vadd.f32 %v3642, %v3753
        %s3761 = scalar_lea.vmem %s4, 360
        %v3762 = vld [vmem:[%s3761] sm:$0xff]
        %v3763 = vld [vmem:[%s3761 + $0x8] sm:$0xff]
        %v3764 = vld [vmem:[%s3761 + $0x10] sm:$0xf]
        %3765 = vrot.lane.b32.xlu0 %v1990, 92
        %v3766 = vpop.permute.xlu0 %3765
        %3767 = vrot.lane.b32.xlu0 %v2001, 92
        %v3768 = vpop.permute.xlu0 %3767
        %3769 = vrot.lane.b32.xlu0 %v1996, 92
        %v3770 = vpop.permute.xlu0 %3769
        %3771 = vrot.lane.b32.xlu0 %v2002, 92
        %v3772 = vpop.permute.xlu0 %3771
        %vm3773 = vcmask 752640
        %v3774 = vsel %vm3773, %v3766, %v3768
        %v3775 = vsel %vm3773, %v3770, %v3772
        %v3779 = vsel %vm2026, %v3762, 0
        %v3782 = vsel %vm2026, %v3763, 0
        %v3785 = vsel %vm2026, %v3764, 0
        %v3787 = vsel %vm883, %v3775, 0
        %v3789 = vsel %vm883, %v3772, 0
        %3791 = vmatprep.subr.mxu0 %v3768
        %3792 = vmatpush1.msra.mxu0 %v3774
        %3793 = vmatprep.subr.mxu0 %v3789
        %3794 = vmatpush1.msra.mxu0 %v3787
        %3795 = vmatprep.subr.mxu0 0.0
        %3796 = vmatpush1.msra.mxu0 0.0
        %3797 = vmatprep.subr.mxu0 0.0
        %3798 = vmatpush1.msra.mxu0 0.0
        %3799 = vmatprep.subr.mxu0 0.0
        %3800 = vmatpush1.msra.mxu0 0.0
        %3801 = vmatprep.subr.mxu0 0.0
        %3802 = vmatpush1.msra.mxu0 0.0
        %3803 = vmatprep.subr.mxu0 0.0
        %3804 = vmatpush1.msra.mxu0 0.0
        %3805 = vmatprep.subr.mxu0 0.0
        %3806 = vmatpush1.msra.mxu0 0.0
        %3807 = vmatprep.subr.mxu0 0.0
        %3808 = vmatpush1.msra.mxu0 0.0
        %3809 = vmatprep.subr.mxu0 0.0
        %3810 = vmatpush1.msra.mxu0 0.0
        %3811 = vmatprep.subr.mxu0 0.0
        %3812 = vmatpush1.msra.mxu0 0.0
        %3813 = vmatprep.subr.mxu0 0.0
        %3814 = vmatpush1.msra.mxu0 0.0
        %3815 = vmatprep.subr.mxu0 0.0
        %3816 = vmatpush1.msra.mxu0 0.0
        %3817 = vmatprep.subr.mxu0 0.0
        %3818 = vmatpush1.msra.mxu0 0.0
        %3819 = vmatprep.subr.mxu0 0.0
        %3820 = vmatpush1.msra.mxu0 0.0
        %3821 = vmatprep.subr.mxu0 0.0
        %3822 = vmatpush1.msra.mxu0 0.0
        %3823 = vmatprep.subr.mxu0 0.0
        %3824 = vmatpush1.msra.mxu0 0.0
        %3825 = vmatprep.subr.mxu0 0.0
        %3826 = vmatpush1.msra.mxu0 0.0
        %3827 = vmatprep.subr.mxu0 0.0
        %3828 = vmatpush1.msra.mxu0 0.0
        %3829 = vmatprep.subr.mxu0 0.0
        %3830 = vmatpush1.msra.mxu0 0.0
        %3831 = vmatprep.subr.mxu0 0.0
        %3832 = vmatpush1.msra.mxu0 0.0
        %3833 = vmatprep.subr.mxu0 0.0
        %3834 = vmatpush1.msra.mxu0 0.0
        %3835 = vmatprep.subr.mxu0 0.0
        %3836 = vmatpush1.msra.mxu0 0.0
        %3837 = vmatprep.subr.mxu0 0.0
        %3838 = vmatpush1.msra.mxu0 0.0
        %3839 = vmatprep.subr.mxu0 0.0
        %3840 = vmatpush1.msra.mxu0 0.0
        %3841 = vmatprep.subr.mxu0 0.0
        %3842 = vmatpush1.msra.mxu0 0.0
        %3843 = vmatprep.subr.mxu0 0.0
        %3844 = vmatpush1.msra.mxu0 0.0
        %3845 = vmatprep.subr.mxu0 0.0
        %3846 = vmatpush1.msra.mxu0 0.0
        %3847 = vmatprep.subr.mxu0 0.0
        %3848 = vmatpush1.msra.mxu0 0.0
        %3849 = vmatprep.subr.mxu0 0.0
        %3850 = vmatpush1.msra.mxu0 0.0
        %3851 = vmatprep.subr.mxu0 0.0
        %3852 = vmatpush1.msra.mxu0 0.0
        %3853 = vmatprep.subr.mxu0 0.0
        %3854 = vmatpush1.msra.mxu0 0.0
        %3855 = vmatprep.mubr.f32.mxu0 0.0
        %3856 = vmatmul.mubr.f32.gmra.mrb[0].mxu0 %v3779
        %v3857 = vpop.f32.mrb[0].mxu0
        %v3858 = vadd.f32 0.0, %v3857
        %v3859 = vpop.f32.mrb[0].mxu0
        %v3860 = vadd.f32 0.0, %v3859
        %3861 = vmatprep.mubr.f32.mxu0 0.0
        %3862 = vmatmul.mubr.f32.gmra.mrb[0].mxu0 %v3782
        %v3863 = vpop.f32.mrb[0].mxu0
        %v3864 = vadd.f32 0.0, %v3863
        %v3865 = vpop.f32.mrb[0].mxu0
        %v3866 = vadd.f32 0.0, %v3865
        %3867 = vmatprep.mubr.f32.mxu0 0.0
        %3868 = vmatmul.mubr.f32.gmra.mrb[0].mxu0 %v3785
        %v3869 = vpop.f32.mrb[0].mxu0
        %v3870 = vadd.f32 0.0, %v3869
        %v3871 = vpop.f32.mrb[0].mxu0
        %v3872 = vadd.f32 0.0, %v3871
        %3873 = vdwg.mxu0
        %v3874 = vadd.f32 %v3755, %v3858
        %v3875 = vadd.f32 %v3756, %v3860
        %v3876 = vadd.f32 %v3757, %v3864
        %v3877 = vadd.f32 %v3758, %v3866
        %v3878 = vadd.f32 %v3759, %v3870
        %v3879 = vadd.f32 %v3760, %v3872
        %s3880 = scalar_lea.vmem %s4, 384
        %v3881 = vld [vmem:[%s3880] sm:$0xff]
        %v3882 = vld [vmem:[%s3880 + $0x8] sm:$0xff]
        %v3883 = vld [vmem:[%s3880 + $0x10] sm:$0xf]
        %3884 = vrot.lane.b32.xlu0 %v1990, 91
        %v3885 = vpop.permute.xlu0 %3884
        %3886 = vrot.lane.b32.xlu0 %v2001, 91
        %v3887 = vpop.permute.xlu0 %3886
        %3888 = vrot.lane.b32.xlu0 %v1996, 91
        %v3889 = vpop.permute.xlu0 %3888
        %3890 = vrot.lane.b32.xlu0 %v2002, 91
        %v3891 = vpop.permute.xlu0 %3890
        %vm3892 = vcmask 744448
        %v3893 = vsel %vm3892, %v3885, %v3887
        %v3894 = vsel %vm3892, %v3889, %v3891
        %v3898 = vsel %vm2026, %v3881, 0
        %v3901 = vsel %vm2026, %v3882, 0
        %v3904 = vsel %vm2026, %v3883, 0
        %v3906 = vsel %vm883, %v3894, 0
        %v3908 = vsel %vm883, %v3891, 0
        %3910 = vmatprep.subr.mxu0 %v3887
        %3911 = vmatpush1.msra.mxu0 %v3893
        %3912 = vmatprep.subr.mxu0 %v3908
        %3913 = vmatpush1.msra.mxu0 %v3906
        %3914 = vmatprep.subr.mxu0 0.0
        %3915 = vmatpush1.msra.mxu0 0.0
        %3916 = vmatprep.subr.mxu0 0.0
        %3917 = vmatpush1.msra.mxu0 0.0
        %3918 = vmatprep.subr.mxu0 0.0
        %3919 = vmatpush1.msra.mxu0 0.0
        %3920 = vmatprep.subr.mxu0 0.0
        %3921 = vmatpush1.msra.mxu0 0.0
        %3922 = vmatprep.subr.mxu0 0.0
        %3923 = vmatpush1.msra.mxu0 0.0
        %3924 = vmatprep.subr.mxu0 0.0
        %3925 = vmatpush1.msra.mxu0 0.0
        %3926 = vmatprep.subr.mxu0 0.0
        %3927 = vmatpush1.msra.mxu0 0.0
        %3928 = vmatprep.subr.mxu0 0.0
        %3929 = vmatpush1.msra.mxu0 0.0
        %3930 = vmatprep.subr.mxu0 0.0
        %3931 = vmatpush1.msra.mxu0 0.0
        %3932 = vmatprep.subr.mxu0 0.0
        %3933 = vmatpush1.msra.mxu0 0.0
        %3934 = vmatprep.subr.mxu0 0.0
        %3935 = vmatpush1.msra.mxu0 0.0
        %3936 = vmatprep.subr.mxu0 0.0
        %3937 = vmatpush1.msra.mxu0 0.0
        %3938 = vmatprep.subr.mxu0 0.0
        %3939 = vmatpush1.msra.mxu0 0.0
        %3940 = vmatprep.subr.mxu0 0.0
        %3941 = vmatpush1.msra.mxu0 0.0
        %3942 = vmatprep.subr.mxu0 0.0
        %3943 = vmatpush1.msra.mxu0 0.0
        %3944 = vmatprep.subr.mxu0 0.0
        %3945 = vmatpush1.msra.mxu0 0.0
        %3946 = vmatprep.subr.mxu0 0.0
        %3947 = vmatpush1.msra.mxu0 0.0
        %3948 = vmatprep.subr.mxu0 0.0
        %3949 = vmatpush1.msra.mxu0 0.0
        %3950 = vmatprep.subr.mxu0 0.0
        %3951 = vmatpush1.msra.mxu0 0.0
        %3952 = vmatprep.subr.mxu0 0.0
        %3953 = vmatpush1.msra.mxu0 0.0
        %3954 = vmatprep.subr.mxu0 0.0
        %3955 = vmatpush1.msra.mxu0 0.0
        %3956 = vmatprep.subr.mxu0 0.0
        %3957 = vmatpush1.msra.mxu0 0.0
        %3958 = vmatprep.subr.mxu0 0.0
        %3959 = vmatpush1.msra.mxu0 0.0
        %3960 = vmatprep.subr.mxu0 0.0
        %3961 = vmatpush1.msra.mxu0 0.0
        %3962 = vmatprep.subr.mxu0 0.0
        %3963 = vmatpush1.msra.mxu0 0.0
        %3964 = vmatprep.subr.mxu0 0.0
        %3965 = vmatpush1.msra.mxu0 0.0
        %3966 = vmatprep.subr.mxu0 0.0
        %3967 = vmatpush1.msra.mxu0 0.0
        %3968 = vmatprep.subr.mxu0 0.0
        %3969 = vmatpush1.msra.mxu0 0.0
        %3970 = vmatprep.subr.mxu0 0.0
        %3971 = vmatpush1.msra.mxu0 0.0
        %3972 = vmatprep.subr.mxu0 0.0
        %3973 = vmatpush1.msra.mxu0 0.0
        %3974 = vmatprep.mubr.f32.mxu0 0.0
        %3975 = vmatmul.mubr.f32.gmra.mrb[0].mxu0 %v3898
        %v3976 = vpop.f32.mrb[0].mxu0
        %v3977 = vadd.f32 0.0, %v3976
        %v3978 = vpop.f32.mrb[0].mxu0
        %v3979 = vadd.f32 0.0, %v3978
        %3980 = vmatprep.mubr.f32.mxu0 0.0
        %3981 = vmatmul.mubr.f32.gmra.mrb[0].mxu0 %v3901
        %v3982 = vpop.f32.mrb[0].mxu0
        %v3983 = vadd.f32 0.0, %v3982
        %v3984 = vpop.f32.mrb[0].mxu0
        %v3985 = vadd.f32 0.0, %v3984
        %3986 = vmatprep.mubr.f32.mxu0 0.0
        %3987 = vmatmul.mubr.f32.gmra.mrb[0].mxu0 %v3904
        %v3988 = vpop.f32.mrb[0].mxu0
        %v3989 = vadd.f32 0.0, %v3988
        %v3990 = vpop.f32.mrb[0].mxu0
        %v3991 = vadd.f32 0.0, %v3990
        %3992 = vdwg.mxu0
        %v3993 = vadd.f32 %v3874, %v3977
        %v3994 = vadd.f32 %v3875, %v3979
        %v3995 = vadd.f32 %v3876, %v3983
        %v3996 = vadd.f32 %v3877, %v3985
        %v3997 = vadd.f32 %v3878, %v3989
        %v3998 = vadd.f32 %v3879, %v3991
        %s3999 = scalar_lea.vmem %s4, 408
        %v4000 = vld [vmem:[%s3999] sm:$0xff]
        %v4001 = vld [vmem:[%s3999 + $0x8] sm:$0xff]
        %v4002 = vld [vmem:[%s3999 + $0x10] sm:$0xf]
        %4003 = vrot.lane.b32.xlu0 %v1990, 90
        %v4004 = vpop.permute.xlu0 %4003
        %4005 = vrot.lane.b32.xlu0 %v2001, 90
        %v4006 = vpop.permute.xlu0 %4005
        %4007 = vrot.lane.b32.xlu0 %v1996, 90
        %v4008 = vpop.permute.xlu0 %4007
        %4009 = vrot.lane.b32.xlu0 %v2002, 90
        %v4010 = vpop.permute.xlu0 %4009
        %vm4011 = vcmask 736256
        %v4012 = vsel %vm4011, %v4004, %v4006
        %v4013 = vsel %vm4011, %v4008, %v4010
        %v4017 = vsel %vm2026, %v4000, 0
        %v4020 = vsel %vm2026, %v4001, 0
        %v4023 = vsel %vm2026, %v4002, 0
        %v4025 = vsel %vm883, %v4013, 0
        %v4027 = vsel %vm883, %v4010, 0
        %4029 = vmatprep.subr.mxu0 %v4006
        %4030 = vmatpush1.msra.mxu0 %v4012
        %4031 = vmatprep.subr.mxu0 %v4027
        %4032 = vmatpush1.msra.mxu0 %v4025
        %4033 = vmatprep.subr.mxu0 0.0
        %4034 = vmatpush1.msra.mxu0 0.0
        %4035 = vmatprep.subr.mxu0 0.0
        %4036 = vmatpush1.msra.mxu0 0.0
        %4037 = vmatprep.subr.mxu0 0.0
        %4038 = vmatpush1.msra.mxu0 0.0
        %4039 = vmatprep.subr.mxu0 0.0
        %4040 = vmatpush1.msra.mxu0 0.0
        %4041 = vmatprep.subr.mxu0 0.0
        %4042 = vmatpush1.msra.mxu0 0.0
        %4043 = vmatprep.subr.mxu0 0.0
        %4044 = vmatpush1.msra.mxu0 0.0
        %4045 = vmatprep.subr.mxu0 0.0
        %4046 = vmatpush1.msra.mxu0 0.0
        %4047 = vmatprep.subr.mxu0 0.0
        %4048 = vmatpush1.msra.mxu0 0.0
        %4049 = vmatprep.subr.mxu0 0.0
        %4050 = vmatpush1.msra.mxu0 0.0
        %4051 = vmatprep.subr.mxu0 0.0
        %4052 = vmatpush1.msra.mxu0 0.0
        %4053 = vmatprep.subr.mxu0 0.0
        %4054 = vmatpush1.msra.mxu0 0.0
        %4055 = vmatprep.subr.mxu0 0.0
        %4056 = vmatpush1.msra.mxu0 0.0
        %4057 = vmatprep.subr.mxu0 0.0
        %4058 = vmatpush1.msra.mxu0 0.0
        %4059 = vmatprep.subr.mxu0 0.0
        %4060 = vmatpush1.msra.mxu0 0.0
        %4061 = vmatprep.subr.mxu0 0.0
        %4062 = vmatpush1.msra.mxu0 0.0
        %4063 = vmatprep.subr.mxu0 0.0
        %4064 = vmatpush1.msra.mxu0 0.0
        %4065 = vmatprep.subr.mxu0 0.0
        %4066 = vmatpush1.msra.mxu0 0.0
        %4067 = vmatprep.subr.mxu0 0.0
        %4068 = vmatpush1.msra.mxu0 0.0
        %4069 = vmatprep.subr.mxu0 0.0
        %4070 = vmatpush1.msra.mxu0 0.0
        %4071 = vmatprep.subr.mxu0 0.0
        %4072 = vmatpush1.msra.mxu0 0.0
        %4073 = vmatprep.subr.mxu0 0.0
        %4074 = vmatpush1.msra.mxu0 0.0
        %4075 = vmatprep.subr.mxu0 0.0
        %4076 = vmatpush1.msra.mxu0 0.0
        %4077 = vmatprep.subr.mxu0 0.0
        %4078 = vmatpush1.msra.mxu0 0.0
        %4079 = vmatprep.subr.mxu0 0.0
        %4080 = vmatpush1.msra.mxu0 0.0
        %4081 = vmatprep.subr.mxu0 0.0
        %4082 = vmatpush1.msra.mxu0 0.0
        %4083 = vmatprep.subr.mxu0 0.0
        %4084 = vmatpush1.msra.mxu0 0.0
        %4085 = vmatprep.subr.mxu0 0.0
        %4086 = vmatpush1.msra.mxu0 0.0
        %4087 = vmatprep.subr.mxu0 0.0
        %4088 = vmatpush1.msra.mxu0 0.0
        %4089 = vmatprep.subr.mxu0 0.0
        %4090 = vmatpush1.msra.mxu0 0.0
        %4091 = vmatprep.subr.mxu0 0.0
        %4092 = vmatpush1.msra.mxu0 0.0
        %4093 = vmatprep.mubr.f32.mxu0 0.0
        %4094 = vmatmul.mubr.f32.gmra.mrb[0].mxu0 %v4017
        %v4095 = vpop.f32.mrb[0].mxu0
        %v4096 = vadd.f32 0.0, %v4095
        %v4097 = vpop.f32.mrb[0].mxu0
        %v4098 = vadd.f32 0.0, %v4097
        %4099 = vmatprep.mubr.f32.mxu0 0.0
        %4100 = vmatmul.mubr.f32.gmra.mrb[0].mxu0 %v4020
        %v4101 = vpop.f32.mrb[0].mxu0
        %v4102 = vadd.f32 0.0, %v4101
        %v4103 = vpop.f32.mrb[0].mxu0
        %v4104 = vadd.f32 0.0, %v4103
        %4105 = vmatprep.mubr.f32.mxu0 0.0
        %4106 = vmatmul.mubr.f32.gmra.mrb[0].mxu0 %v4023
        %v4107 = vpop.f32.mrb[0].mxu0
        %v4108 = vadd.f32 0.0, %v4107
        %v4109 = vpop.f32.mrb[0].mxu0
        %v4110 = vadd.f32 0.0, %v4109
        %4111 = vdwg.mxu0
        %v4112 = vadd.f32 %v3993, %v4096
        %v4113 = vadd.f32 %v3994, %v4098
        %v4114 = vadd.f32 %v3995, %v4102
        %v4115 = vadd.f32 %v3996, %v4104
        %v4116 = vadd.f32 %v3997, %v4108
        %v4117 = vadd.f32 %v3998, %v4110
        %s4118 = scalar_lea.vmem %s4, 432
        %v4119 = vld [vmem:[%s4118] sm:$0xff]
        %v4120 = vld [vmem:[%s4118 + $0x8] sm:$0xff]
        %v4121 = vld [vmem:[%s4118 + $0x10] sm:$0xf]
        %4122 = vrot.lane.b32.xlu0 %v1990, 89
        %v4123 = vpop.permute.xlu0 %4122
        %4124 = vrot.lane.b32.xlu0 %v2001, 89
        %v4125 = vpop.permute.xlu0 %4124
        %4126 = vrot.lane.b32.xlu0 %v1996, 89
        %v4127 = vpop.permute.xlu0 %4126
        %4128 = vrot.lane.b32.xlu0 %v2002, 89
        %v4129 = vpop.permute.xlu0 %4128
        %vm4130 = vcmask 728064
        %v4131 = vsel %vm4130, %v4123, %v4125
        %v4132 = vsel %vm4130, %v4127, %v4129
        %v4136 = vsel %vm2026, %v4119, 0
        %v4139 = vsel %vm2026, %v4120, 0
        %v4142 = vsel %vm2026, %v4121, 0
        %v4144 = vsel %vm883, %v4132, 0
        %v4146 = vsel %vm883, %v4129, 0
        %4148 = vmatprep.subr.mxu0 %v4125
        %4149 = vmatpush1.msra.mxu0 %v4131
        %4150 = vmatprep.subr.mxu0 %v4146
        %4151 = vmatpush1.msra.mxu0 %v4144
        %4152 = vmatprep.subr.mxu0 0.0
        %4153 = vmatpush1.msra.mxu0 0.0
        %4154 = vmatprep.subr.mxu0 0.0
        %4155 = vmatpush1.msra.mxu0 0.0
        %4156 = vmatprep.subr.mxu0 0.0
        %4157 = vmatpush1.msra.mxu0 0.0
        %4158 = vmatprep.subr.mxu0 0.0
        %4159 = vmatpush1.msra.mxu0 0.0
        %4160 = vmatprep.subr.mxu0 0.0
        %4161 = vmatpush1.msra.mxu0 0.0
        %4162 = vmatprep.subr.mxu0 0.0
        %4163 = vmatpush1.msra.mxu0 0.0
        %4164 = vmatprep.subr.mxu0 0.0
        %4165 = vmatpush1.msra.mxu0 0.0
        %4166 = vmatprep.subr.mxu0 0.0
        %4167 = vmatpush1.msra.mxu0 0.0
        %4168 = vmatprep.subr.mxu0 0.0
        %4169 = vmatpush1.msra.mxu0 0.0
        %4170 = vmatprep.subr.mxu0 0.0
        %4171 = vmatpush1.msra.mxu0 0.0
        %4172 = vmatprep.subr.mxu0 0.0
        %4173 = vmatpush1.msra.mxu0 0.0
        %4174 = vmatprep.subr.mxu0 0.0
        %4175 = vmatpush1.msra.mxu0 0.0
        %4176 = vmatprep.subr.mxu0 0.0
        %4177 = vmatpush1.msra.mxu0 0.0
        %4178 = vmatprep.subr.mxu0 0.0
        %4179 = vmatpush1.msra.mxu0 0.0
        %4180 = vmatprep.subr.mxu0 0.0
        %4181 = vmatpush1.msra.mxu0 0.0
        %4182 = vmatprep.subr.mxu0 0.0
        %4183 = vmatpush1.msra.mxu0 0.0
        %4184 = vmatprep.subr.mxu0 0.0
        %4185 = vmatpush1.msra.mxu0 0.0
        %4186 = vmatprep.subr.mxu0 0.0
        %4187 = vmatpush1.msra.mxu0 0.0
        %4188 = vmatprep.subr.mxu0 0.0
        %4189 = vmatpush1.msra.mxu0 0.0
        %4190 = vmatprep.subr.mxu0 0.0
        %4191 = vmatpush1.msra.mxu0 0.0
        %4192 = vmatprep.subr.mxu0 0.0
        %4193 = vmatpush1.msra.mxu0 0.0
        %4194 = vmatprep.subr.mxu0 0.0
        %4195 = vmatpush1.msra.mxu0 0.0
        %4196 = vmatprep.subr.mxu0 0.0
        %4197 = vmatpush1.msra.mxu0 0.0
        %4198 = vmatprep.subr.mxu0 0.0
        %4199 = vmatpush1.msra.mxu0 0.0
        %4200 = vmatprep.subr.mxu0 0.0
        %4201 = vmatpush1.msra.mxu0 0.0
        %4202 = vmatprep.subr.mxu0 0.0
        %4203 = vmatpush1.msra.mxu0 0.0
        %4204 = vmatprep.subr.mxu0 0.0
        %4205 = vmatpush1.msra.mxu0 0.0
        %4206 = vmatprep.subr.mxu0 0.0
        %4207 = vmatpush1.msra.mxu0 0.0
        %4208 = vmatprep.subr.mxu0 0.0
        %4209 = vmatpush1.msra.mxu0 0.0
        %4210 = vmatprep.subr.mxu0 0.0
        %4211 = vmatpush1.msra.mxu0 0.0
        %4212 = vmatprep.mubr.f32.mxu0 0.0
        %4213 = vmatmul.mubr.f32.gmra.mrb[0].mxu0 %v4136
        %v4214 = vpop.f32.mrb[0].mxu0
        %v4215 = vadd.f32 0.0, %v4214
        %v4216 = vpop.f32.mrb[0].mxu0
        %v4217 = vadd.f32 0.0, %v4216
        %4218 = vmatprep.mubr.f32.mxu0 0.0
        %4219 = vmatmul.mubr.f32.gmra.mrb[0].mxu0 %v4139
        %v4220 = vpop.f32.mrb[0].mxu0
        %v4221 = vadd.f32 0.0, %v4220
        %v4222 = vpop.f32.mrb[0].mxu0
        %v4223 = vadd.f32 0.0, %v4222
        %4224 = vmatprep.mubr.f32.mxu0 0.0
        %4225 = vmatmul.mubr.f32.gmra.mrb[0].mxu0 %v4142
        %v4226 = vpop.f32.mrb[0].mxu0
        %v4227 = vadd.f32 0.0, %v4226
        %v4228 = vpop.f32.mrb[0].mxu0
        %v4229 = vadd.f32 0.0, %v4228
        %4230 = vdwg.mxu0
        %v4231 = vadd.f32 %v4112, %v4215
        %v4232 = vadd.f32 %v4113, %v4217
        %v4233 = vadd.f32 %v4114, %v4221
        %v4234 = vadd.f32 %v4115, %v4223
        %v4235 = vadd.f32 %v4116, %v4227
        %v4236 = vadd.f32 %v4117, %v4229
        %s4237 = scalar_lea.vmem %s4, 456
        %v4238 = vld [vmem:[%s4237] sm:$0xff]
        %v4239 = vld [vmem:[%s4237 + $0x8] sm:$0xff]
        %v4240 = vld [vmem:[%s4237 + $0x10] sm:$0xf]
        %4241 = vrot.lane.b32.xlu0 %v1990, 88
        %v4242 = vpop.permute.xlu0 %4241
        %4243 = vrot.lane.b32.xlu0 %v2001, 88
        %v4244 = vpop.permute.xlu0 %4243
        %4245 = vrot.lane.b32.xlu0 %v1996, 88
        %v4246 = vpop.permute.xlu0 %4245
        %4247 = vrot.lane.b32.xlu0 %v2002, 88
        %v4248 = vpop.permute.xlu0 %4247
        %vm4249 = vcmask 719872
        %v4250 = vsel %vm4249, %v4242, %v4244
        %v4251 = vsel %vm4249, %v4246, %v4248
        %v4255 = vsel %vm2026, %v4238, 0
        %v4258 = vsel %vm2026, %v4239, 0
        %v4261 = vsel %vm2026, %v4240, 0
        %v4263 = vsel %vm883, %v4251, 0
        %v4265 = vsel %vm883, %v4248, 0
        %4267 = vmatprep.subr.mxu0 %v4244
        %4268 = vmatpush1.msra.mxu0 %v4250
        %4269 = vmatprep.subr.mxu0 %v4265
        %4270 = vmatpush1.msra.mxu0 %v4263
        %4271 = vmatprep.subr.mxu0 0.0
        %4272 = vmatpush1.msra.mxu0 0.0
        %4273 = vmatprep.subr.mxu0 0.0
        %4274 = vmatpush1.msra.mxu0 0.0
        %4275 = vmatprep.subr.mxu0 0.0
        %4276 = vmatpush1.msra.mxu0 0.0
        %4277 = vmatprep.subr.mxu0 0.0
        %4278 = vmatpush1.msra.mxu0 0.0
        %4279 = vmatprep.subr.mxu0 0.0
        %4280 = vmatpush1.msra.mxu0 0.0
        %4281 = vmatprep.subr.mxu0 0.0
        %4282 = vmatpush1.msra.mxu0 0.0
        %4283 = vmatprep.subr.mxu0 0.0
        %4284 = vmatpush1.msra.mxu0 0.0
        %4285 = vmatprep.subr.mxu0 0.0
        %4286 = vmatpush1.msra.mxu0 0.0
        %4287 = vmatprep.subr.mxu0 0.0
        %4288 = vmatpush1.msra.mxu0 0.0
        %4289 = vmatprep.subr.mxu0 0.0
        %4290 = vmatpush1.msra.mxu0 0.0
        %4291 = vmatprep.subr.mxu0 0.0
        %4292 = vmatpush1.msra.mxu0 0.0
        %4293 = vmatprep.subr.mxu0 0.0
        %4294 = vmatpush1.msra.mxu0 0.0
        %4295 = vmatprep.subr.mxu0 0.0
        %4296 = vmatpush1.msra.mxu0 0.0
        %4297 = vmatprep.subr.mxu0 0.0
        %4298 = vmatpush1.msra.mxu0 0.0
        %4299 = vmatprep.subr.mxu0 0.0
        %4300 = vmatpush1.msra.mxu0 0.0
        %4301 = vmatprep.subr.mxu0 0.0
        %4302 = vmatpush1.msra.mxu0 0.0
        %4303 = vmatprep.subr.mxu0 0.0
        %4304 = vmatpush1.msra.mxu0 0.0
        %4305 = vmatprep.subr.mxu0 0.0
        %4306 = vmatpush1.msra.mxu0 0.0
        %4307 = vmatprep.subr.mxu0 0.0
        %4308 = vmatpush1.msra.mxu0 0.0
        %4309 = vmatprep.subr.mxu0 0.0
        %4310 = vmatpush1.msra.mxu0 0.0
        %4311 = vmatprep.subr.mxu0 0.0
        %4312 = vmatpush1.msra.mxu0 0.0
        %4313 = vmatprep.subr.mxu0 0.0
        %4314 = vmatpush1.msra.mxu0 0.0
        %4315 = vmatprep.subr.mxu0 0.0
        %4316 = vmatpush1.msra.mxu0 0.0
        %4317 = vmatprep.subr.mxu0 0.0
        %4318 = vmatpush1.msra.mxu0 0.0
        %4319 = vmatprep.subr.mxu0 0.0
        %4320 = vmatpush1.msra.mxu0 0.0
        %4321 = vmatprep.subr.mxu0 0.0
        %4322 = vmatpush1.msra.mxu0 0.0
        %4323 = vmatprep.subr.mxu0 0.0
        %4324 = vmatpush1.msra.mxu0 0.0
        %4325 = vmatprep.subr.mxu0 0.0
        %4326 = vmatpush1.msra.mxu0 0.0
        %4327 = vmatprep.subr.mxu0 0.0
        %4328 = vmatpush1.msra.mxu0 0.0
        %4329 = vmatprep.subr.mxu0 0.0
        %4330 = vmatpush1.msra.mxu0 0.0
        %4331 = vmatprep.mubr.f32.mxu0 0.0
        %4332 = vmatmul.mubr.f32.gmra.mrb[0].mxu0 %v4255
        %v4333 = vpop.f32.mrb[0].mxu0
        %v4334 = vadd.f32 0.0, %v4333
        %v4335 = vpop.f32.mrb[0].mxu0
        %v4336 = vadd.f32 0.0, %v4335
        %4337 = vmatprep.mubr.f32.mxu0 0.0
        %4338 = vmatmul.mubr.f32.gmra.mrb[0].mxu0 %v4258
        %v4339 = vpop.f32.mrb[0].mxu0
        %v4340 = vadd.f32 0.0, %v4339
        %v4341 = vpop.f32.mrb[0].mxu0
        %v4342 = vadd.f32 0.0, %v4341
        %4343 = vmatprep.mubr.f32.mxu0 0.0
        %4344 = vmatmul.mubr.f32.gmra.mrb[0].mxu0 %v4261
        %v4345 = vpop.f32.mrb[0].mxu0
        %v4346 = vadd.f32 0.0, %v4345
        %v4347 = vpop.f32.mrb[0].mxu0
        %v4348 = vadd.f32 0.0, %v4347
        %4349 = vdwg.mxu0
        %v4350 = vadd.f32 %v4231, %v4334
        %v4351 = vadd.f32 %v4232, %v4336
        %v4352 = vadd.f32 %v4233, %v4340
        %v4353 = vadd.f32 %v4234, %v4342
        %v4354 = vadd.f32 %v4235, %v4346
        %v4355 = vadd.f32 %v4236, %v4348
        %s4356 = scalar_lea.vmem %s4, 480
        %v4357 = vld [vmem:[%s4356] sm:$0xff]
        %v4358 = vld [vmem:[%s4356 + $0x8] sm:$0xff]
        %v4359 = vld [vmem:[%s4356 + $0x10] sm:$0xf]
        %4360 = vrot.lane.b32.xlu0 %v1990, 80
        %v4361 = vpop.permute.xlu0 %4360
        %4362 = vrot.lane.b32.xlu0 %v2001, 80
        %v4363 = vpop.permute.xlu0 %4362
        %4364 = vrot.lane.b32.xlu0 %v1996, 80
        %v4365 = vpop.permute.xlu0 %4364
        %4366 = vrot.lane.b32.xlu0 %v2002, 80
        %v4367 = vpop.permute.xlu0 %4366
        %vm4368 = vcmask 654336
        %v4369 = vsel %vm4368, %v4361, %v4363
        %v4370 = vsel %vm4368, %v4365, %v4367
        %v4374 = vsel %vm2026, %v4357, 0
        %v4377 = vsel %vm2026, %v4358, 0
        %v4380 = vsel %vm2026, %v4359, 0
        %v4382 = vsel %vm883, %v4370, 0
        %v4384 = vsel %vm883, %v4367, 0
        %4386 = vmatprep.subr.mxu0 %v4363
        %4387 = vmatpush1.msra.mxu0 %v4369
        %4388 = vmatprep.subr.mxu0 %v4384
        %4389 = vmatpush1.msra.mxu0 %v4382
        %4390 = vmatprep.subr.mxu0 0.0
        %4391 = vmatpush1.msra.mxu0 0.0
        %4392 = vmatprep.subr.mxu0 0.0
        %4393 = vmatpush1.msra.mxu0 0.0
        %4394 = vmatprep.subr.mxu0 0.0
        %4395 = vmatpush1.msra.mxu0 0.0
        %4396 = vmatprep.subr.mxu0 0.0
        %4397 = vmatpush1.msra.mxu0 0.0
        %4398 = vmatprep.subr.mxu0 0.0
        %4399 = vmatpush1.msra.mxu0 0.0
        %4400 = vmatprep.subr.mxu0 0.0
        %4401 = vmatpush1.msra.mxu0 0.0
        %4402 = vmatprep.subr.mxu0 0.0
        %4403 = vmatpush1.msra.mxu0 0.0
        %4404 = vmatprep.subr.mxu0 0.0
        %4405 = vmatpush1.msra.mxu0 0.0
        %4406 = vmatprep.subr.mxu0 0.0
        %4407 = vmatpush1.msra.mxu0 0.0
        %4408 = vmatprep.subr.mxu0 0.0
        %4409 = vmatpush1.msra.mxu0 0.0
        %4410 = vmatprep.subr.mxu0 0.0
        %4411 = vmatpush1.msra.mxu0 0.0
        %4412 = vmatprep.subr.mxu0 0.0
        %4413 = vmatpush1.msra.mxu0 0.0
        %4414 = vmatprep.subr.mxu0 0.0
        %4415 = vmatpush1.msra.mxu0 0.0
        %4416 = vmatprep.subr.mxu0 0.0
        %4417 = vmatpush1.msra.mxu0 0.0
        %4418 = vmatprep.subr.mxu0 0.0
        %4419 = vmatpush1.msra.mxu0 0.0
        %4420 = vmatprep.subr.mxu0 0.0
        %4421 = vmatpush1.msra.mxu0 0.0
        %4422 = vmatprep.subr.mxu0 0.0
        %4423 = vmatpush1.msra.mxu0 0.0
        %4424 = vmatprep.subr.mxu0 0.0
        %4425 = vmatpush1.msra.mxu0 0.0
        %4426 = vmatprep.subr.mxu0 0.0
        %4427 = vmatpush1.msra.mxu0 0.0
        %4428 = vmatprep.subr.mxu0 0.0
        %4429 = vmatpush1.msra.mxu0 0.0
        %4430 = vmatprep.subr.mxu0 0.0
        %4431 = vmatpush1.msra.mxu0 0.0
        %4432 = vmatprep.subr.mxu0 0.0
        %4433 = vmatpush1.msra.mxu0 0.0
        %4434 = vmatprep.subr.mxu0 0.0
        %4435 = vmatpush1.msra.mxu0 0.0
        %4436 = vmatprep.subr.mxu0 0.0
        %4437 = vmatpush1.msra.mxu0 0.0
        %4438 = vmatprep.subr.mxu0 0.0
        %4439 = vmatpush1.msra.mxu0 0.0
        %4440 = vmatprep.subr.mxu0 0.0
        %4441 = vmatpush1.msra.mxu0 0.0
        %4442 = vmatprep.subr.mxu0 0.0
        %4443 = vmatpush1.msra.mxu0 0.0
        %4444 = vmatprep.subr.mxu0 0.0
        %4445 = vmatpush1.msra.mxu0 0.0
        %4446 = vmatprep.subr.mxu0 0.0
        %4447 = vmatpush1.msra.mxu0 0.0
        %4448 = vmatprep.subr.mxu0 0.0
        %4449 = vmatpush1.msra.mxu0 0.0
        %4450 = vmatprep.mubr.f32.mxu0 0.0
        %4451 = vmatmul.mubr.f32.gmra.mrb[0].mxu0 %v4374
        %v4452 = vpop.f32.mrb[0].mxu0
        %v4453 = vadd.f32 0.0, %v4452
        %v4454 = vpop.f32.mrb[0].mxu0
        %v4455 = vadd.f32 0.0, %v4454
        %4456 = vmatprep.mubr.f32.mxu0 0.0
        %4457 = vmatmul.mubr.f32.gmra.mrb[0].mxu0 %v4377
        %v4458 = vpop.f32.mrb[0].mxu0
        %v4459 = vadd.f32 0.0, %v4458
        %v4460 = vpop.f32.mrb[0].mxu0
        %v4461 = vadd.f32 0.0, %v4460
        %4462 = vmatprep.mubr.f32.mxu0 0.0
        %4463 = vmatmul.mubr.f32.gmra.mrb[0].mxu0 %v4380
        %v4464 = vpop.f32.mrb[0].mxu0
        %v4465 = vadd.f32 0.0, %v4464
        %v4466 = vpop.f32.mrb[0].mxu0
        %v4467 = vadd.f32 0.0, %v4466
        %4468 = vdwg.mxu0
        %v4469 = vadd.f32 %v4350, %v4453
        %v4470 = vadd.f32 %v4351, %v4455
        %v4471 = vadd.f32 %v4352, %v4459
        %v4472 = vadd.f32 %v4353, %v4461
        %v4473 = vadd.f32 %v4354, %v4465
        %v4474 = vadd.f32 %v4355, %v4467
        %s4475 = scalar_lea.vmem %s4, 504
        %v4476 = vld [vmem:[%s4475] sm:$0xff]
        %v4477 = vld [vmem:[%s4475 + $0x8] sm:$0xff]
        %v4478 = vld [vmem:[%s4475 + $0x10] sm:$0xf]
        %4479 = vrot.lane.b32.xlu0 %v1990, 79
        %v4480 = vpop.permute.xlu0 %4479
        %4481 = vrot.lane.b32.xlu0 %v2001, 79
        %v4482 = vpop.permute.xlu0 %4481
        %4483 = vrot.lane.b32.xlu0 %v1996, 79
        %v4484 = vpop.permute.xlu0 %4483
        %4485 = vrot.lane.b32.xlu0 %v2002, 79
        %v4486 = vpop.permute.xlu0 %4485
        %vm4487 = vcmask 646144
        %v4488 = vsel %vm4487, %v4480, %v4482
        %v4489 = vsel %vm4487, %v4484, %v4486
        %v4493 = vsel %vm2026, %v4476, 0
        %v4496 = vsel %vm2026, %v4477, 0
        %v4499 = vsel %vm2026, %v4478, 0
        %v4501 = vsel %vm883, %v4489, 0
        %v4503 = vsel %vm883, %v4486, 0
        %4505 = vmatprep.subr.mxu0 %v4482
        %4506 = vmatpush1.msra.mxu0 %v4488
        %4507 = vmatprep.subr.mxu0 %v4503
        %4508 = vmatpush1.msra.mxu0 %v4501
        %4509 = vmatprep.subr.mxu0 0.0
        %4510 = vmatpush1.msra.mxu0 0.0
        %4511 = vmatprep.subr.mxu0 0.0
        %4512 = vmatpush1.msra.mxu0 0.0
        %4513 = vmatprep.subr.mxu0 0.0
        %4514 = vmatpush1.msra.mxu0 0.0
        %4515 = vmatprep.subr.mxu0 0.0
        %4516 = vmatpush1.msra.mxu0 0.0
        %4517 = vmatprep.subr.mxu0 0.0
        %4518 = vmatpush1.msra.mxu0 0.0
        %4519 = vmatprep.subr.mxu0 0.0
        %4520 = vmatpush1.msra.mxu0 0.0
        %4521 = vmatprep.subr.mxu0 0.0
        %4522 = vmatpush1.msra.mxu0 0.0
        %4523 = vmatprep.subr.mxu0 0.0
        %4524 = vmatpush1.msra.mxu0 0.0
        %4525 = vmatprep.subr.mxu0 0.0
        %4526 = vmatpush1.msra.mxu0 0.0
        %4527 = vmatprep.subr.mxu0 0.0
        %4528 = vmatpush1.msra.mxu0 0.0
        %4529 = vmatprep.subr.mxu0 0.0
        %4530 = vmatpush1.msra.mxu0 0.0
        %4531 = vmatprep.subr.mxu0 0.0
        %4532 = vmatpush1.msra.mxu0 0.0
        %4533 = vmatprep.subr.mxu0 0.0
        %4534 = vmatpush1.msra.mxu0 0.0
        %4535 = vmatprep.subr.mxu0 0.0
        %4536 = vmatpush1.msra.mxu0 0.0
        %4537 = vmatprep.subr.mxu0 0.0
        %4538 = vmatpush1.msra.mxu0 0.0
        %4539 = vmatprep.subr.mxu0 0.0
        %4540 = vmatpush1.msra.mxu0 0.0
        %4541 = vmatprep.subr.mxu0 0.0
        %4542 = vmatpush1.msra.mxu0 0.0
        %4543 = vmatprep.subr.mxu0 0.0
        %4544 = vmatpush1.msra.mxu0 0.0
        %4545 = vmatprep.subr.mxu0 0.0
        %4546 = vmatpush1.msra.mxu0 0.0
        %4547 = vmatprep.subr.mxu0 0.0
        %4548 = vmatpush1.msra.mxu0 0.0
        %4549 = vmatprep.subr.mxu0 0.0
        %4550 = vmatpush1.msra.mxu0 0.0
        %4551 = vmatprep.subr.mxu0 0.0
        %4552 = vmatpush1.msra.mxu0 0.0
        %4553 = vmatprep.subr.mxu0 0.0
        %4554 = vmatpush1.msra.mxu0 0.0
        %4555 = vmatprep.subr.mxu0 0.0
        %4556 = vmatpush1.msra.mxu0 0.0
        %4557 = vmatprep.subr.mxu0 0.0
        %4558 = vmatpush1.msra.mxu0 0.0
        %4559 = vmatprep.subr.mxu0 0.0
        %4560 = vmatpush1.msra.mxu0 0.0
        %4561 = vmatprep.subr.mxu0 0.0
        %4562 = vmatpush1.msra.mxu0 0.0
        %4563 = vmatprep.subr.mxu0 0.0
        %4564 = vmatpush1.msra.mxu0 0.0
        %4565 = vmatprep.subr.mxu0 0.0
        %4566 = vmatpush1.msra.mxu0 0.0
        %4567 = vmatprep.subr.mxu0 0.0
        %4568 = vmatpush1.msra.mxu0 0.0
        %4569 = vmatprep.mubr.f32.mxu0 0.0
        %4570 = vmatmul.mubr.f32.gmra.mrb[0].mxu0 %v4493
        %v4571 = vpop.f32.mrb[0].mxu0
        %v4572 = vadd.f32 0.0, %v4571
        %v4573 = vpop.f32.mrb[0].mxu0
        %v4574 = vadd.f32 0.0, %v4573
        %4575 = vmatprep.mubr.f32.mxu0 0.0
        %4576 = vmatmul.mubr.f32.gmra.mrb[0].mxu0 %v4496
        %v4577 = vpop.f32.mrb[0].mxu0
        %v4578 = vadd.f32 0.0, %v4577
        %v4579 = vpop.f32.mrb[0].mxu0
        %v4580 = vadd.f32 0.0, %v4579
        %4581 = vmatprep.mubr.f32.mxu0 0.0
        %4582 = vmatmul.mubr.f32.gmra.mrb[0].mxu0 %v4499
        %v4583 = vpop.f32.mrb[0].mxu0
        %v4584 = vadd.f32 0.0, %v4583
        %v4585 = vpop.f32.mrb[0].mxu0
        %v4586 = vadd.f32 0.0, %v4585
        %4587 = vdwg.mxu0
        %v4588 = vadd.f32 %v4469, %v4572
        %v4589 = vadd.f32 %v4470, %v4574
        %v4590 = vadd.f32 %v4471, %v4578
        %v4591 = vadd.f32 %v4472, %v4580
        %v4592 = vadd.f32 %v4473, %v4584
        %v4593 = vadd.f32 %v4474, %v4586
        %s4594 = scalar_lea.vmem %s4, 528
        %v4595 = vld [vmem:[%s4594] sm:$0xff]
        %v4596 = vld [vmem:[%s4594 + $0x8] sm:$0xff]
        %v4597 = vld [vmem:[%s4594 + $0x10] sm:$0xf]
        %4598 = vrot.lane.b32.xlu0 %v1990, 78
        %v4599 = vpop.permute.xlu0 %4598
        %4600 = vrot.lane.b32.xlu0 %v2001, 78
        %v4601 = vpop.permute.xlu0 %4600
        %4602 = vrot.lane.b32.xlu0 %v1996, 78
        %v4603 = vpop.permute.xlu0 %4602
        %4604 = vrot.lane.b32.xlu0 %v2002, 78
        %v4605 = vpop.permute.xlu0 %4604
        %vm4606 = vcmask 637952
        %v4607 = vsel %vm4606, %v4599, %v4601
        %v4608 = vsel %vm4606, %v4603, %v4605
        %v4612 = vsel %vm2026, %v4595, 0
        %v4615 = vsel %vm2026, %v4596, 0
        %v4618 = vsel %vm2026, %v4597, 0
        %v4620 = vsel %vm883, %v4608, 0
        %v4622 = vsel %vm883, %v4605, 0
        %4624 = vmatprep.subr.mxu0 %v4601
        %4625 = vmatpush1.msra.mxu0 %v4607
        %4626 = vmatprep.subr.mxu0 %v4622
        %4627 = vmatpush1.msra.mxu0 %v4620
        %4628 = vmatprep.subr.mxu0 0.0
        %4629 = vmatpush1.msra.mxu0 0.0
        %4630 = vmatprep.subr.mxu0 0.0
        %4631 = vmatpush1.msra.mxu0 0.0
        %4632 = vmatprep.subr.mxu0 0.0
        %4633 = vmatpush1.msra.mxu0 0.0
        %4634 = vmatprep.subr.mxu0 0.0
        %4635 = vmatpush1.msra.mxu0 0.0
        %4636 = vmatprep.subr.mxu0 0.0
        %4637 = vmatpush1.msra.mxu0 0.0
        %4638 = vmatprep.subr.mxu0 0.0
        %4639 = vmatpush1.msra.mxu0 0.0
        %4640 = vmatprep.subr.mxu0 0.0
        %4641 = vmatpush1.msra.mxu0 0.0
        %4642 = vmatprep.subr.mxu0 0.0
        %4643 = vmatpush1.msra.mxu0 0.0
        %4644 = vmatprep.subr.mxu0 0.0
        %4645 = vmatpush1.msra.mxu0 0.0
        %4646 = vmatprep.subr.mxu0 0.0
        %4647 = vmatpush1.msra.mxu0 0.0
        %4648 = vmatprep.subr.mxu0 0.0
        %4649 = vmatpush1.msra.mxu0 0.0
        %4650 = vmatprep.subr.mxu0 0.0
        %4651 = vmatpush1.msra.mxu0 0.0
        %4652 = vmatprep.subr.mxu0 0.0
        %4653 = vmatpush1.msra.mxu0 0.0
        %4654 = vmatprep.subr.mxu0 0.0
        %4655 = vmatpush1.msra.mxu0 0.0
        %4656 = vmatprep.subr.mxu0 0.0
        %4657 = vmatpush1.msra.mxu0 0.0
        %4658 = vmatprep.subr.mxu0 0.0
        %4659 = vmatpush1.msra.mxu0 0.0
        %4660 = vmatprep.subr.mxu0 0.0
        %4661 = vmatpush1.msra.mxu0 0.0
        %4662 = vmatprep.subr.mxu0 0.0
        %4663 = vmatpush1.msra.mxu0 0.0
        %4664 = vmatprep.subr.mxu0 0.0
        %4665 = vmatpush1.msra.mxu0 0.0
        %4666 = vmatprep.subr.mxu0 0.0
        %4667 = vmatpush1.msra.mxu0 0.0
        %4668 = vmatprep.subr.mxu0 0.0
        %4669 = vmatpush1.msra.mxu0 0.0
        %4670 = vmatprep.subr.mxu0 0.0
        %4671 = vmatpush1.msra.mxu0 0.0
        %4672 = vmatprep.subr.mxu0 0.0
        %4673 = vmatpush1.msra.mxu0 0.0
        %4674 = vmatprep.subr.mxu0 0.0
        %4675 = vmatpush1.msra.mxu0 0.0
        %4676 = vmatprep.subr.mxu0 0.0
        %4677 = vmatpush1.msra.mxu0 0.0
        %4678 = vmatprep.subr.mxu0 0.0
        %4679 = vmatpush1.msra.mxu0 0.0
        %4680 = vmatprep.subr.mxu0 0.0
        %4681 = vmatpush1.msra.mxu0 0.0
        %4682 = vmatprep.subr.mxu0 0.0
        %4683 = vmatpush1.msra.mxu0 0.0
        %4684 = vmatprep.subr.mxu0 0.0
        %4685 = vmatpush1.msra.mxu0 0.0
        %4686 = vmatprep.subr.mxu0 0.0
        %4687 = vmatpush1.msra.mxu0 0.0
        %4688 = vmatprep.mubr.f32.mxu0 0.0
        %4689 = vmatmul.mubr.f32.gmra.mrb[0].mxu0 %v4612
        %v4690 = vpop.f32.mrb[0].mxu0
        %v4691 = vadd.f32 0.0, %v4690
        %v4692 = vpop.f32.mrb[0].mxu0
        %v4693 = vadd.f32 0.0, %v4692
        %4694 = vmatprep.mubr.f32.mxu0 0.0
        %4695 = vmatmul.mubr.f32.gmra.mrb[0].mxu0 %v4615
        %v4696 = vpop.f32.mrb[0].mxu0
        %v4697 = vadd.f32 0.0, %v4696
        %v4698 = vpop.f32.mrb[0].mxu0
        %v4699 = vadd.f32 0.0, %v4698
        %4700 = vmatprep.mubr.f32.mxu0 0.0
        %4701 = vmatmul.mubr.f32.gmra.mrb[0].mxu0 %v4618
        %v4702 = vpop.f32.mrb[0].mxu0
        %v4703 = vadd.f32 0.0, %v4702
        %v4704 = vpop.f32.mrb[0].mxu0
        %v4705 = vadd.f32 0.0, %v4704
        %4706 = vdwg.mxu0
        %v4707 = vadd.f32 %v4588, %v4691
        %v4708 = vadd.f32 %v4589, %v4693
        %v4709 = vadd.f32 %v4590, %v4697
        %v4710 = vadd.f32 %v4591, %v4699
        %v4711 = vadd.f32 %v4592, %v4703
        %v4712 = vadd.f32 %v4593, %v4705
        %s4713 = scalar_lea.vmem %s4, 552
        %v4714 = vld [vmem:[%s4713] sm:$0xff]
        %v4715 = vld [vmem:[%s4713 + $0x8] sm:$0xff]
        %v4716 = vld [vmem:[%s4713 + $0x10] sm:$0xf]
        %4717 = vrot.lane.b32.xlu0 %v1990, 77
        %v4718 = vpop.permute.xlu0 %4717
        %4719 = vrot.lane.b32.xlu0 %v2001, 77
        %v4720 = vpop.permute.xlu0 %4719
        %4721 = vrot.lane.b32.xlu0 %v1996, 77
        %v4722 = vpop.permute.xlu0 %4721
        %4723 = vrot.lane.b32.xlu0 %v2002, 77
        %v4724 = vpop.permute.xlu0 %4723
        %vm4725 = vcmask 629760
        %v4726 = vsel %vm4725, %v4718, %v4720
        %v4727 = vsel %vm4725, %v4722, %v4724
        %v4731 = vsel %vm2026, %v4714, 0
        %v4734 = vsel %vm2026, %v4715, 0
        %v4737 = vsel %vm2026, %v4716, 0
        %v4739 = vsel %vm883, %v4727, 0
        %v4741 = vsel %vm883, %v4724, 0
        %4743 = vmatprep.subr.mxu0 %v4720
        %4744 = vmatpush1.msra.mxu0 %v4726
        %4745 = vmatprep.subr.mxu0 %v4741
        %4746 = vmatpush1.msra.mxu0 %v4739
        %4747 = vmatprep.subr.mxu0 0.0
        %4748 = vmatpush1.msra.mxu0 0.0
        %4749 = vmatprep.subr.mxu0 0.0
        %4750 = vmatpush1.msra.mxu0 0.0
        %4751 = vmatprep.subr.mxu0 0.0
        %4752 = vmatpush1.msra.mxu0 0.0
        %4753 = vmatprep.subr.mxu0 0.0
        %4754 = vmatpush1.msra.mxu0 0.0
        %4755 = vmatprep.subr.mxu0 0.0
        %4756 = vmatpush1.msra.mxu0 0.0
        %4757 = vmatprep.subr.mxu0 0.0
        %4758 = vmatpush1.msra.mxu0 0.0
        %4759 = vmatprep.subr.mxu0 0.0
        %4760 = vmatpush1.msra.mxu0 0.0
        %4761 = vmatprep.subr.mxu0 0.0
        %4762 = vmatpush1.msra.mxu0 0.0
        %4763 = vmatprep.subr.mxu0 0.0
        %4764 = vmatpush1.msra.mxu0 0.0
        %4765 = vmatprep.subr.mxu0 0.0
        %4766 = vmatpush1.msra.mxu0 0.0
        %4767 = vmatprep.subr.mxu0 0.0
        %4768 = vmatpush1.msra.mxu0 0.0
        %4769 = vmatprep.subr.mxu0 0.0
        %4770 = vmatpush1.msra.mxu0 0.0
        %4771 = vmatprep.subr.mxu0 0.0
        %4772 = vmatpush1.msra.mxu0 0.0
        %4773 = vmatprep.subr.mxu0 0.0
        %4774 = vmatpush1.msra.mxu0 0.0
        %4775 = vmatprep.subr.mxu0 0.0
        %4776 = vmatpush1.msra.mxu0 0.0
        %4777 = vmatprep.subr.mxu0 0.0
        %4778 = vmatpush1.msra.mxu0 0.0
        %4779 = vmatprep.subr.mxu0 0.0
        %4780 = vmatpush1.msra.mxu0 0.0
        %4781 = vmatprep.subr.mxu0 0.0
        %4782 = vmatpush1.msra.mxu0 0.0
        %4783 = vmatprep.subr.mxu0 0.0
        %4784 = vmatpush1.msra.mxu0 0.0
        %4785 = vmatprep.subr.mxu0 0.0
        %4786 = vmatpush1.msra.mxu0 0.0
        %4787 = vmatprep.subr.mxu0 0.0
        %4788 = vmatpush1.msra.mxu0 0.0
        %4789 = vmatprep.subr.mxu0 0.0
        %4790 = vmatpush1.msra.mxu0 0.0
        %4791 = vmatprep.subr.mxu0 0.0
        %4792 = vmatpush1.msra.mxu0 0.0
        %4793 = vmatprep.subr.mxu0 0.0
        %4794 = vmatpush1.msra.mxu0 0.0
        %4795 = vmatprep.subr.mxu0 0.0
        %4796 = vmatpush1.msra.mxu0 0.0
        %4797 = vmatprep.subr.mxu0 0.0
        %4798 = vmatpush1.msra.mxu0 0.0
        %4799 = vmatprep.subr.mxu0 0.0
        %4800 = vmatpush1.msra.mxu0 0.0
        %4801 = vmatprep.subr.mxu0 0.0
        %4802 = vmatpush1.msra.mxu0 0.0
        %4803 = vmatprep.subr.mxu0 0.0
        %4804 = vmatpush1.msra.mxu0 0.0
        %4805 = vmatprep.subr.mxu0 0.0
        %4806 = vmatpush1.msra.mxu0 0.0
        %4807 = vmatprep.mubr.f32.mxu0 0.0
        %4808 = vmatmul.mubr.f32.gmra.mrb[0].mxu0 %v4731
        %v4809 = vpop.f32.mrb[0].mxu0
        %v4810 = vadd.f32 0.0, %v4809
        %v4811 = vpop.f32.mrb[0].mxu0
        %v4812 = vadd.f32 0.0, %v4811
        %4813 = vmatprep.mubr.f32.mxu0 0.0
        %4814 = vmatmul.mubr.f32.gmra.mrb[0].mxu0 %v4734
        %v4815 = vpop.f32.mrb[0].mxu0
        %v4816 = vadd.f32 0.0, %v4815
        %v4817 = vpop.f32.mrb[0].mxu0
        %v4818 = vadd.f32 0.0, %v4817
        %4819 = vmatprep.mubr.f32.mxu0 0.0
        %4820 = vmatmul.mubr.f32.gmra.mrb[0].mxu0 %v4737
        %v4821 = vpop.f32.mrb[0].mxu0
        %v4822 = vadd.f32 0.0, %v4821
        %v4823 = vpop.f32.mrb[0].mxu0
        %v4824 = vadd.f32 0.0, %v4823
        %4825 = vdwg.mxu0
        %v4826 = vadd.f32 %v4707, %v4810
        %v4827 = vadd.f32 %v4708, %v4812
        %v4828 = vadd.f32 %v4709, %v4816
        %v4829 = vadd.f32 %v4710, %v4818
        %v4830 = vadd.f32 %v4711, %v4822
        %v4831 = vadd.f32 %v4712, %v4824
        %s4832 = scalar_lea.vmem %s4, 576
        %v4833 = vld [vmem:[%s4832] sm:$0xff]
        %v4834 = vld [vmem:[%s4832 + $0x8] sm:$0xff]
        %v4835 = vld [vmem:[%s4832 + $0x10] sm:$0xf]
        %4836 = vrot.lane.b32.xlu0 %v1990, 76
        %v4837 = vpop.permute.xlu0 %4836
        %4838 = vrot.lane.b32.xlu0 %v2001, 76
        %v4839 = vpop.permute.xlu0 %4838
        %4840 = vrot.lane.b32.xlu0 %v1996, 76
        %v4841 = vpop.permute.xlu0 %4840
        %4842 = vrot.lane.b32.xlu0 %v2002, 76
        %v4843 = vpop.permute.xlu0 %4842
        %vm4844 = vcmask 621568
        %v4845 = vsel %vm4844, %v4837, %v4839
        %v4846 = vsel %vm4844, %v4841, %v4843
        %v4850 = vsel %vm2026, %v4833, 0
        %v4853 = vsel %vm2026, %v4834, 0
        %v4856 = vsel %vm2026, %v4835, 0
        %v4858 = vsel %vm883, %v4846, 0
        %v4860 = vsel %vm883, %v4843, 0
        %4862 = vmatprep.subr.mxu0 %v4839
        %4863 = vmatpush1.msra.mxu0 %v4845
        %4864 = vmatprep.subr.mxu0 %v4860
        %4865 = vmatpush1.msra.mxu0 %v4858
        %4866 = vmatprep.subr.mxu0 0.0
        %4867 = vmatpush1.msra.mxu0 0.0
        %4868 = vmatprep.subr.mxu0 0.0
        %4869 = vmatpush1.msra.mxu0 0.0
        %4870 = vmatprep.subr.mxu0 0.0
        %4871 = vmatpush1.msra.mxu0 0.0
        %4872 = vmatprep.subr.mxu0 0.0
        %4873 = vmatpush1.msra.mxu0 0.0
        %4874 = vmatprep.subr.mxu0 0.0
        %4875 = vmatpush1.msra.mxu0 0.0
        %4876 = vmatprep.subr.mxu0 0.0
        %4877 = vmatpush1.msra.mxu0 0.0
        %4878 = vmatprep.subr.mxu0 0.0
        %4879 = vmatpush1.msra.mxu0 0.0
        %4880 = vmatprep.subr.mxu0 0.0
        %4881 = vmatpush1.msra.mxu0 0.0
        %4882 = vmatprep.subr.mxu0 0.0
        %4883 = vmatpush1.msra.mxu0 0.0
        %4884 = vmatprep.subr.mxu0 0.0
        %4885 = vmatpush1.msra.mxu0 0.0
        %4886 = vmatprep.subr.mxu0 0.0
        %4887 = vmatpush1.msra.mxu0 0.0
        %4888 = vmatprep.subr.mxu0 0.0
        %4889 = vmatpush1.msra.mxu0 0.0
        %4890 = vmatprep.subr.mxu0 0.0
        %4891 = vmatpush1.msra.mxu0 0.0
        %4892 = vmatprep.subr.mxu0 0.0
        %4893 = vmatpush1.msra.mxu0 0.0
        %4894 = vmatprep.subr.mxu0 0.0
        %4895 = vmatpush1.msra.mxu0 0.0
        %4896 = vmatprep.subr.mxu0 0.0
        %4897 = vmatpush1.msra.mxu0 0.0
        %4898 = vmatprep.subr.mxu0 0.0
        %4899 = vmatpush1.msra.mxu0 0.0
        %4900 = vmatprep.subr.mxu0 0.0
        %4901 = vmatpush1.msra.mxu0 0.0
        %4902 = vmatprep.subr.mxu0 0.0
        %4903 = vmatpush1.msra.mxu0 0.0
        %4904 = vmatprep.subr.mxu0 0.0
        %4905 = vmatpush1.msra.mxu0 0.0
        %4906 = vmatprep.subr.mxu0 0.0
        %4907 = vmatpush1.msra.mxu0 0.0
        %4908 = vmatprep.subr.mxu0 0.0
        %4909 = vmatpush1.msra.mxu0 0.0
        %4910 = vmatprep.subr.mxu0 0.0
        %4911 = vmatpush1.msra.mxu0 0.0
        %4912 = vmatprep.subr.mxu0 0.0
        %4913 = vmatpush1.msra.mxu0 0.0
        %4914 = vmatprep.subr.mxu0 0.0
        %4915 = vmatpush1.msra.mxu0 0.0
        %4916 = vmatprep.subr.mxu0 0.0
        %4917 = vmatpush1.msra.mxu0 0.0
        %4918 = vmatprep.subr.mxu0 0.0
        %4919 = vmatpush1.msra.mxu0 0.0
        %4920 = vmatprep.subr.mxu0 0.0
        %4921 = vmatpush1.msra.mxu0 0.0
        %4922 = vmatprep.subr.mxu0 0.0
        %4923 = vmatpush1.msra.mxu0 0.0
        %4924 = vmatprep.subr.mxu0 0.0
        %4925 = vmatpush1.msra.mxu0 0.0
        %4926 = vmatprep.mubr.f32.mxu0 0.0
        %4927 = vmatmul.mubr.f32.gmra.mrb[0].mxu0 %v4850
        %v4928 = vpop.f32.mrb[0].mxu0
        %v4929 = vadd.f32 0.0, %v4928
        %v4930 = vpop.f32.mrb[0].mxu0
        %v4931 = vadd.f32 0.0, %v4930
        %4932 = vmatprep.mubr.f32.mxu0 0.0
        %4933 = vmatmul.mubr.f32.gmra.mrb[0].mxu0 %v4853
        %v4934 = vpop.f32.mrb[0].mxu0
        %v4935 = vadd.f32 0.0, %v4934
        %v4936 = vpop.f32.mrb[0].mxu0
        %v4937 = vadd.f32 0.0, %v4936
        %4938 = vmatprep.mubr.f32.mxu0 0.0
        %4939 = vmatmul.mubr.f32.gmra.mrb[0].mxu0 %v4856
        %v4940 = vpop.f32.mrb[0].mxu0
        %v4941 = vadd.f32 0.0, %v4940
        %v4942 = vpop.f32.mrb[0].mxu0
        %v4943 = vadd.f32 0.0, %v4942
        %4944 = vdwg.mxu0
        %v4945 = vadd.f32 %v4826, %v4929
        %v4946 = vadd.f32 %v4827, %v4931
        %v4947 = vadd.f32 %v4828, %v4935
        %v4948 = vadd.f32 %v4829, %v4937
        %v4949 = vadd.f32 %v4830, %v4941
        %v4950 = vadd.f32 %v4831, %v4943
        %v4951 = vld [vmem:[%s5] sm:$0xff]
        %v4952 = vld [vmem:[%s5 + $0x8] sm:$0xff]
        %v4953 = vld [vmem:[%s5 + $0x10] sm:$0xf]
        %4955 = vset.pattern.permute.xlu0 0
        %4956 = vperm.xlu0 %4955, %v4951
        %v4957 = vpop.permute.xlu0 %4956
        %4960 = vset.pattern.permute.xlu0 0
        %4961 = vperm.xlu0 %4960, %v4952
        %v4962 = vpop.permute.xlu0 %4961
        %4965 = vset.pattern.permute.xlu0 0
        %4966 = vperm.xlu0 %4965, %v4953
        %v4967 = vpop.permute.xlu0 %4966
        %v4969 = vadd.f32 %v4945, %v4957
        %v4970 = vadd.f32 %v4946, %v4957
        %v4971 = vadd.f32 %v4947, %v4962
        %v4972 = vadd.f32 %v4948, %v4962
        %v4973 = vadd.f32 %v4949, %v4967
        %v4974 = vadd.f32 %v4950, %v4967
        %v4975 = vmax.f32 %v4969, 0.0
        %v4976 = vmax.f32 %v4970, 0.0
        %v4977 = vmax.f32 %v4971, 0.0
        %v4978 = vmax.f32 %v4972, 0.0
        %v4979 = vmax.f32 %v4973, 0.0
        %v4980 = vmax.f32 %v4974, 0.0
        %4987 = vrot.lane.b32.xlu0 %v4975, 127
        %v4988 = vpop.permute.xlu0 %4987
        %4989 = vrot.lane.b32.xlu0 %v4976, 127
        %v4990 = vpop.permute.xlu0 %4989
        %4991 = vrot.lane.b32.xlu0 %v4977, 127
        %v4992 = vpop.permute.xlu0 %4991
        %4993 = vrot.lane.b32.xlu0 %v4978, 127
        %v4994 = vpop.permute.xlu0 %4993
        %4995 = vrot.lane.b32.xlu0 %v4979, 127
        %v4996 = vpop.permute.xlu0 %4995
        %4997 = vrot.lane.b32.xlu0 %v4980, 127
        %v4998 = vpop.permute.xlu0 %4997
        %v4999 = vsel %vm469, %v4988, %v4990
        %v5000 = vsel %vm469, %v4992, %v4994
        %v5001 = vsel %vm469, %v4996, %v4998
        %v5008 = vmax.f32 %v4975, %v4999
        %v5009 = vmax.f32 %v4976, %v4990
        %v5010 = vmax.f32 %v4977, %v5000
        %v5011 = vmax.f32 %v4978, %v4994
        %v5012 = vmax.f32 %v4979, %v5001
        %v5013 = vmax.f32 %v4980, %v4998
        %5020 = vrot.lane.b32.xlu0 %v5008, 116
        %v5021 = vpop.permute.xlu0 %5020
        %5022 = vrot.lane.b32.xlu0 %v5009, 116
        %v5023 = vpop.permute.xlu0 %5022
        %5024 = vrot.lane.b32.xlu0 %v5010, 116
        %v5025 = vpop.permute.xlu0 %5024
        %5026 = vrot.lane.b32.xlu0 %v5011, 116
        %v5027 = vpop.permute.xlu0 %5026
        %5028 = vrot.lane.b32.xlu0 %v5012, 116
        %v5029 = vpop.permute.xlu0 %5028
        %5030 = vrot.lane.b32.xlu0 %v5013, 116
        %v5031 = vpop.permute.xlu0 %5030
        %v5032 = vsel %vm2585, %v5021, %v5023
        %v5033 = vsel %vm2585, %v5025, %v5027
        %v5034 = vsel %vm2585, %v5029, %v5031
        %v5038 = vmax.f32 %v5008, %v5032
        %v5039 = vmax.f32 %v5010, %v5033
        %v5040 = vmax.f32 %v5012, %v5034
        %v5041 = vld [vmem:[%s6] sm:$0xff]
        %v5042 = vld [vmem:[%s6 + $0x8] sm:$0xff]
        %v5043 = vld [vmem:[%s6 + $0x10] sm:$0xff]
        %v5044 = vld [vmem:[%s6 + $0x18] sm:$0xff]
        %v5045 = vld [vmem:[%s6 + $0x20] sm:$0xff]
        %v5046 = vld [vmem:[%s6 + $0x28] sm:$0xff]
        %v5047 = vld [vmem:[%s6 + $0x30] sm:$0xff]
        %v5048 = vld [vmem:[%s6 + $0x38] sm:$0xff]
        %v5049 = vld [vmem:[%s6 + $0x40] sm:$0xff]
        %v5050 = vld [vmem:[%s6 + $0x48] sm:$0xff]
        %v5052 = vsel %vm4368, %v5038, 0
        %v5055 = vsel %vm4368, %v5039, 0
        %v5058 = vsel %vm4368, %v5040, 0
        %5060 = vmatprep.subr.mxu0 0.0
        %5061 = vmatpush1.msra.mxu0 %v5041
        %5062 = vmatprep.subr.mxu0 0.0
        %5063 = vmatpush1.msra.mxu0 %v5042
        %5064 = vmatprep.subr.mxu0 0.0
        %5065 = vmatpush1.msra.mxu0 %v5043
        %5066 = vmatprep.subr.mxu0 0.0
        %5067 = vmatpush1.msra.mxu0 %v5044
        %5068 = vmatprep.subr.mxu0 0.0
        %5069 = vmatpush1.msra.mxu0 %v5045
        %5070 = vmatprep.subr.mxu0 0.0
        %5071 = vmatpush1.msra.mxu0 %v5046
        %5072 = vmatprep.subr.mxu0 0.0
        %5073 = vmatpush1.msra.mxu0 %v5047
        %5074 = vmatprep.subr.mxu0 0.0
        %5075 = vmatpush1.msra.mxu0 %v5048
        %5076 = vmatprep.subr.mxu0 0.0
        %5077 = vmatpush1.msra.mxu0 %v5049
        %5078 = vmatprep.subr.mxu0 0.0
        %5079 = vmatpush1.msra.mxu0 %v5050
        %5080 = vmatprep.subr.mxu0 0.0
        %5081 = vmatpush1.msra.mxu0 0.0
        %5082 = vmatprep.subr.mxu0 0.0
        %5083 = vmatpush1.msra.mxu0 0.0
        %5084 = vmatprep.subr.mxu0 0.0
        %5085 = vmatpush1.msra.mxu0 0.0
        %5086 = vmatprep.subr.mxu0 0.0
        %5087 = vmatpush1.msra.mxu0 0.0
        %5088 = vmatprep.subr.mxu0 0.0
        %5089 = vmatpush1.msra.mxu0 0.0
        %5090 = vmatprep.subr.mxu0 0.0
        %5091 = vmatpush1.msra.mxu0 0.0
        %5092 = vmatprep.subr.mxu0 0.0
        %5093 = vmatpush1.msra.mxu0 0.0
        %5094 = vmatprep.subr.mxu0 0.0
        %5095 = vmatpush1.msra.mxu0 0.0
        %5096 = vmatprep.subr.mxu0 0.0
        %5097 = vmatpush1.msra.mxu0 0.0
        %5098 = vmatprep.subr.mxu0 0.0
        %5099 = vmatpush1.msra.mxu0 0.0
        %5100 = vmatprep.subr.mxu0 0.0
        %5101 = vmatpush1.msra.mxu0 0.0
        %5102 = vmatprep.subr.mxu0 0.0
        %5103 = vmatpush1.msra.mxu0 0.0
        %5104 = vmatprep.subr.mxu0 0.0
        %5105 = vmatpush1.msra.mxu0 0.0
        %5106 = vmatprep.subr.mxu0 0.0
        %5107 = vmatpush1.msra.mxu0 0.0
        %5108 = vmatprep.subr.mxu0 0.0
        %5109 = vmatpush1.msra.mxu0 0.0
        %5110 = vmatprep.subr.mxu0 0.0
        %5111 = vmatpush1.msra.mxu0 0.0
        %5112 = vmatprep.subr.mxu0 0.0
        %5113 = vmatpush1.msra.mxu0 0.0
        %5114 = vmatprep.subr.mxu0 0.0
        %5115 = vmatpush1.msra.mxu0 0.0
        %5116 = vmatprep.subr.mxu0 0.0
        %5117 = vmatpush1.msra.mxu0 0.0
        %5118 = vmatprep.subr.mxu0 0.0
        %5119 = vmatpush1.msra.mxu0 0.0
        %5120 = vmatprep.subr.mxu0 0.0
        %5121 = vmatpush1.msra.mxu0 0.0
        %5122 = vmatprep.subr.mxu0 0.0
        %5123 = vmatpush1.msra.mxu0 0.0
        %5124 = vmatprep.mubr.f32.mxu0 0.0
        %5125 = vmatmul.mubr.f32.gmra.mrb[0].mxu0 %v5052
        %v5126 = vpop.f32.mrb[0].mxu0
        %v5127 = vadd.f32 0.0, %v5126
        %v5128 = vpop.f32.mrb[0].mxu0
        %5129 = vmatprep.mubr.f32.mxu0 0.0
        %5130 = vmatmul.mubr.f32.gmra.mrb[0].mxu0 %v5055
        %v5131 = vpop.f32.mrb[0].mxu0
        %v5132 = vadd.f32 0.0, %v5131
        %v5133 = vpop.f32.mrb[0].mxu0
        %5134 = vmatprep.mubr.f32.mxu0 0.0
        %5135 = vmatmul.mubr.f32.gmra.mrb[0].mxu0 %v5058
        %v5136 = vpop.f32.mrb[0].mxu0
        %v5137 = vadd.f32 0.0, %v5136
        %v5138 = vpop.f32.mrb[0].mxu0
        %5139 = vdwg.mxu0
        %v5141 = vrot.slane %v5127, 1
        %5142 = vrot.lane.b32.xlu0 %v5141, 16
        %v5143 = vpop.permute.xlu0 %5142
        %v5145 = vrot.slane %v5127, 2
        %5146 = vrot.lane.b32.xlu0 %v5145, 32
        %v5147 = vpop.permute.xlu0 %5146
        %v5149 = vrot.slane %v5127, 3
        %5150 = vrot.lane.b32.xlu0 %v5149, 48
        %v5151 = vpop.permute.xlu0 %5150
        %v5153 = vrot.slane %v5127, 4
        %5154 = vrot.lane.b32.xlu0 %v5153, 64
        %v5155 = vpop.permute.xlu0 %5154
        %v5157 = vrot.slane %v5127, 5
        %5158 = vrot.lane.b32.xlu0 %v5157, 80
        %v5159 = vpop.permute.xlu0 %5158
        %v5161 = vrot.slane %v5127, 6
        %5162 = vrot.lane.b32.xlu0 %v5161, 96
        %v5163 = vpop.permute.xlu0 %5162
        %v5165 = vrot.slane %v5127, 7
        %5166 = vrot.lane.b32.xlu0 %v5165, 112
        %v5167 = vpop.permute.xlu0 %5166
        %v5170 = vrot.slane %v5132, 1
        %5171 = vrot.lane.b32.xlu0 %v5170, 16
        %v5172 = vpop.permute.xlu0 %5171
        %v5174 = vrot.slane %v5132, 2
        %5175 = vrot.lane.b32.xlu0 %v5174, 32
        %v5176 = vpop.permute.xlu0 %5175
        %v5178 = vrot.slane %v5132, 3
        %5179 = vrot.lane.b32.xlu0 %v5178, 48
        %v5180 = vpop.permute.xlu0 %5179
        %v5182 = vrot.slane %v5132, 4
        %5183 = vrot.lane.b32.xlu0 %v5182, 64
        %v5184 = vpop.permute.xlu0 %5183
        %v5186 = vrot.slane %v5132, 5
        %5187 = vrot.lane.b32.xlu0 %v5186, 80
        %v5188 = vpop.permute.xlu0 %5187
        %v5190 = vrot.slane %v5132, 6
        %5191 = vrot.lane.b32.xlu0 %v5190, 96
        %v5192 = vpop.permute.xlu0 %5191
        %v5194 = vrot.slane %v5132, 7
        %5195 = vrot.lane.b32.xlu0 %v5194, 112
        %v5196 = vpop.permute.xlu0 %5195
        %v5198 = vsel %vm2000, %v5127, %v5143
        %vm5199 = vcmask 261120
        %v5200 = vsel %vm5199, %v5198, %v5147
        %vm5201 = vcmask 392192
        %v5202 = vsel %vm5201, %v5200, %v5151
        %vm5203 = vcmask 523264
        %v5204 = vsel %vm5203, %v5202, %v5155
        %v5205 = vsel %vm4368, %v5204, %v5159
        %v5206 = vsel %vm693, %v5205, %v5163
        %v5207 = vsel %vm3061, %v5206, %v5167
        %v5208 = vsel %vm2000, %v5132, %v5172
        %v5209 = vsel %vm5199, %v5208, %v5176
        %v5210 = vsel %vm5201, %v5209, %v5180
        %v5211 = vsel %vm5203, %v5210, %v5184
        %v5212 = vsel %vm4368, %v5211, %v5188
        %v5213 = vsel %vm693, %v5212, %v5192
        %v5214 = vsel %vm3061, %v5213, %v5196
        %v5216 = vrot.slane %v5137, 1
        %5217 = vrot.lane.b32.xlu0 %v5216, 16
        %v5218 = vpop.permute.xlu0 %5217
        %v5220 = vrot.slane %v5137, 2
        %5221 = vrot.lane.b32.xlu0 %v5220, 32
        %v5222 = vpop.permute.xlu0 %5221
        %v5224 = vrot.slane %v5137, 3
        %5225 = vrot.lane.b32.xlu0 %v5224, 48
        %v5226 = vpop.permute.xlu0 %5225
        %v5228 = vsel %vm2000, %v5137, %v5218
        %v5229 = vsel %vm5199, %v5228, %v5222
        %v5230 = vsel %vm5201, %v5229, %v5226
        %v5231 = vld [vmem:[%s7] sm:$0xff]
        %v5232 = vld [vmem:[%s7 + $0x8] sm:$0xff]
        %v5233 = vld [vmem:[%s7 + $0x10] sm:$0xff]
        %v5234 = vld [vmem:[%s7 + $0x18] sm:$0xff]
        %v5235 = vld [vmem:[%s7 + $0x20] sm:$0xff]
        %v5236 = vld [vmem:[%s7 + $0x28] sm:$0xff]
        %v5237 = vld [vmem:[%s7 + $0x30] sm:$0xff]
        %v5238 = vld [vmem:[%s7 + $0x38] sm:$0xff]
        %v5239 = vld [vmem:[%s7 + $0x40] sm:$0xff]
        %v5240 = vld [vmem:[%s7 + $0x48] sm:$0xff]
        %v5241 = vld [vmem:[%s7 + $0x50] sm:$0xff]
        %v5242 = vld [vmem:[%s7 + $0x58] sm:$0xff]
        %v5243 = vld [vmem:[%s7 + $0x60] sm:$0xff]
        %v5244 = vld [vmem:[%s7 + $0x68] sm:$0xff]
        %v5245 = vld [vmem:[%s7 + $0x70] sm:$0xff]
        %v5246 = vld [vmem:[%s7 + $0x78] sm:$0xff]
        %v5247 = vld [vmem:[%s7 + $0x80] sm:$0xff]
        %v5248 = vld [vmem:[%s7 + $0x88] sm:$0xff]
        %v5249 = vld [vmem:[%s7 + $0x90] sm:$0xff]
        %v5250 = vld [vmem:[%s7 + $0x98] sm:$0xff]
        %v5251 = vld [vmem:[%s7 + $0xa0] sm:$0xff]
        %v5252 = vld [vmem:[%s7 + $0xa8] sm:$0xff]
        %v5253 = vld [vmem:[%s7 + $0xb0] sm:$0xff]
        %v5254 = vld [vmem:[%s7 + $0xb8] sm:$0xff]
        %v5255 = vld [vmem:[%s7 + $0xc0] sm:$0xff]
        %v5256 = vld [vmem:[%s7 + $0xc8] sm:$0xff]
        %v5257 = vld [vmem:[%s7 + $0xd0] sm:$0xff]
        %v5258 = vld [vmem:[%s7 + $0xd8] sm:$0xff]
        %v5259 = vld [vmem:[%s7 + $0xe0] sm:$0xff]
        %v5260 = vld [vmem:[%s7 + $0xe8] sm:$0xff]
        %v5261 = vld [vmem:[%s7 + $0xf0] sm:$0xff]
        %v5262 = vld [vmem:[%s7 + $0xf8] sm:$0xff]
        %v5263 = vld [vmem:[%s7 + $0x100] sm:$0xff]
        %v5264 = vld [vmem:[%s7 + $0x108] sm:$0xff]
        %v5265 = vld [vmem:[%s7 + $0x110] sm:$0xff]
        %v5266 = vld [vmem:[%s7 + $0x118] sm:$0xff]
        %v5267 = vld [vmem:[%s7 + $0x120] sm:$0xff]
        %v5268 = vld [vmem:[%s7 + $0x128] sm:$0xff]
        %v5269 = vld [vmem:[%s7 + $0x130] sm:$0xff]
        %v5270 = vld [vmem:[%s7 + $0x138] sm:$0xff]
        %v5271 = vld [vmem:[%s8] sm:$0x1]
        %v5273 = vsel %vm5203, %v5230, 0
        %5275 = vmatprep.subr.mxu0 0.0
        %5276 = vmatpush1.msra.mxu0 %v5231
        %5277 = vmatprep.subr.mxu0 0.0
        %5278 = vmatpush1.msra.mxu0 %v5232
        %5279 = vmatprep.subr.mxu0 0.0
        %5280 = vmatpush1.msra.mxu0 %v5233
        %5281 = vmatprep.subr.mxu0 0.0
        %5282 = vmatpush1.msra.mxu0 %v5234
        %5283 = vmatprep.subr.mxu0 0.0
        %5284 = vmatpush1.msra.mxu0 %v5235
        %5285 = vmatprep.subr.mxu0 0.0
        %5286 = vmatpush1.msra.mxu0 %v5236
        %5287 = vmatprep.subr.mxu0 0.0
        %5288 = vmatpush1.msra.mxu0 %v5237
        %5289 = vmatprep.subr.mxu0 0.0
        %5290 = vmatpush1.msra.mxu0 %v5238
        %5291 = vmatprep.subr.mxu0 0.0
        %5292 = vmatpush1.msra.mxu0 %v5239
        %5293 = vmatprep.subr.mxu0 0.0
        %5294 = vmatpush1.msra.mxu0 %v5240
        %5295 = vmatprep.subr.mxu0 0.0
        %5296 = vmatpush1.msra.mxu0 %v5241
        %5297 = vmatprep.subr.mxu0 0.0
        %5298 = vmatpush1.msra.mxu0 %v5242
        %5299 = vmatprep.subr.mxu0 0.0
        %5300 = vmatpush1.msra.mxu0 %v5243
        %5301 = vmatprep.subr.mxu0 0.0
        %5302 = vmatpush1.msra.mxu0 %v5244
        %5303 = vmatprep.subr.mxu0 0.0
        %5304 = vmatpush1.msra.mxu0 %v5245
        %5305 = vmatprep.subr.mxu0 0.0
        %5306 = vmatpush1.msra.mxu0 %v5246
        %5307 = vmatprep.subr.mxu0 0.0
        %5308 = vmatpush1.msra.mxu0 %v5247
        %5309 = vmatprep.subr.mxu0 0.0
        %5310 = vmatpush1.msra.mxu0 %v5248
        %5311 = vmatprep.subr.mxu0 0.0
        %5312 = vmatpush1.msra.mxu0 %v5249
        %5313 = vmatprep.subr.mxu0 0.0
        %5314 = vmatpush1.msra.mxu0 %v5250
        %5315 = vmatprep.subr.mxu0 0.0
        %5316 = vmatpush1.msra.mxu0 %v5251
        %5317 = vmatprep.subr.mxu0 0.0
        %5318 = vmatpush1.msra.mxu0 %v5252
        %5319 = vmatprep.subr.mxu0 0.0
        %5320 = vmatpush1.msra.mxu0 %v5253
        %5321 = vmatprep.subr.mxu0 0.0
        %5322 = vmatpush1.msra.mxu0 %v5254
        %5323 = vmatprep.subr.mxu0 0.0
        %5324 = vmatpush1.msra.mxu0 %v5255
        %5325 = vmatprep.subr.mxu0 0.0
        %5326 = vmatpush1.msra.mxu0 %v5256
        %5327 = vmatprep.subr.mxu0 0.0
        %5328 = vmatpush1.msra.mxu0 %v5257
        %5329 = vmatprep.subr.mxu0 0.0
        %5330 = vmatpush1.msra.mxu0 %v5258
        %5331 = vmatprep.subr.mxu0 0.0
        %5332 = vmatpush1.msra.mxu0 %v5259
        %5333 = vmatprep.subr.mxu0 0.0
        %5334 = vmatpush1.msra.mxu0 %v5260
        %5335 = vmatprep.subr.mxu0 0.0
        %5336 = vmatpush1.msra.mxu0 %v5261
        %5337 = vmatprep.subr.mxu0 0.0
        %5338 = vmatpush1.msra.mxu0 %v5262
        %5339 = vmatprep.mubr.f32.mxu0 %v5214
        %5340 = vmatmul.mubr.f32.gmra.mrb[0].mxu0 %v5207
        %v5341 = vpop.f32.mrb[0].mxu0
        %v5342 = vadd.f32 %v5271, %v5341
        %v5343 = vpop.f32.mrb[0].mxu0
        %5344 = vdwg.mxu0
        %5345 = vmatprep.subr.mxu0 0.0
        %5346 = vmatpush1.msra.mxu0 %v5263
        %5347 = vmatprep.subr.mxu0 0.0
        %5348 = vmatpush1.msra.mxu0 %v5264
        %5349 = vmatprep.subr.mxu0 0.0
        %5350 = vmatpush1.msra.mxu0 %v5265
        %5351 = vmatprep.subr.mxu0 0.0
        %5352 = vmatpush1.msra.mxu0 %v5266
        %5353 = vmatprep.subr.mxu0 0.0
        %5354 = vmatpush1.msra.mxu0 %v5267
        %5355 = vmatprep.subr.mxu0 0.0
        %5356 = vmatpush1.msra.mxu0 %v5268
        %5357 = vmatprep.subr.mxu0 0.0
        %5358 = vmatpush1.msra.mxu0 %v5269
        %5359 = vmatprep.subr.mxu0 0.0
        %5360 = vmatpush1.msra.mxu0 %v5270
        %5361 = vmatprep.subr.mxu0 0.0
        %5362 = vmatpush1.msra.mxu0 0.0
        %5363 = vmatprep.subr.mxu0 0.0
        %5364 = vmatpush1.msra.mxu0 0.0
        %5365 = vmatprep.subr.mxu0 0.0
        %5366 = vmatpush1.msra.mxu0 0.0
        %5367 = vmatprep.subr.mxu0 0.0
        %5368 = vmatpush1.msra.mxu0 0.0
        %5369 = vmatprep.subr.mxu0 0.0
        %5370 = vmatpush1.msra.mxu0 0.0
        %5371 = vmatprep.subr.mxu0 0.0
        %5372 = vmatpush1.msra.mxu0 0.0
        %5373 = vmatprep.subr.mxu0 0.0
        %5374 = vmatpush1.msra.mxu0 0.0
        %5375 = vmatprep.subr.mxu0 0.0
        %5376 = vmatpush1.msra.mxu0 0.0
        %5377 = vmatprep.subr.mxu0 0.0
        %5378 = vmatpush1.msra.mxu0 0.0
        %5379 = vmatprep.subr.mxu0 0.0
        %5380 = vmatpush1.msra.mxu0 0.0
        %5381 = vmatprep.subr.mxu0 0.0
        %5382 = vmatpush1.msra.mxu0 0.0
        %5383 = vmatprep.subr.mxu0 0.0
        %5384 = vmatpush1.msra.mxu0 0.0
        %5385 = vmatprep.subr.mxu0 0.0
        %5386 = vmatpush1.msra.mxu0 0.0
        %5387 = vmatprep.subr.mxu0 0.0
        %5388 = vmatpush1.msra.mxu0 0.0
        %5389 = vmatprep.subr.mxu0 0.0
        %5390 = vmatpush1.msra.mxu0 0.0
        %5391 = vmatprep.subr.mxu0 0.0
        %5392 = vmatpush1.msra.mxu0 0.0
        %5393 = vmatprep.subr.mxu0 0.0
        %5394 = vmatpush1.msra.mxu0 0.0
        %5395 = vmatprep.subr.mxu0 0.0
        %5396 = vmatpush1.msra.mxu0 0.0
        %5397 = vmatprep.subr.mxu0 0.0
        %5398 = vmatpush1.msra.mxu0 0.0
        %5399 = vmatprep.subr.mxu0 0.0
        %5400 = vmatpush1.msra.mxu0 0.0
        %5401 = vmatprep.subr.mxu0 0.0
        %5402 = vmatpush1.msra.mxu0 0.0
        %5403 = vmatprep.subr.mxu0 0.0
        %5404 = vmatpush1.msra.mxu0 0.0
        %5405 = vmatprep.subr.mxu0 0.0
        %5406 = vmatpush1.msra.mxu0 0.0
        %5407 = vmatprep.subr.mxu0 0.0
        %5408 = vmatpush1.msra.mxu0 0.0
        %5409 = vmatprep.mubr.f32.mxu0 0.0
        %5410 = vmatmul.mubr.f32.gmra.mrb[0].mxu0 %v5273
        %v5411 = vpop.f32.mrb[0].mxu0
        %v5412 = vadd.f32 %v5342, %v5411
        %v5413 = vpop.f32.mrb[0].mxu0
        %5414 = vdwg.mxu0
        %v5415 = vmax.f32 %v5412, 0.0
        %v5416 = vld [vmem:[%s9] sm:$0xff]
        %v5417 = vld [vmem:[%s9 + $0x8] sm:$0xff]
        %v5418 = vld [vmem:[%s9 + $0x10] sm:$0xff]
        %v5419 = vld [vmem:[%s9 + $0x18] sm:$0xff]
        %v5420 = vld [vmem:[%s9 + $0x20] sm:$0xff]
        %v5421 = vld [vmem:[%s9 + $0x28] sm:$0xff]
        %v5422 = vld [vmem:[%s9 + $0x30] sm:$0x3]
        %v5423 = vld [vmem:[%s10] sm:$0x1]
        %vm5424 = vcmask 408576
        %v5426 = vsel %vm5424, %v5415, 0
        %v5429 = vsel %vm883, %v5422, 0
        %5431 = vmatprep.subr.mxu0 0.0
        %5432 = vmatpush1.msra.mxu0 %v5416
        %5433 = vmatprep.subr.mxu0 0.0
        %5434 = vmatpush1.msra.mxu0 %v5417
        %5435 = vmatprep.subr.mxu0 0.0
        %5436 = vmatpush1.msra.mxu0 %v5418
        %5437 = vmatprep.subr.mxu0 0.0
        %5438 = vmatpush1.msra.mxu0 %v5419
        %5439 = vmatprep.subr.mxu0 0.0
        %5440 = vmatpush1.msra.mxu0 %v5420
        %5441 = vmatprep.subr.mxu0 0.0
        %5442 = vmatpush1.msra.mxu0 %v5421
        %5443 = vmatprep.subr.mxu0 0.0
        %5444 = vmatpush1.msra.mxu0 %v5429
        %5445 = vmatprep.subr.mxu0 0.0
        %5446 = vmatpush1.msra.mxu0 0.0
        %5447 = vmatprep.subr.mxu0 0.0
        %5448 = vmatpush1.msra.mxu0 0.0
        %5449 = vmatprep.subr.mxu0 0.0
        %5450 = vmatpush1.msra.mxu0 0.0
        %5451 = vmatprep.subr.mxu0 0.0
        %5452 = vmatpush1.msra.mxu0 0.0
        %5453 = vmatprep.subr.mxu0 0.0
        %5454 = vmatpush1.msra.mxu0 0.0
        %5455 = vmatprep.subr.mxu0 0.0
        %5456 = vmatpush1.msra.mxu0 0.0
        %5457 = vmatprep.subr.mxu0 0.0
        %5458 = vmatpush1.msra.mxu0 0.0
        %5459 = vmatprep.subr.mxu0 0.0
        %5460 = vmatpush1.msra.mxu0 0.0
        %5461 = vmatprep.subr.mxu0 0.0
        %5462 = vmatpush1.msra.mxu0 0.0
        %5463 = vmatprep.subr.mxu0 0.0
        %5464 = vmatpush1.msra.mxu0 0.0
        %5465 = vmatprep.subr.mxu0 0.0
        %5466 = vmatpush1.msra.mxu0 0.0
        %5467 = vmatprep.subr.mxu0 0.0
        %5468 = vmatpush1.msra.mxu0 0.0
        %5469 = vmatprep.subr.mxu0 0.0
        %5470 = vmatpush1.msra.mxu0 0.0
        %5471 = vmatprep.subr.mxu0 0.0
        %5472 = vmatpush1.msra.mxu0 0.0
        %5473 = vmatprep.subr.mxu0 0.0
        %5474 = vmatpush1.msra.mxu0 0.0
        %5475 = vmatprep.subr.mxu0 0.0
        %5476 = vmatpush1.msra.mxu0 0.0
        %5477 = vmatprep.subr.mxu0 0.0
        %5478 = vmatpush1.msra.mxu0 0.0
        %5479 = vmatprep.subr.mxu0 0.0
        %5480 = vmatpush1.msra.mxu0 0.0
        %5481 = vmatprep.subr.mxu0 0.0
        %5482 = vmatpush1.msra.mxu0 0.0
        %5483 = vmatprep.subr.mxu0 0.0
        %5484 = vmatpush1.msra.mxu0 0.0
        %5485 = vmatprep.subr.mxu0 0.0
        %5486 = vmatpush1.msra.mxu0 0.0
        %5487 = vmatprep.subr.mxu0 0.0
        %5488 = vmatpush1.msra.mxu0 0.0
        %5489 = vmatprep.subr.mxu0 0.0
        %5490 = vmatpush1.msra.mxu0 0.0
        %5491 = vmatprep.subr.mxu0 0.0
        %5492 = vmatpush1.msra.mxu0 0.0
        %5493 = vmatprep.subr.mxu0 0.0
        %5494 = vmatpush1.msra.mxu0 0.0
        %5495 = vmatprep.mubr.f32.mxu0 0.0
        %5496 = vmatmul.mubr.f32.gmra.mrb[0].mxu0 %v5426
        %v5497 = vpop.f32.mrb[0].mxu0
        %v5498 = vadd.f32 %v5423, %v5497
        %v5499 = vpop.f32.mrb[0].mxu0
        %5500 = vdwg.mxu0
        %v5501 = vmax.f32 %v5498, 0.0
        %vm5502 = vcmask 401408
        %5503 = vst.msk [vmem:[%s413] sm:$0x1] %vm5502, %v5415
        %vm5504 = vcmask 73728
        %5505 = vst.msk [vmem:[%s407] sm:$0x1] %vm5504, %v5501
        %s5506 = sand.u32 %s274, 1
        %s5507 = scalar_lea.sflag [#allocation3], %s5506
        %s5508 = sand.u32 %s274, 1
        %s5509 = scalar_lea.vmem [#allocation2], %s5508
        %s5510 = sand.u32 %s300, 1
        %s5511 = scalar_lea.sflag [#allocation5], %s5510
        %s5512 = sand.u32 %s300, 1
        %s5513 = scalar_lea.vmem [#allocation4], %s5512
        // Predicated region
        $region65: #{mnist_convnet_forward.1} parent=63 // pred_check
          %p5514 = pneg %p284
        $region66: #{mnist_convnet_forward.1} parent=63 // pred_check_branch
          %5516 = sbr.rel (%p5514) target = $region68
        $region67: #{mnist_convnet_forward.1} parent=63 // pred_region
          %s5518 = ssub.s32 16, 16
          %5519 = vsyncadd %s5507, %s5518
          %s5520 = smul.addr %s30, 16
          %s5521 = scalar_lea.hbm %s11, %s5520
          %s5523 = sshll.u32 %s5509, 4
          %s5524 = int_to_ptr.vmem [resolvable:$true] %s5523
          %5526 = dma.vmem_to_hbm [thread:$0]  %s5524, 16, %s5521, %s5507
        $region68: #{mnist_convnet_forward.1} parent=63 // pred_fallthru
          _
        // Predicated region
        $region69: #{mnist_convnet_forward.1} parent=63 // pred_check
          %p5527 = pneg %p310
        $region70: #{mnist_convnet_forward.1} parent=63 // pred_check_branch
          %5529 = sbr.rel (%p5527) target = $region72
        $region71: #{mnist_convnet_forward.1} parent=63 // pred_region
          %s5531 = ssub.s32 16, 16
          %5532 = vsyncadd %s5511, %s5531
          %s5533 = smul.addr %s30, 16
          %s5534 = scalar_lea.hbm %s12, %s5533
          %s5536 = sshll.u32 %s5513, 4
          %s5537 = int_to_ptr.vmem [resolvable:$true] %s5536
          %5539 = dma.vmem_to_hbm [thread:$0]  %s5537, 16, %s5534, %s5511
        $region72: #{mnist_convnet_forward.1} parent=63 // pred_fallthru
          _
      $region64: #{mnist_convnet_forward.1} parent=5 // pred_fallthru
        _
      %p5540 = scmp.le.s32.totalorder 2, %s25
      // Predicated region
      $region73: #{mnist_convnet_forward.1} parent=5 // pred_check
        %p5541 = pneg %p5540
      $region74: #{mnist_convnet_forward.1} parent=5 // pred_check_branch
        %5543 = sbr.rel (%p5541) target = $region76
      $region75: #{mnist_convnet_forward.1} parent=5 // pred_region
        %s5544 = ssub.s32 %s25, 2
        // Predicated region
        $region77: #{mnist_convnet_forward.1} parent=75 // pred_check
          %p5545 = pneg %p290
        $region78: #{mnist_convnet_forward.1} parent=75 // pred_check_branch
          %5547 = sbr.rel (%p5545) target = $region80
        $region79: #{mnist_convnet_forward.1} parent=75 // pred_region
          %s5548 = sand.u32 %s275, 1
          %s5549 = scalar_lea.sflag [#allocation3], %s5548
          %s5550 = sand.u32 %s275, 1
          %s5551 = scalar_lea.vmem [#allocation2], %s5550
          %5552 = dma.done %s5549, 16
        $region80: #{mnist_convnet_forward.1} parent=75 // pred_fallthru
          _
        // Predicated region
        $region81: #{mnist_convnet_forward.1} parent=75 // pred_check
          %p5553 = pneg %p316
        $region82: #{mnist_convnet_forward.1} parent=75 // pred_check_branch
          %5555 = sbr.rel (%p5553) target = $region84
        $region83: #{mnist_convnet_forward.1} parent=75 // pred_region
          %s5556 = sand.u32 %s301, 1
          %s5557 = scalar_lea.sflag [#allocation5], %s5556
          %s5558 = sand.u32 %s301, 1
          %s5559 = scalar_lea.vmem [#allocation4], %s5558
          %5560 = dma.done %s5557, 16
        $region84: #{mnist_convnet_forward.1} parent=75 // pred_fallthru
          _
      $region76: #{mnist_convnet_forward.1} parent=5 // pred_fallthru
        _
    $region6: #{mnist_convnet_forward.1} parent=1 // loop_footer
      %s29 = sadd.s32 1, %s25
    $region7: #{mnist_convnet_forward.1} parent=1 // loop_footer_branch
      %24 = sbr.rel target = $region3
    $region8: #{mnist_convnet_forward.1} parent=1 // loop_exit
      _
    %5561 = vsyncpa [#allocation3], 1
    %s5562 = scalar_lea.sflag [#allocation3], 1
    %5563 = vsyncpa %s5562, 1
    %5564 = vsyncpa [#allocation5], 1
    %s5565 = scalar_lea.sflag [#allocation5], 1
    %5566 = vsyncpa %s5565, 1

</llo_original>
